<compile_context>
chip_gen: v6e
topology: v6e:2x2x1
jax: 0.10.0
libtpu: 0.0.40
codegen_flags: <defaults>
</compile_context>

<pallas_src>
import functools

import jax
import jax.numpy as jnp
from jax.experimental import pallas as pl
from jax.experimental.pallas import tpu as pltpu


def _round_up(x, m):
    return (x + m - 1) // m * m


# ----------------------------------------------------------------------------
# Pallas kernel: 3x3 conv (as 9 shifted dots) + folded-BN bias + residual + ReLU
# ----------------------------------------------------------------------------
def _conv3x3_bn_act_kernel(*refs, wp2, lwin, has_residual):
    if has_residual:
        x_ref, w_ref, b_ref, res_ref, o_ref = refs
    else:
        x_ref, w_ref, b_ref, o_ref = refs
        res_ref = None

    m = o_ref.shape[1]                     # rows_per_tile * (W + 2)
    cpad = o_ref.shape[2]
    t = pl.program_id(1)
    base = pl.multiple_of(t * m, 8)        # tile start (aligned, M % 8 == 0)

    # One aligned dynamic load of the tile + 3x3 halo; the 9 taps are cheap
    # static sub-slices of this in-register window.
    win = x_ref[0, pl.ds(base, lwin), :]   # (lwin, Cin_pad) bf16

    acc = jnp.zeros((m, cpad), jnp.float32)
    for k in range(9):
        dy, dx = divmod(k, 3)
        off = dy * wp2 + dx                # static shift per tap
        lhs = win[off:off + m, :]          # (m, Cin_pad) bf16
        acc = acc + jnp.dot(lhs, w_ref[k], preferred_element_type=jnp.float32)

    y = acc + b_ref[...]                   # folded BatchNorm bias (f32)
    if res_ref is not None:
        y = y + res_ref[0].astype(jnp.float32)
    o_ref[0] = jnp.maximum(y, 0.0).astype(o_ref.dtype)


# ----------------------------------------------------------------------------
# Wrapper: one fused conv3x3(stride=1,pad=1) + BN + (residual) + ReLU layer
# ----------------------------------------------------------------------------
def conv3x3_bn_act(x_nhwc, weight_oihw, scale, bias, residual=None, row_tile=None):
    N, H, W, Cin = x_nhwc.shape
    Cout = weight_oihw.shape[0]

    Wp2 = W + 2
    Cin_p = _round_up(Cin, 16)             # bf16 sublane packing
    Cout_p = _round_up(Cout, 128)          # lane-dense output / MXU N dim

    # Row tile: target a GEMM M-dim near 256, keep M a multiple of 8.
    if row_tile is None:
        th = max(4, (256 // Wp2) // 4 * 4)
        th = min(th, _round_up(H, 4))
        for cand in range(th, 3, -4):
            if H % cand == 0:
                th = cand
                break
    else:
        th = row_tile
    if (th * Wp2) % 8 != 0:
        th = _round_up(th, 8)
    H_pad = _round_up(H, th)
    T = H_pad // th
    M = th * Wp2                           # GEMM rows per grid step
    halo = _round_up(2 * Wp2 + 2, 8)       # 3x3 halo, rounded to sublanes
    lwin = M + halo
    extra_rows = -(-halo // Wp2)
    Hp2 = H_pad + extra_rows               # 1 top pad row + bottom pad rows
    Lp = Hp2 * Wp2

    # Padded, width-flattened activation in bf16 (the only big input stream).
    xp = jnp.pad(x_nhwc, ((0, 0), (1, Hp2 - 1 - H), (1, 1), (0, Cin_p - Cin)))
    xflat = xp.astype(jnp.bfloat16).reshape(N, Lp, Cin_p)

    # Weights: (Cout,Cin,3,3) -> (9, Cin_p, Cout_p) with BN scale folded in.
    w = jnp.transpose(weight_oihw, (2, 3, 1, 0)).reshape(9, Cin, Cout)
    w = w * scale.reshape(1, 1, Cout)
    w = jnp.pad(w, ((0, 0), (0, Cin_p - Cin), (0, Cout_p - Cout))).astype(jnp.bfloat16)
    b = jnp.pad(bias.astype(jnp.float32).reshape(1, Cout),
                ((0, 0), (0, Cout_p - Cout)))

    inputs = [xflat, w, b]
    in_specs = [
        # Whole padded image per batch element; block index constant along the
        # inner (row-tile) axis -> DMA'd once per n, held resident in VMEM.
        pl.BlockSpec((1, Lp, Cin_p), lambda n, t: (n, 0, 0)),
        pl.BlockSpec((9, Cin_p, Cout_p), lambda n, t: (0, 0, 0)),
        pl.BlockSpec((1, Cout_p), lambda n, t: (0, 0)),
    ]
    has_res = residual is not None
    if has_res:
        rp = jnp.pad(residual.astype(jnp.float32),
                     ((0, 0), (0, H_pad - H), (0, 2),
                      (0, Cout_p - residual.shape[-1])))
        inputs.append(rp.reshape(N, H_pad * Wp2, Cout_p))
        in_specs.append(pl.BlockSpec((1, M, Cout_p), lambda n, t: (n, t, 0)))

    kernel = functools.partial(_conv3x3_bn_act_kernel,
                               wp2=Wp2, lwin=lwin, has_residual=has_res)
    out = pl.pallas_call(
        kernel,
        out_shape=jax.ShapeDtypeStruct((N, H_pad * Wp2, Cout_p), x_nhwc.dtype),
        grid=(N, T),
        in_specs=in_specs,
        out_specs=pl.BlockSpec((1, M, Cout_p), lambda n, t: (n, t, 0)),
        compiler_params=pltpu.CompilerParams(
            dimension_semantics=("parallel", "parallel"),
            vmem_limit_bytes=32 * 1024 * 1024,
        ),
    )(*inputs)

    out = out.reshape(N, H_pad, Wp2, Cout_p)
    return out[:, :H, :W, :Cout]


# ----------------------------------------------------------------------------
# BasicBlock: parameters + forward (two fused Pallas layers)
# ----------------------------------------------------------------------------
def _fold_bn(gamma, beta, mean, var, eps=1e-5):
    scale = gamma / jnp.sqrt(var + eps)
    bias = beta - mean * scale
    return scale, bias


class BasicBlockPallas:
    expansion = 1

    def __init__(self, key, inplanes, planes, stride=1, downsample=None):
        # TODO(synk): `downsample` is an arbitrary user-supplied nn.Module in
        # PyTorch; only the identity-residual path (downsample=None, stride=1,
        # inplanes==planes) is implemented here.
        assert downsample is None and stride == 1 and inplanes == planes, \
            "identity-residual BasicBlock only (downsample=None, stride=1, inplanes==planes)"
        self.stride = stride
        ks = jax.random.split(key, 10)
        self.w1 = 0.1 * jax.random.normal(ks[0], (planes, inplanes, 3, 3), jnp.float32)
        self.w2 = 0.1 * jax.random.normal(ks[1], (planes, planes, 3, 3), jnp.float32)
        g1 = 1.0 + 0.1 * jax.random.normal(ks[2], (planes,), jnp.float32)
        b1 = 0.1 * jax.random.normal(ks[3], (planes,), jnp.float32)
        m1 = 0.1 * jax.random.normal(ks[4], (planes,), jnp.float32)
        v1 = jax.random.uniform(ks[5], (planes,), jnp.float32, 0.5, 1.5)
        g2 = 1.0 + 0.1 * jax.random.normal(ks[6], (planes,), jnp.float32)
        b2 = 0.1 * jax.random.normal(ks[7], (planes,), jnp.float32)
        m2 = 0.1 * jax.random.normal(ks[8], (planes,), jnp.float32)
        v2 = jax.random.uniform(ks[9], (planes,), jnp.float32, 0.5, 1.5)
        self.s1, self.b1 = _fold_bn(g1, b1, m1, v1)   # eval-mode BN (folded)
        self.s2, self.b2 = _fold_bn(g2, b2, m2, v2)

    def __call__(self, x_nchw):
        x = jnp.transpose(x_nchw, (0, 2, 3, 1))                 # NCHW -> NHWC
        out = conv3x3_bn_act(x, self.w1, self.s1, self.b1)      # conv1+bn1+relu
        out = conv3x3_bn_act(out, self.w2, self.s2, self.b2,
                             residual=x)                        # conv2+bn2+add+relu
        return jnp.transpose(out, (0, 3, 1, 2))                 # NHWC -> NCHW


# ----------------------------------------------------------------------------
# Pure-JAX references (correctness checks)
# ----------------------------------------------------------------------------
def _ref_conv3x3_bf16(x_nhwc, w_oihw, scale):
    # Same precision choice as the kernel: BN scale folded into weights,
    # bf16 operands, f32 accumulation.
    w = jnp.transpose(w_oihw, (2, 3, 1, 0)) * scale.reshape(1, 1, 1, -1)
    return jax.lax.conv_general_dilated(
        x_nhwc.astype(jnp.bfloat16), w.astype(jnp.bfloat16),
        window_strides=(1, 1), padding=((1, 1), (1, 1)),
        dimension_numbers=("NHWC", "HWIO", "NHWC"),
        preferred_element_type=jnp.float32)


def _ref_forward_bf16(block, x_nchw):
    x = jnp.transpose(x_nchw, (0, 2, 3, 1))
    out = jnp.maximum(_ref_conv3x3_bf16(x, block.w1, block.s1) + block.b1, 0.0)
    out = jnp.maximum(_ref_conv3x3_bf16(out, block.w2, block.s2) + block.b2 + x, 0.0)
    return jnp.transpose(out, (0, 3, 1, 2))


def _ref_forward_f32(block, x_nchw):
    x = jnp.transpose(x_nchw, (0, 2, 3, 1))

    def conv(v, w):
        return jax.lax.conv_general_dilated(
            v, jnp.transpose(w, (2, 3, 1, 0)),
            window_strides=(1, 1), padding=((1, 1), (1, 1)),
            dimension_numbers=("NHWC", "HWIO", "NHWC"),
            precision=jax.lax.Precision.HIGHEST)

    out = jnp.maximum(conv(x, block.w1) * block.s1 + block.b1, 0.0)
    out = jnp.maximum(conv(out, block.w2) * block.s2 + block.b2 + x, 0.0)
    return jnp.transpose(out, (0, 3, 1, 2))


if __name__ == "__main__":
    key = jax.random.PRNGKey(0)
    k_param, k_x = jax.random.split(key)

    inplanes, planes = 4, 4
    block = BasicBlockPallas(k_param, inplanes, planes, stride=1, downsample=None)

    x = jax.random.normal(k_x, (2, inplanes, 16, 16), jnp.float32)  # NCHW input

    fwd = jax.jit(block)
    out = jax.block_until_ready(fwd(x))

    ref_bf16 = jax.block_until_ready(_ref_forward_bf16(block, x))
    ref_f32 = jax.block_until_ready(_ref_forward_f32(block, x))
    assert out.shape == ref_bf16.shape == (2, planes, 16, 16)
    err_m = float(jnp.max(jnp.abs(out - ref_bf16)))
    err_f = float(jnp.max(jnp.abs(out - ref_f32)))
    # Tight check vs a reference with the same bf16-operand / f32-accum choice.
    assert jnp.allclose(out, ref_bf16, rtol=1e-2, atol=1e-2), \
        f"bf16-matched max abs err {err_m}"
    # Looser sanity check vs full-f32 math (bf16 operands are a precision choice).
    assert jnp.allclose(out, ref_f32, rtol=1e-1, atol=1e-1), \
        f"f32 max abs err {err_f}"

    print("KERNEL_OK")
</pallas_src>

<mosaic_0001>
module attributes {stable_mosaic.version = 11 : i64} {
  func.func @_conv3x3_bn_act_kernel(%arg0: i32, %arg1: i32, %arg2: memref<1x342x16xbf16, #tpu.memory_space<vmem>>, %arg3: memref<9x16x128xbf16, #tpu.memory_space<vmem>>, %arg4: memref<1x128xf32, #tpu.memory_space<vmem>>, %arg5: memref<1x144x128xf32, #tpu.memory_space<vmem>>) attributes {dimension_semantics = [#tpu.dimension_semantics<parallel>, #tpu.dimension_semantics<parallel>], iteration_bounds = array<i64: 2, 2>, scalar_prefetch = 0 : i64, scratch_operands = 0 : i64, tpu.core_type = #tpu.core_type<tc>, window_params = [{transform_indices = @transform_0, window_bounds = array<i64: 1, 342, 16>}, {pipeline_mode = #tpu.pipeline_mode<synchronous>, transform_indices = @transform_1, window_bounds = array<i64: 9, 16, 128>}, {pipeline_mode = #tpu.pipeline_mode<synchronous>, transform_indices = @transform_2, window_bounds = array<i64: 1, 128>}, {transform_indices = @transform_3, window_bounds = array<i64: 1, 144, 128>}]} {
    %c144_i32 = arith.constant 144 : i32
    %0 = arith.muli %arg1, %c144_i32 : i32
    %1 = tpu.assume_multiple %0, 8 : i32
    %c0 = arith.constant 0 : index
    %2 = arith.index_cast %1 : i32 to index
    %c0_0 = arith.constant 0 : index
    %3 = vector.load %arg2[%c0, %2, %c0_0] : memref<1x342x16xbf16, #tpu.memory_space<vmem>>, vector<1x184x16xbf16>
    %4 = vector.shape_cast %3 : vector<1x184x16xbf16> to vector<184x16xbf16>
    %cst = arith.constant 0.000000e+00 : f32
    %5 = vector.broadcast %cst : f32 to vector<144x128xf32>
    %6 = vector.extract_strided_slice %4 {offsets = [0, 0], sizes = [144, 16], strides = [1, 1]} : vector<184x16xbf16> to vector<144x16xbf16>
    %c0_1 = arith.constant 0 : index
    %c0_2 = arith.constant 0 : index
    %c0_3 = arith.constant 0 : index
    %7 = vector.load %arg3[%c0_1, %c0_2, %c0_3] : memref<9x16x128xbf16, #tpu.memory_space<vmem>>, vector<1x16x128xbf16>
    %8 = vector.shape_cast %7 : vector<1x16x128xbf16> to vector<16x128xbf16>
    %cst_4 = arith.constant dense<0.000000e+00> : vector<144x128xf32>
    %9 = tpu.matmul %6, %8, %cst_4 {dimension_numbers = #tpu.dot_dimension_numbers<[1], [0], [0], [1], [0, 0, 1, 1], [], []>} : vector<144x16xbf16>, vector<16x128xbf16>, vector<144x128xf32> -> vector<144x128xf32>
    %10 = arith.addf %5, %9 : vector<144x128xf32>
    %11 = vector.extract_strided_slice %4 {offsets = [1, 0], sizes = [144, 16], strides = [1, 1]} : vector<184x16xbf16> to vector<144x16xbf16>
    %c1 = arith.constant 1 : index
    %c0_5 = arith.constant 0 : index
    %c0_6 = arith.constant 0 : index
    %12 = vector.load %arg3[%c1, %c0_5, %c0_6] : memref<9x16x128xbf16, #tpu.memory_space<vmem>>, vector<1x16x128xbf16>
    %13 = vector.shape_cast %12 : vector<1x16x128xbf16> to vector<16x128xbf16>
    %cst_7 = arith.constant dense<0.000000e+00> : vector<144x128xf32>
    %14 = tpu.matmul %11, %13, %cst_7 {dimension_numbers = #tpu.dot_dimension_numbers<[1], [0], [0], [1], [0, 0, 1, 1], [], []>} : vector<144x16xbf16>, vector<16x128xbf16>, vector<144x128xf32> -> vector<144x128xf32>
    %15 = arith.addf %10, %14 : vector<144x128xf32>
    %16 = vector.extract_strided_slice %4 {offsets = [2, 0], sizes = [144, 16], strides = [1, 1]} : vector<184x16xbf16> to vector<144x16xbf16>
    %c2 = arith.constant 2 : index
    %c0_8 = arith.constant 0 : index
    %c0_9 = arith.constant 0 : index
    %17 = vector.load %arg3[%c2, %c0_8, %c0_9] : memref<9x16x128xbf16, #tpu.memory_space<vmem>>, vector<1x16x128xbf16>
    %18 = vector.shape_cast %17 : vector<1x16x128xbf16> to vector<16x128xbf16>
    %cst_10 = arith.constant dense<0.000000e+00> : vector<144x128xf32>
    %19 = tpu.matmul %16, %18, %cst_10 {dimension_numbers = #tpu.dot_dimension_numbers<[1], [0], [0], [1], [0, 0, 1, 1], [], []>} : vector<144x16xbf16>, vector<16x128xbf16>, vector<144x128xf32> -> vector<144x128xf32>
    %20 = arith.addf %15, %19 : vector<144x128xf32>
    %21 = vector.extract_strided_slice %4 {offsets = [18, 0], sizes = [144, 16], strides = [1, 1]} : vector<184x16xbf16> to vector<144x16xbf16>
    %c3 = arith.constant 3 : index
    %c0_11 = arith.constant 0 : index
    %c0_12 = arith.constant 0 : index
    %22 = vector.load %arg3[%c3, %c0_11, %c0_12] : memref<9x16x128xbf16, #tpu.memory_space<vmem>>, vector<1x16x128xbf16>
    %23 = vector.shape_cast %22 : vector<1x16x128xbf16> to vector<16x128xbf16>
    %cst_13 = arith.constant dense<0.000000e+00> : vector<144x128xf32>
    %24 = tpu.matmul %21, %23, %cst_13 {dimension_numbers = #tpu.dot_dimension_numbers<[1], [0], [0], [1], [0, 0, 1, 1], [], []>} : vector<144x16xbf16>, vector<16x128xbf16>, vector<144x128xf32> -> vector<144x128xf32>
    %25 = arith.addf %20, %24 : vector<144x128xf32>
    %26 = vector.extract_strided_slice %4 {offsets = [19, 0], sizes = [144, 16], strides = [1, 1]} : vector<184x16xbf16> to vector<144x16xbf16>
    %c4 = arith.constant 4 : index
    %c0_14 = arith.constant 0 : index
    %c0_15 = arith.constant 0 : index
    %27 = vector.load %arg3[%c4, %c0_14, %c0_15] : memref<9x16x128xbf16, #tpu.memory_space<vmem>>, vector<1x16x128xbf16>
    %28 = vector.shape_cast %27 : vector<1x16x128xbf16> to vector<16x128xbf16>
    %cst_16 = arith.constant dense<0.000000e+00> : vector<144x128xf32>
    %29 = tpu.matmul %26, %28, %cst_16 {dimension_numbers = #tpu.dot_dimension_numbers<[1], [0], [0], [1], [0, 0, 1, 1], [], []>} : vector<144x16xbf16>, vector<16x128xbf16>, vector<144x128xf32> -> vector<144x128xf32>
    %30 = arith.addf %25, %29 : vector<144x128xf32>
    %31 = vector.extract_strided_slice %4 {offsets = [20, 0], sizes = [144, 16], strides = [1, 1]} : vector<184x16xbf16> to vector<144x16xbf16>
    %c5 = arith.constant 5 : index
    %c0_17 = arith.constant 0 : index
    %c0_18 = arith.constant 0 : index
    %32 = vector.load %arg3[%c5, %c0_17, %c0_18] : memref<9x16x128xbf16, #tpu.memory_space<vmem>>, vector<1x16x128xbf16>
    %33 = vector.shape_cast %32 : vector<1x16x128xbf16> to vector<16x128xbf16>
    %cst_19 = arith.constant dense<0.000000e+00> : vector<144x128xf32>
    %34 = tpu.matmul %31, %33, %cst_19 {dimension_numbers = #tpu.dot_dimension_numbers<[1], [0], [0], [1], [0, 0, 1, 1], [], []>} : vector<144x16xbf16>, vector<16x128xbf16>, vector<144x128xf32> -> vector<144x128xf32>
    %35 = arith.addf %30, %34 : vector<144x128xf32>
    %36 = vector.extract_strided_slice %4 {offsets = [36, 0], sizes = [144, 16], strides = [1, 1]} : vector<184x16xbf16> to vector<144x16xbf16>
    %c6 = arith.constant 6 : index
    %c0_20 = arith.constant 0 : index
    %c0_21 = arith.constant 0 : index
    %37 = vector.load %arg3[%c6, %c0_20, %c0_21] : memref<9x16x128xbf16, #tpu.memory_space<vmem>>, vector<1x16x128xbf16>
    %38 = vector.shape_cast %37 : vector<1x16x128xbf16> to vector<16x128xbf16>
    %cst_22 = arith.constant dense<0.000000e+00> : vector<144x128xf32>
    %39 = tpu.matmul %36, %38, %cst_22 {dimension_numbers = #tpu.dot_dimension_numbers<[1], [0], [0], [1], [0, 0, 1, 1], [], []>} : vector<144x16xbf16>, vector<16x128xbf16>, vector<144x128xf32> -> vector<144x128xf32>
    %40 = arith.addf %35, %39 : vector<144x128xf32>
    %41 = vector.extract_strided_slice %4 {offsets = [37, 0], sizes = [144, 16], strides = [1, 1]} : vector<184x16xbf16> to vector<144x16xbf16>
    %c7 = arith.constant 7 : index
    %c0_23 = arith.constant 0 : index
    %c0_24 = arith.constant 0 : index
    %42 = vector.load %arg3[%c7, %c0_23, %c0_24] : memref<9x16x128xbf16, #tpu.memory_space<vmem>>, vector<1x16x128xbf16>
    %43 = vector.shape_cast %42 : vector<1x16x128xbf16> to vector<16x128xbf16>
    %cst_25 = arith.constant dense<0.000000e+00> : vector<144x128xf32>
    %44 = tpu.matmul %41, %43, %cst_25 {dimension_numbers = #tpu.dot_dimension_numbers<[1], [0], [0], [1], [0, 0, 1, 1], [], []>} : vector<144x16xbf16>, vector<16x128xbf16>, vector<144x128xf32> -> vector<144x128xf32>
    %45 = arith.addf %40, %44 : vector<144x128xf32>
    %46 = vector.extract_strided_slice %4 {offsets = [38, 0], sizes = [144, 16], strides = [1, 1]} : vector<184x16xbf16> to vector<144x16xbf16>
    %c8 = arith.constant 8 : index
    %c0_26 = arith.constant 0 : index
    %c0_27 = arith.constant 0 : index
    %47 = vector.load %arg3[%c8, %c0_26, %c0_27] : memref<9x16x128xbf16, #tpu.memory_space<vmem>>, vector<1x16x128xbf16>
    %48 = vector.shape_cast %47 : vector<1x16x128xbf16> to vector<16x128xbf16>
    %cst_28 = arith.constant dense<0.000000e+00> : vector<144x128xf32>
    %49 = tpu.matmul %46, %48, %cst_28 {dimension_numbers = #tpu.dot_dimension_numbers<[1], [0], [0], [1], [0, 0, 1, 1], [], []>} : vector<144x16xbf16>, vector<16x128xbf16>, vector<144x128xf32> -> vector<144x128xf32>
    %50 = arith.addf %45, %49 : vector<144x128xf32>
    %c0_29 = arith.constant 0 : index
    %c0_30 = arith.constant 0 : index
    %51 = vector.load %arg4[%c0_29, %c0_30] : memref<1x128xf32, #tpu.memory_space<vmem>>, vector<1x128xf32>
    %52 = vector.broadcast %51 : vector<1x128xf32> to vector<144x128xf32>
    %53 = arith.addf %50, %52 : vector<144x128xf32>
    %cst_31 = arith.constant 0.000000e+00 : f32
    %54 = vector.broadcast %cst_31 : f32 to vector<144x128xf32>
    %55 = arith.maximumf %53, %54 : vector<144x128xf32>
    %c0_32 = arith.constant 0 : index
    %c0_33 = arith.constant 0 : index
    %c0_34 = arith.constant 0 : index
    %56 = vector.load %arg5[%c0_32, %c0_33, %c0_34] : memref<1x144x128xf32, #tpu.memory_space<vmem>>, vector<1x144x128xf32>
    %57 = vector.shape_cast %56 : vector<1x144x128xf32> to vector<144x128xf32>
    %58 = vector.shape_cast %55 : vector<144x128xf32> to vector<1x144x128xf32>
    tpu.vector_store %arg5[%c0_32, %c0_33, %c0_34], %58 {strides = array<i32>} : memref<1x144x128xf32, #tpu.memory_space<vmem>>, vector<1x144x128xf32>,
    return
  }
  func.func @transform_0(%arg0: i32, %arg1: i32) -> (i32, i32, i32) {
    %c0_i32 = arith.constant 0 : i32
    %c0_i32_0 = arith.constant 0 : i32
    %c0_i32_1 = arith.constant 0 : i32
    return %arg0, %c0_i32, %c0_i32_0 : i32, i32, i32
  }
  func.func @transform_1(%arg0: i32, %arg1: i32) -> (i32, i32, i32) {
    %c0_i32 = arith.constant 0 : i32
    %c0_i32_0 = arith.constant 0 : i32
    %c0_i32_1 = arith.constant 0 : i32
    %c0_i32_2 = arith.constant 0 : i32
    return %c0_i32, %c0_i32_0, %c0_i32_1 : i32, i32, i32
  }
  func.func @transform_2(%arg0: i32, %arg1: i32) -> (i32, i32) {
    %c0_i32 = arith.constant 0 : i32
    %c0_i32_0 = arith.constant 0 : i32
    %c0_i32_1 = arith.constant 0 : i32
    return %c0_i32, %c0_i32_0 : i32, i32
  }
  func.func @transform_3(%arg0: i32, %arg1: i32) -> (i32, i32, i32) {
    %c0_i32 = arith.constant 0 : i32
    %c0_i32_0 = arith.constant 0 : i32
    return %arg0, %arg1, %c0_i32 : i32, i32, i32
  }
}

module attributes {stable_mosaic.version = 11 : i64} {
  func.func @_conv3x3_bn_act_kernel(%arg0: i32, %arg1: i32, %arg2: memref<1x342x16xbf16, #tpu.memory_space<vmem>>, %arg3: memref<9x16x128xbf16, #tpu.memory_space<vmem>>, %arg4: memref<1x128xf32, #tpu.memory_space<vmem>>, %arg5: memref<1x144x128xf32, #tpu.memory_space<vmem>>, %arg6: memref<1x144x128xf32, #tpu.memory_space<vmem>>) attributes {dimension_semantics = [#tpu.dimension_semantics<parallel>, #tpu.dimension_semantics<parallel>], iteration_bounds = array<i64: 2, 2>, scalar_prefetch = 0 : i64, scratch_operands = 0 : i64, tpu.core_type = #tpu.core_type<tc>, window_params = [{transform_indices = @transform_0, window_bounds = array<i64: 1, 342, 16>}, {pipeline_mode = #tpu.pipeline_mode<synchronous>, transform_indices = @transform_1, window_bounds = array<i64: 9, 16, 128>}, {pipeline_mode = #tpu.pipeline_mode<synchronous>, transform_indices = @transform_2, window_bounds = array<i64: 1, 128>}, {transform_indices = @transform_3, window_bounds = array<i64: 1, 144, 128>}, {transform_indices = @transform_4, window_bounds = array<i64: 1, 144, 128>}]} {
    %c144_i32 = arith.constant 144 : i32
    %0 = arith.muli %arg1, %c144_i32 : i32
    %1 = tpu.assume_multiple %0, 8 : i32
    %c0 = arith.constant 0 : index
    %2 = arith.index_cast %1 : i32 to index
    %c0_0 = arith.constant 0 : index
    %3 = vector.load %arg2[%c0, %2, %c0_0] : memref<1x342x16xbf16, #tpu.memory_space<vmem>>, vector<1x184x16xbf16>
    %4 = vector.shape_cast %3 : vector<1x184x16xbf16> to vector<184x16xbf16>
    %cst = arith.constant 0.000000e+00 : f32
    %5 = vector.broadcast %cst : f32 to vector<144x128xf32>
    %6 = vector.extract_strided_slice %4 {offsets = [0, 0], sizes = [144, 16], strides = [1, 1]} : vector<184x16xbf16> to vector<144x16xbf16>
    %c0_1 = arith.constant 0 : index
    %c0_2 = arith.constant 0 : index
    %c0_3 = arith.constant 0 : index
    %7 = vector.load %arg3[%c0_1, %c0_2, %c0_3] : memref<9x16x128xbf16, #tpu.memory_space<vmem>>, vector<1x16x128xbf16>
    %8 = vector.shape_cast %7 : vector<1x16x128xbf16> to vector<16x128xbf16>
    %cst_4 = arith.constant dense<0.000000e+00> : vector<144x128xf32>
    %9 = tpu.matmul %6, %8, %cst_4 {dimension_numbers = #tpu.dot_dimension_numbers<[1], [0], [0], [1], [0, 0, 1, 1], [], []>} : vector<144x16xbf16>, vector<16x128xbf16>, vector<144x128xf32> -> vector<144x128xf32>
    %10 = arith.addf %5, %9 : vector<144x128xf32>
    %11 = vector.extract_strided_slice %4 {offsets = [1, 0], sizes = [144, 16], strides = [1, 1]} : vector<184x16xbf16> to vector<144x16xbf16>
    %c1 = arith.constant 1 : index
    %c0_5 = arith.constant 0 : index
    %c0_6 = arith.constant 0 : index
    %12 = vector.load %arg3[%c1, %c0_5, %c0_6] : memref<9x16x128xbf16, #tpu.memory_space<vmem>>, vector<1x16x128xbf16>
    %13 = vector.shape_cast %12 : vector<1x16x128xbf16> to vector<16x128xbf16>
    %cst_7 = arith.constant dense<0.000000e+00> : vector<144x128xf32>
    %14 = tpu.matmul %11, %13, %cst_7 {dimension_numbers = #tpu.dot_dimension_numbers<[1], [0], [0], [1], [0, 0, 1, 1], [], []>} : vector<144x16xbf16>, vector<16x128xbf16>, vector<144x128xf32> -> vector<144x128xf32>
    %15 = arith.addf %10, %14 : vector<144x128xf32>
    %16 = vector.extract_strided_slice %4 {offsets = [2, 0], sizes = [144, 16], strides = [1, 1]} : vector<184x16xbf16> to vector<144x16xbf16>
    %c2 = arith.constant 2 : index
    %c0_8 = arith.constant 0 : index
    %c0_9 = arith.constant 0 : index
    %17 = vector.load %arg3[%c2, %c0_8, %c0_9] : memref<9x16x128xbf16, #tpu.memory_space<vmem>>, vector<1x16x128xbf16>
    %18 = vector.shape_cast %17 : vector<1x16x128xbf16> to vector<16x128xbf16>
    %cst_10 = arith.constant dense<0.000000e+00> : vector<144x128xf32>
    %19 = tpu.matmul %16, %18, %cst_10 {dimension_numbers = #tpu.dot_dimension_numbers<[1], [0], [0], [1], [0, 0, 1, 1], [], []>} : vector<144x16xbf16>, vector<16x128xbf16>, vector<144x128xf32> -> vector<144x128xf32>
    %20 = arith.addf %15, %19 : vector<144x128xf32>
    %21 = vector.extract_strided_slice %4 {offsets = [18, 0], sizes = [144, 16], strides = [1, 1]} : vector<184x16xbf16> to vector<144x16xbf16>
    %c3 = arith.constant 3 : index
    %c0_11 = arith.constant 0 : index
    %c0_12 = arith.constant 0 : index
    %22 = vector.load %arg3[%c3, %c0_11, %c0_12] : memref<9x16x128xbf16, #tpu.memory_space<vmem>>, vector<1x16x128xbf16>
    %23 = vector.shape_cast %22 : vector<1x16x128xbf16> to vector<16x128xbf16>
    %cst_13 = arith.constant dense<0.000000e+00> : vector<144x128xf32>
    %24 = tpu.matmul %21, %23, %cst_13 {dimension_numbers = #tpu.dot_dimension_numbers<[1], [0], [0], [1], [0, 0, 1, 1], [], []>} : vector<144x16xbf16>, vector<16x128xbf16>, vector<144x128xf32> -> vector<144x128xf32>
    %25 = arith.addf %20, %24 : vector<144x128xf32>
    %26 = vector.extract_strided_slice %4 {offsets = [19, 0], sizes = [144, 16], strides = [1, 1]} : vector<184x16xbf16> to vector<144x16xbf16>
    %c4 = arith.constant 4 : index
    %c0_14 = arith.constant 0 : index
    %c0_15 = arith.constant 0 : index
    %27 = vector.load %arg3[%c4, %c0_14, %c0_15] : memref<9x16x128xbf16, #tpu.memory_space<vmem>>, vector<1x16x128xbf16>
    %28 = vector.shape_cast %27 : vector<1x16x128xbf16> to vector<16x128xbf16>
    %cst_16 = arith.constant dense<0.000000e+00> : vector<144x128xf32>
    %29 = tpu.matmul %26, %28, %cst_16 {dimension_numbers = #tpu.dot_dimension_numbers<[1], [0], [0], [1], [0, 0, 1, 1], [], []>} : vector<144x16xbf16>, vector<16x128xbf16>, vector<144x128xf32> -> vector<144x128xf32>
    %30 = arith.addf %25, %29 : vector<144x128xf32>
    %31 = vector.extract_strided_slice %4 {offsets = [20, 0], sizes = [144, 16], strides = [1, 1]} : vector<184x16xbf16> to vector<144x16xbf16>
    %c5 = arith.constant 5 : index
    %c0_17 = arith.constant 0 : index
    %c0_18 = arith.constant 0 : index
    %32 = vector.load %arg3[%c5, %c0_17, %c0_18] : memref<9x16x128xbf16, #tpu.memory_space<vmem>>, vector<1x16x128xbf16>
    %33 = vector.shape_cast %32 : vector<1x16x128xbf16> to vector<16x128xbf16>
    %cst_19 = arith.constant dense<0.000000e+00> : vector<144x128xf32>
    %34 = tpu.matmul %31, %33, %cst_19 {dimension_numbers = #tpu.dot_dimension_numbers<[1], [0], [0], [1], [0, 0, 1, 1], [], []>} : vector<144x16xbf16>, vector<16x128xbf16>, vector<144x128xf32> -> vector<144x128xf32>
    %35 = arith.addf %30, %34 : vector<144x128xf32>
    %36 = vector.extract_strided_slice %4 {offsets = [36, 0], sizes = [144, 16], strides = [1, 1]} : vector<184x16xbf16> to vector<144x16xbf16>
    %c6 = arith.constant 6 : index
    %c0_20 = arith.constant 0 : index
    %c0_21 = arith.constant 0 : index
    %37 = vector.load %arg3[%c6, %c0_20, %c0_21] : memref<9x16x128xbf16, #tpu.memory_space<vmem>>, vector<1x16x128xbf16>
    %38 = vector.shape_cast %37 : vector<1x16x128xbf16> to vector<16x128xbf16>
    %cst_22 = arith.constant dense<0.000000e+00> : vector<144x128xf32>
    %39 = tpu.matmul %36, %38, %cst_22 {dimension_numbers = #tpu.dot_dimension_numbers<[1], [0], [0], [1], [0, 0, 1, 1], [], []>} : vector<144x16xbf16>, vector<16x128xbf16>, vector<144x128xf32> -> vector<144x128xf32>
    %40 = arith.addf %35, %39 : vector<144x128xf32>
    %41 = vector.extract_strided_slice %4 {offsets = [37, 0], sizes = [144, 16], strides = [1, 1]} : vector<184x16xbf16> to vector<144x16xbf16>
    %c7 = arith.constant 7 : index
    %c0_23 = arith.constant 0 : index
    %c0_24 = arith.constant 0 : index
    %42 = vector.load %arg3[%c7, %c0_23, %c0_24] : memref<9x16x128xbf16, #tpu.memory_space<vmem>>, vector<1x16x128xbf16>
    %43 = vector.shape_cast %42 : vector<1x16x128xbf16> to vector<16x128xbf16>
    %cst_25 = arith.constant dense<0.000000e+00> : vector<144x128xf32>
    %44 = tpu.matmul %41, %43, %cst_25 {dimension_numbers = #tpu.dot_dimension_numbers<[1], [0], [0], [1], [0, 0, 1, 1], [], []>} : vector<144x16xbf16>, vector<16x128xbf16>, vector<144x128xf32> -> vector<144x128xf32>
    %45 = arith.addf %40, %44 : vector<144x128xf32>
    %46 = vector.extract_strided_slice %4 {offsets = [38, 0], sizes = [144, 16], strides = [1, 1]} : vector<184x16xbf16> to vector<144x16xbf16>
    %c8 = arith.constant 8 : index
    %c0_26 = arith.constant 0 : index
    %c0_27 = arith.constant 0 : index
    %47 = vector.load %arg3[%c8, %c0_26, %c0_27] : memref<9x16x128xbf16, #tpu.memory_space<vmem>>, vector<1x16x128xbf16>
    %48 = vector.shape_cast %47 : vector<1x16x128xbf16> to vector<16x128xbf16>
    %cst_28 = arith.constant dense<0.000000e+00> : vector<144x128xf32>
    %49 = tpu.matmul %46, %48, %cst_28 {dimension_numbers = #tpu.dot_dimension_numbers<[1], [0], [0], [1], [0, 0, 1, 1], [], []>} : vector<144x16xbf16>, vector<16x128xbf16>, vector<144x128xf32> -> vector<144x128xf32>
    %50 = arith.addf %45, %49 : vector<144x128xf32>
    %c0_29 = arith.constant 0 : index
    %c0_30 = arith.constant 0 : index
    %51 = vector.load %arg4[%c0_29, %c0_30] : memref<1x128xf32, #tpu.memory_space<vmem>>, vector<1x128xf32>
    %52 = vector.broadcast %51 : vector<1x128xf32> to vector<144x128xf32>
    %53 = arith.addf %50, %52 : vector<144x128xf32>
    %c0_31 = arith.constant 0 : index
    %c0_32 = arith.constant 0 : index
    %c0_33 = arith.constant 0 : index
    %54 = vector.load %arg5[%c0_31, %c0_32, %c0_33] : memref<1x144x128xf32, #tpu.memory_space<vmem>>, vector<1x144x128xf32>
    %55 = vector.shape_cast %54 : vector<1x144x128xf32> to vector<144x128xf32>
    %56 = arith.addf %53, %55 : vector<144x128xf32>
    %cst_34 = arith.constant 0.000000e+00 : f32
    %57 = vector.broadcast %cst_34 : f32 to vector<144x128xf32>
    %58 = arith.maximumf %56, %57 : vector<144x128xf32>
    %c0_35 = arith.constant 0 : index
    %c0_36 = arith.constant 0 : index
    %c0_37 = arith.constant 0 : index
    %59 = vector.load %arg6[%c0_35, %c0_36, %c0_37] : memref<1x144x128xf32, #tpu.memory_space<vmem>>, vector<1x144x128xf32>
    %60 = vector.shape_cast %59 : vector<1x144x128xf32> to vector<144x128xf32>
    %61 = vector.shape_cast %58 : vector<144x128xf32> to vector<1x144x128xf32>
    tpu.vector_store %arg6[%c0_35, %c0_36, %c0_37], %61 {strides = array<i32>} : memref<1x144x128xf32, #tpu.memory_space<vmem>>, vector<1x144x128xf32>,
    return
  }
  func.func @transform_0(%arg0: i32, %arg1: i32) -> (i32, i32, i32) {
    %c0_i32 = arith.constant 0 : i32
    %c0_i32_0 = arith.constant 0 : i32
    %c0_i32_1 = arith.constant 0 : i32
    return %arg0, %c0_i32, %c0_i32_0 : i32, i32, i32
  }
  func.func @transform_1(%arg0: i32, %arg1: i32) -> (i32, i32, i32) {
    %c0_i32 = arith.constant 0 : i32
    %c0_i32_0 = arith.constant 0 : i32
    %c0_i32_1 = arith.constant 0 : i32
    %c0_i32_2 = arith.constant 0 : i32
    return %c0_i32, %c0_i32_0, %c0_i32_1 : i32, i32, i32
  }
  func.func @transform_2(%arg0: i32, %arg1: i32) -> (i32, i32) {
    %c0_i32 = arith.constant 0 : i32
    %c0_i32_0 = arith.constant 0 : i32
    %c0_i32_1 = arith.constant 0 : i32
    return %c0_i32, %c0_i32_0 : i32, i32
  }
  func.func @transform_3(%arg0: i32, %arg1: i32) -> (i32, i32, i32) {
    %c0_i32 = arith.constant 0 : i32
    %c0_i32_0 = arith.constant 0 : i32
    return %arg0, %arg1, %c0_i32 : i32, i32, i32
  }
  func.func @transform_4(%arg0: i32, %arg1: i32) -> (i32, i32, i32) {
    %c0_i32 = arith.constant 0 : i32
    %c0_i32_0 = arith.constant 0 : i32
    return %arg0, %arg1, %c0_i32 : i32, i32, i32
  }
}

</mosaic_0001>

<llo_original>
// kernel: _unnamed_function_.2
$region0: #{_unnamed_function_.2}
  #allocation0 [shape = 'u32[]', space=smem, size = 0x4, offset = 0x4, fixed_abs, tag = 'smem constant byte address 0x4 - core index']
  #allocation1 [shape = 'u32[144,128]{1,0:T(1,128)}', space=vmem, size = 0x12000, scoped, tag = 'internal scratch']
  %s0 = inlined_call_operand.vmem [shape: bf16[2,342,16], index: 0, kind: input, shape index: {}]
  %s1 = inlined_call_operand.vmem [shape: bf16[9,16,128], index: 1, kind: input, shape index: {}]
  %s2 = inlined_call_operand.vmem [shape: f32[1,128], index: 2, kind: input, shape index: {}]
  %s3 = inlined_call_operand.vmem [shape: f32[2,288,128], index: 3, kind: output, shape index: {}]
  %s4 = sld [smem:[#allocation0]]
  $region45: #{_unnamed_function_.2} parent=0
    _
  %s6 = ssub.s32 1, %s4
  %s7 = scalar_select 0, %s6, %s4
  loop: start=0, step=1, limit=6
  $region2: #{_unnamed_function_.2} parent=0 // loop_pre_header
    _
  $region3: #{_unnamed_function_.2} parent=0 // loop_header
    %s9 = sphi 0, %s13
    %p10 = scmp.ge.s32.totalorder %s9, 6
    %s16 = sphi 0, %s28
    %s17 = sphi 0, %s24
    %s18 = sphi 0, %s16
    %s19 = sphi 0, %s17
    %s20 = sphi 0, %s18
    %s21 = sphi 0, %s19
    %s31 = sphi 0, %s33
    %s34 = sphi 0, %s31
    %s35 = sphi 0, %s34
    %s51 = sphi 0, %s35
    %s55 = sphi 0, %s55
    %s57 = sphi 0, %s55
    %s58 = sphi 0, %s57
    %s72 = sphi 0, %s58
    %s76 = sphi 0, %s76
    %s78 = sphi 0, %s76
    %s79 = sphi 0, %s78
    %s93 = sphi 0, %s79
    %s101 = sphi 0, %s103
    %s104 = sphi 0, %s101
    %s105 = sphi 0, %s104
    %s121 = sphi 0, %s105
  $region4: #{_unnamed_function_.2} parent=0 // loop_header_branch
    %12 = sbr.rel (%p10) target = $region8
  $region5: #{_unnamed_function_.2} parent=0 // loop_body
    %s14 = ssub.s32 %s9, 1
    %s15 = ssub.s32 %s9, 2
    %s22 = sadd.s32 1, %s17
    %p23 = scmp.ge.s32.totalorder %s22, 2
    %s24 = scalar_select %p23, 0, %s22
    %s25 = sadd.s32 1, %s16
    %s26 = scalar_select %p23, %s25, %s16
    %p27 = scmp.ge.s32.totalorder %s26, 2
    %s28 = scalar_select %p27, 0, %s26
    %s29 = ssub.s32 %s16, %s28
    %p30 = scmp.eq.s32.totalorder %s29, 0
    %s32 = sadd.s32 %s31, 1
    %s33 = scalar_select %p30, %s31, %s32
    %p36 = pneg %p30
    %p37 = scmp.eq.s32.totalorder %s9, 3
    %p38 = por %p36, %p37
    %p39 = scmp.ne.s32.totalorder %s31, %s34
    %p40 = scmp.eq.s32.totalorder %s9, 0
    %p41 = por %p39, %p40
    %p42 = scmp.ne.s32.totalorder %s31, %s34
    %p43 = scmp.eq.s32.totalorder %s14, 3
    %p44 = por %p42, %p43
    %p45 = scmp.ne.s32.totalorder %s34, %s35
    %p46 = scmp.eq.s32.totalorder %s14, 0
    %p47 = por %p45, %p46
    %p48 = scmp.ne.s32.totalorder %s34, %s35
    %p49 = scmp.eq.s32.totalorder %s15, 3
    %p50 = por %p48, %p49
    %p52 = scmp.ne.s32.totalorder %s35, %s51
    %p53 = scmp.eq.s32.totalorder %s15, 0
    %p54 = por %p52, %p53
    %s56 = sadd.s32 %s55, 1
    %p59 = scmp.eq.s32.totalorder %s9, 3
    %p60 = scmp.ne.s32.totalorder %s55, %s57
    %p61 = scmp.eq.s32.totalorder %s9, 0
    %p62 = por %p60, %p61
    %p63 = scmp.ne.s32.totalorder %s55, %s57
    %p64 = scmp.eq.s32.totalorder %s14, 3
    %p65 = por %p63, %p64
    %p66 = scmp.ne.s32.totalorder %s57, %s58
    %p67 = scmp.eq.s32.totalorder %s14, 0
    %p68 = por %p66, %p67
    %p69 = scmp.ne.s32.totalorder %s57, %s58
    %p70 = scmp.eq.s32.totalorder %s15, 3
    %p71 = por %p69, %p70
    %p73 = scmp.ne.s32.totalorder %s58, %s72
    %p74 = scmp.eq.s32.totalorder %s15, 0
    %p75 = por %p73, %p74
    %s77 = sadd.s32 %s76, 1
    %p80 = scmp.eq.s32.totalorder %s9, 3
    %p81 = scmp.ne.s32.totalorder %s76, %s78
    %p82 = scmp.eq.s32.totalorder %s9, 0
    %p83 = por %p81, %p82
    %p84 = scmp.ne.s32.totalorder %s76, %s78
    %p85 = scmp.eq.s32.totalorder %s14, 3
    %p86 = por %p84, %p85
    %p87 = scmp.ne.s32.totalorder %s78, %s79
    %p88 = scmp.eq.s32.totalorder %s14, 0
    %p89 = por %p87, %p88
    %p90 = scmp.ne.s32.totalorder %s78, %s79
    %p91 = scmp.eq.s32.totalorder %s15, 3
    %p92 = por %p90, %p91
    %p94 = scmp.ne.s32.totalorder %s79, %s93
    %p95 = scmp.eq.s32.totalorder %s15, 0
    %p96 = por %p94, %p95
    %s97 = ssub.s32 %s16, %s28
    %s98 = ssub.s32 %s17, %s24
    %s99 = sor.u32 %s97, %s98
    %p100 = scmp.eq.s32.totalorder %s99, 0
    %s102 = sadd.s32 %s101, 1
    %s103 = scalar_select %p100, %s101, %s102
    %p106 = pneg %p100
    %p107 = scmp.eq.s32.totalorder %s9, 3
    %p108 = por %p106, %p107
    %p109 = scmp.ne.s32.totalorder %s101, %s104
    %p110 = scmp.eq.s32.totalorder %s9, 0
    %p111 = por %p109, %p110
    %p112 = scmp.ne.s32.totalorder %s101, %s104
    %p113 = scmp.eq.s32.totalorder %s14, 3
    %p114 = por %p112, %p113
    %p115 = scmp.ne.s32.totalorder %s104, %s105
    %p116 = scmp.eq.s32.totalorder %s14, 0
    %p117 = por %p115, %p116
    %p118 = scmp.ne.s32.totalorder %s104, %s105
    %p119 = scmp.eq.s32.totalorder %s15, 3
    %p120 = por %p118, %p119
    %p122 = scmp.ne.s32.totalorder %s105, %s121
    %p123 = scmp.eq.s32.totalorder %s15, 0
    %p124 = por %p122, %p123
    %p125 = scmp.le.s32.totalorder 1, %s9
    %p126 = scmp.lt.s32.totalorder %s9, 5
    %p127 = pnand %p125, %p126
    %p128 = pneg %p127
    // Predicated region
    $region9: #{_unnamed_function_.2} parent=5 // pred_check
      _
    $region10: #{_unnamed_function_.2} parent=5 // pred_check_branch
      %130 = sbr.rel (%p127) target = $region12
    $region11: #{_unnamed_function_.2} parent=5 // pred_region
      %s131 = ssub.s32 %s9, 1
      // Predicated region
      $region13: #{_unnamed_function_.2} parent=11 // pred_check
        %p132 = pneg %p68
      $region14: #{_unnamed_function_.2} parent=11 // pred_check_branch
        %134 = sbr.rel (%p132) target = $region16
      $region15: #{_unnamed_function_.2} parent=11 // pred_region
        _
      $region16: #{_unnamed_function_.2} parent=11 // pred_fallthru
        _
      // Predicated region
      $region17: #{_unnamed_function_.2} parent=11 // pred_check
        %p135 = pneg %p89
      $region18: #{_unnamed_function_.2} parent=11 // pred_check_branch
        %137 = sbr.rel (%p135) target = $region20
      $region19: #{_unnamed_function_.2} parent=11 // pred_region
        _
      $region20: #{_unnamed_function_.2} parent=11 // pred_fallthru
        _
    $region12: #{_unnamed_function_.2} parent=5 // pred_fallthru
      _
    %p138 = scmp.lt.s32.totalorder %s9, 4
    // Predicated region
    $region21: #{_unnamed_function_.2} parent=5 // pred_check
      %p139 = pneg %p138
    $region22: #{_unnamed_function_.2} parent=5 // pred_check_branch
      %141 = sbr.rel (%p139) target = $region24
    $region23: #{_unnamed_function_.2} parent=5 // pred_region
      // Predicated region
      $region25: #{_unnamed_function_.2} parent=23 // pred_check
        %p142 = pneg %p41
      $region26: #{_unnamed_function_.2} parent=23 // pred_check_branch
        %144 = sbr.rel (%p142) target = $region28
      $region27: #{_unnamed_function_.2} parent=23 // pred_region
        %p145 = scmp.lt.s32.totalorder %s16, 1
        %s146 = scalar_select %p145, %s16, 1
        %s147 = smul.addr %s146, 43
        %s148 = smul.addr %s147, 4
        %s149 = scalar_lea.vmem %s0, %s148
      $region28: #{_unnamed_function_.2} parent=23 // pred_fallthru
        _
    $region24: #{_unnamed_function_.2} parent=5 // pred_fallthru
      _
    %p150 = scmp.le.s32.totalorder 1, %s9
    %p151 = scmp.lt.s32.totalorder %s9, 5
    %p152 = pnand %p150, %p151
    %p153 = pneg %p152
    // Predicated region
    $region29: #{_unnamed_function_.2} parent=5 // pred_check
      _
    $region30: #{_unnamed_function_.2} parent=5 // pred_check_branch
      %155 = sbr.rel (%p152) target = $region32
    $region31: #{_unnamed_function_.2} parent=5 // pred_region
      %s156 = ssub.s32 %s9, 1
      %p157 = scmp.lt.s32.totalorder %s18, 1
      %s158 = scalar_select %p157, %s18, 1
      %s159 = smul.addr %s158, 43
      %s160 = smul.addr %s159, 4
      %s161 = scalar_lea.vmem %s0, %s160
      %p162 = pneg %p47
      %p163 = pneg %p44
      %p164 = pneg %p68
      %p165 = pneg %p65
      %p166 = pneg %p89
      %p167 = pneg %p86
      %p168 = pneg %p117
      %p169 = pneg %p114
      %s170 = smul.u32 18, %s19
      %p171 = scmp.lt.s32.totalorder %s18, 1
      %s172 = scalar_select %p171, %s18, 1
      %p173 = scmp.lt.s32.totalorder %s170, 35
      %s174 = scalar_select %p173, %s170, 35
      %s175 = smul.addr %s172, 36
      %s176 = sadd.s32 %s174, %s175
      %s177 = smul.addr %s176, 8
      %s178 = scalar_lea.vmem %s3, %s177
      %p179 = scmp.lt.s32.totalorder %s18, 1
      %s180 = scalar_select %p179, %s18, 1
      %s181 = smul.addr %s180, 43
      %s182 = smul.addr %s181, 4
      %s183 = scalar_lea.vmem %s0, %s182
      %s184 = smul.u32 18, %s19
      %p185 = scmp.lt.s32.totalorder %s18, 1
      %s186 = scalar_select %p185, %s18, 1
      %p187 = scmp.lt.s32.totalorder %s184, 35
      %s188 = scalar_select %p187, %s184, 35
      %s189 = smul.addr %s186, 36
      %s190 = sadd.s32 %s188, %s189
      %s191 = smul.addr %s190, 8
      %s192 = scalar_lea.vmem %s3, %s191
      %s193 = smul.u32 18, %s19
      %s195 = smul.u32 %s19, 144
      %s196 = sshra.s32 %s195, 3
      %s197 = sand.u32 %s195, 7
      %s198 = smul.addr %s196, 4
      %s199 = scalar_lea.vmem %s183, %s198
      %v200 = vld [vmem:[%s199] sm:$0xf]
      %v201 = vld [vmem:[%s199 + $0x4] sm:$0xf]
      %v202 = vld [vmem:[%s199 + $0x8] sm:$0xf]
      %v203 = vld [vmem:[%s199 + $0xc] sm:$0xf]
      %v204 = vld [vmem:[%s199 + $0x10] sm:$0xf]
      %v205 = vld [vmem:[%s199 + $0x14] sm:$0xf]
      %v206 = vld [vmem:[%s199 + $0x18] sm:$0xf]
      %v207 = vld [vmem:[%s199 + $0x1c] sm:$0xf]
      %v208 = vld [vmem:[%s199 + $0x20] sm:$0xf]
      %v209 = vld [vmem:[%s199 + $0x24] sm:$0xf]
      %v210 = vld [vmem:[%s199 + $0x28] sm:$0xf]
      %v211 = vld [vmem:[%s199 + $0x2c] sm:$0xf]
      %v212 = vld [vmem:[%s199 + $0x30] sm:$0xf]
      %v213 = vld [vmem:[%s199 + $0x34] sm:$0xf]
      %v214 = vld [vmem:[%s199 + $0x38] sm:$0xf]
      %v215 = vld [vmem:[%s199 + $0x3c] sm:$0xf]
      %v216 = vld [vmem:[%s199 + $0x40] sm:$0xf]
      %v217 = vld [vmem:[%s199 + $0x44] sm:$0xf]
      %v218 = vld [vmem:[%s199 + $0x48] sm:$0xf]
      %v219 = vld [vmem:[%s199 + $0x4c] sm:$0xf]
      %v220 = vld [vmem:[%s199 + $0x50] sm:$0xf]
      %v221 = vld [vmem:[%s199 + $0x54] sm:$0xf]
      %v222 = vld [vmem:[%s199 + $0x58] sm:$0xf]
      %v223 = vld [vmem:[%s1] sm:$0xf]
      %v224 = vld [vmem:[%s1 + $0x4] sm:$0xf]
      %s225 = scalar_lea.vmem %s1, 8
      %v226 = vld [vmem:[%s225] sm:$0xf]
      %v227 = vld [vmem:[%s225 + $0x4] sm:$0xf]
      %v247 = vunpack.c.l.b16 %v200
      %v248 = vunpack.c.l.b16 %v201
      %v249 = vunpack.c.l.b16 %v202
      %v250 = vunpack.c.l.b16 %v203
      %v251 = vunpack.c.l.b16 %v204
      %v252 = vunpack.c.l.b16 %v205
      %v253 = vunpack.c.l.b16 %v206
      %v254 = vunpack.c.l.b16 %v207
      %v255 = vunpack.c.l.b16 %v208
      %v256 = vunpack.c.l.b16 %v209
      %v257 = vunpack.c.l.b16 %v210
      %v258 = vunpack.c.l.b16 %v211
      %v259 = vunpack.c.l.b16 %v212
      %v260 = vunpack.c.l.b16 %v213
      %v261 = vunpack.c.l.b16 %v214
      %v262 = vunpack.c.l.b16 %v215
      %v263 = vunpack.c.l.b16 %v216
      %v264 = vunpack.c.l.b16 %v217
      %v265 = vunpack.c.l.b16 %v218
      %v266 = vpack.c.b16 %v248, %v247
      %v267 = vpack.c.b16 %v250, %v249
      %v268 = vpack.c.b16 %v252, %v251
      %v269 = vpack.c.b16 %v254, %v253
      %v270 = vpack.c.b16 %v256, %v255
      %v271 = vpack.c.b16 %v258, %v257
      %v272 = vpack.c.b16 %v260, %v259
      %v273 = vpack.c.b16 %v262, %v261
      %v274 = vpack.c.b16 %v264, %v263
      %v275 = vpack.c.b16 %v265, %v265
      %vm276 = vsmask.f32 7424
      %v278 = vshrl.u32 %v266, 16
      %v280 = vshll.u32 %v266, 16
      %v282 = vrot.slane %v280, 1
      %v283 = vor.u32 %v278, %v282
      %v285 = vshll.u32 %v267, 16
      %v287 = vrot.slane %v285, 1
      %v288 = vsel %vm276, %v283, %v287
      %v289 = vshrl.u32 %v267, 16
      %v291 = vor.u32 %v289, %v287
      %v293 = vshll.u32 %v268, 16
      %v295 = vrot.slane %v293, 1
      %v296 = vsel %vm276, %v291, %v295
      %v297 = vshrl.u32 %v268, 16
      %v299 = vor.u32 %v297, %v295
      %v301 = vshll.u32 %v269, 16
      %v303 = vrot.slane %v301, 1
      %v304 = vsel %vm276, %v299, %v303
      %v305 = vshrl.u32 %v269, 16
      %v307 = vor.u32 %v305, %v303
      %v309 = vshll.u32 %v270, 16
      %v311 = vrot.slane %v309, 1
      %v312 = vsel %vm276, %v307, %v311
      %v313 = vshrl.u32 %v270, 16
      %v315 = vor.u32 %v313, %v311
      %v317 = vshll.u32 %v271, 16
      %v319 = vrot.slane %v317, 1
      %v320 = vsel %vm276, %v315, %v319
      %v321 = vshrl.u32 %v271, 16
      %v323 = vor.u32 %v321, %v319
      %v325 = vshll.u32 %v272, 16
      %v327 = vrot.slane %v325, 1
      %v328 = vsel %vm276, %v323, %v327
      %v329 = vshrl.u32 %v272, 16
      %v331 = vor.u32 %v329, %v327
      %v333 = vshll.u32 %v273, 16
      %v335 = vrot.slane %v333, 1
      %v336 = vsel %vm276, %v331, %v335
      %v337 = vshrl.u32 %v273, 16
      %v339 = vor.u32 %v337, %v335
      %v341 = vshll.u32 %v274, 16
      %v343 = vrot.slane %v341, 1
      %v344 = vsel %vm276, %v339, %v343
      %v345 = vshrl.u32 %v274, 16
      %v347 = vor.u32 %v345, %v343
      %v349 = vshll.u32 %v275, 16
      %v351 = vrot.slane %v349, 1
      %v352 = vsel %vm276, %v347, %v351
      %v355 = vunpack.c.l.b16 %v226
      %v356 = vunpack.c.l.b16 %v227
      %v357 = vpack.c.b16 %v356, %v355
      %vm359 = vcmask 130048
      %v361 = vsel %vm359, %v288, 0
      %v364 = vsel %vm359, %v296, 0
      %v367 = vsel %vm359, %v304, 0
      %v370 = vsel %vm359, %v312, 0
      %v373 = vsel %vm359, %v320, 0
      %v376 = vsel %vm359, %v328, 0
      %v379 = vsel %vm359, %v336, 0
      %v382 = vsel %vm359, %v344, 0
      %v385 = vsel %vm359, %v352, 0
      %387 = vmatprep.subr.bf16.mxu0 0
      %388 = vmatpush1.bf16.msra.mxu0 0
      %389 = vmatprep.subr.bf16.mxu0 0
      %390 = vmatpush1.bf16.msra.mxu0 0
      %391 = vmatprep.subr.bf16.mxu0 0
      %392 = vmatpush1.bf16.msra.mxu0 0
      %393 = vmatprep.subr.bf16.mxu0 0
      %394 = vmatpush1.bf16.msra.mxu0 0
      %395 = vmatprep.subr.bf16.mxu0 0
      %396 = vmatpush1.bf16.msra.mxu0 0
      %397 = vmatprep.subr.bf16.mxu0 0
      %398 = vmatpush1.bf16.msra.mxu0 0
      %399 = vmatprep.subr.bf16.mxu0 0
      %400 = vmatpush1.bf16.msra.mxu0 0
      %401 = vmatprep.subr.bf16.mxu0 0
      %402 = vmatpush1.bf16.msra.mxu0 %v357
      %403 = vmatprep.subr.bf16.mxu0 0
      %404 = vmatpush2.bf16.msra.mxu0 0
      %405 = vmatprep.subr.bf16.mxu0 0
      %406 = vmatpush2.bf16.msra.mxu0 0
      %407 = vmatprep.subr.bf16.mxu0 0
      %408 = vmatpush2.bf16.msra.mxu0 0
      %409 = vmatprep.subr.bf16.mxu0 0
      %410 = vmatpush2.bf16.msra.mxu0 0
      %411 = vmatprep.subr.bf16.mxu0 0
      %412 = vmatpush2.bf16.msra.mxu0 0
      %413 = vmatprep.subr.bf16.mxu0 0
      %414 = vmatpush2.bf16.msra.mxu0 0
      %415 = vmatprep.subr.bf16.mxu0 0
      %416 = vmatpush2.bf16.msra.mxu0 0
      %417 = vmatprep.subr.bf16.mxu0 0
      %418 = vmatpush2.bf16.msra.mxu0 0
      %419 = vmatprep.mubr.bf16.mxu0 0
      %420 = vmatmul.mubr.bf16.gmra.mxu0 %v361
      %v421 = vpop.f32.mrf.mxu0
      %v422 = vadd.f32 0.0, %v421
      %v423 = vpop.f32.mrf.mxu0
      %v424 = vpop.f32.mrf.mxu0
      %v425 = vadd.f32 0.0, %v424
      %v426 = vpop.f32.mrf.mxu0
      %427 = vmatprep.mubr.bf16.mxu0 0
      %428 = vmatmul.mubr.bf16.gmra.mxu0 %v364
      %v429 = vpop.f32.mrf.mxu0
      %v430 = vadd.f32 0.0, %v429
      %v431 = vpop.f32.mrf.mxu0
      %v432 = vpop.f32.mrf.mxu0
      %v433 = vadd.f32 0.0, %v432
      %v434 = vpop.f32.mrf.mxu0
      %435 = vmatprep.mubr.bf16.mxu0 0
      %436 = vmatmul.mubr.bf16.gmra.mxu0 %v367
      %v437 = vpop.f32.mrf.mxu0
      %v438 = vadd.f32 0.0, %v437
      %v439 = vpop.f32.mrf.mxu0
      %v440 = vpop.f32.mrf.mxu0
      %v441 = vadd.f32 0.0, %v440
      %v442 = vpop.f32.mrf.mxu0
      %443 = vmatprep.mubr.bf16.mxu0 0
      %444 = vmatmul.mubr.bf16.gmra.mxu0 %v370
      %v445 = vpop.f32.mrf.mxu0
      %v446 = vadd.f32 0.0, %v445
      %v447 = vpop.f32.mrf.mxu0
      %v448 = vpop.f32.mrf.mxu0
      %v449 = vadd.f32 0.0, %v448
      %v450 = vpop.f32.mrf.mxu0
      %451 = vmatprep.mubr.bf16.mxu0 0
      %452 = vmatmul.mubr.bf16.gmra.mxu0 %v373
      %v453 = vpop.f32.mrf.mxu0
      %v454 = vadd.f32 0.0, %v453
      %v455 = vpop.f32.mrf.mxu0
      %v456 = vpop.f32.mrf.mxu0
      %v457 = vadd.f32 0.0, %v456
      %v458 = vpop.f32.mrf.mxu0
      %459 = vmatprep.mubr.bf16.mxu0 0
      %460 = vmatmul.mubr.bf16.gmra.mxu0 %v376
      %v461 = vpop.f32.mrf.mxu0
      %v462 = vadd.f32 0.0, %v461
      %v463 = vpop.f32.mrf.mxu0
      %v464 = vpop.f32.mrf.mxu0
      %v465 = vadd.f32 0.0, %v464
      %v466 = vpop.f32.mrf.mxu0
      %467 = vmatprep.mubr.bf16.mxu0 0
      %468 = vmatmul.mubr.bf16.gmra.mxu0 %v379
      %v469 = vpop.f32.mrf.mxu0
      %v470 = vadd.f32 0.0, %v469
      %v471 = vpop.f32.mrf.mxu0
      %v472 = vpop.f32.mrf.mxu0
      %v473 = vadd.f32 0.0, %v472
      %v474 = vpop.f32.mrf.mxu0
      %475 = vmatprep.mubr.bf16.mxu0 0
      %476 = vmatmul.mubr.bf16.gmra.mxu0 %v382
      %v477 = vpop.f32.mrf.mxu0
      %v478 = vadd.f32 0.0, %v477
      %v479 = vpop.f32.mrf.mxu0
      %v480 = vpop.f32.mrf.mxu0
      %v481 = vadd.f32 0.0, %v480
      %v482 = vpop.f32.mrf.mxu0
      %483 = vmatprep.mubr.bf16.mxu0 0
      %484 = vmatmul.mubr.bf16.gmra.mxu0 %v385
      %v485 = vpop.f32.mrf.mxu0
      %v486 = vadd.f32 0.0, %v485
      %v487 = vpop.f32.mrf.mxu0
      %v488 = vpop.f32.mrf.mxu0
      %v489 = vadd.f32 0.0, %v488
      %v490 = vpop.f32.mrf.mxu0
      %491 = vdwg.mxu0
      %v494 = vunpack.c.l.b16 %v223
      %v495 = vunpack.c.l.b16 %v224
      %v496 = vpack.c.b16 %v495, %v494
      %v498 = vsel %vm359, %v266, 0
      %v500 = vsel %vm359, %v267, 0
      %v502 = vsel %vm359, %v268, 0
      %v504 = vsel %vm359, %v269, 0
      %v506 = vsel %vm359, %v270, 0
      %v508 = vsel %vm359, %v271, 0
      %v510 = vsel %vm359, %v272, 0
      %v512 = vsel %vm359, %v273, 0
      %v514 = vsel %vm359, %v274, 0
      %516 = vmatprep.subr.bf16.mxu0 0
      %517 = vmatpush1.bf16.msra.mxu0 0
      %518 = vmatprep.subr.bf16.mxu0 0
      %519 = vmatpush1.bf16.msra.mxu0 0
      %520 = vmatprep.subr.bf16.mxu0 0
      %521 = vmatpush1.bf16.msra.mxu0 0
      %522 = vmatprep.subr.bf16.mxu0 0
      %523 = vmatpush1.bf16.msra.mxu0 0
      %524 = vmatprep.subr.bf16.mxu0 0
      %525 = vmatpush1.bf16.msra.mxu0 0
      %526 = vmatprep.subr.bf16.mxu0 0
      %527 = vmatpush1.bf16.msra.mxu0 0
      %528 = vmatprep.subr.bf16.mxu0 0
      %529 = vmatpush1.bf16.msra.mxu0 0
      %530 = vmatprep.subr.bf16.mxu0 0
      %531 = vmatpush1.bf16.msra.mxu0 %v496
      %532 = vmatprep.subr.bf16.mxu0 0
      %533 = vmatpush2.bf16.msra.mxu0 0
      %534 = vmatprep.subr.bf16.mxu0 0
      %535 = vmatpush2.bf16.msra.mxu0 0
      %536 = vmatprep.subr.bf16.mxu0 0
      %537 = vmatpush2.bf16.msra.mxu0 0
      %538 = vmatprep.subr.bf16.mxu0 0
      %539 = vmatpush2.bf16.msra.mxu0 0
      %540 = vmatprep.subr.bf16.mxu0 0
      %541 = vmatpush2.bf16.msra.mxu0 0
      %542 = vmatprep.subr.bf16.mxu0 0
      %543 = vmatpush2.bf16.msra.mxu0 0
      %544 = vmatprep.subr.bf16.mxu0 0
      %545 = vmatpush2.bf16.msra.mxu0 0
      %546 = vmatprep.subr.bf16.mxu0 0
      %547 = vmatpush2.bf16.msra.mxu0 0
      %548 = vmatprep.mubr.bf16.mxu0 0
      %549 = vmatmul.mubr.bf16.gmra.mxu0 %v498
      %v550 = vpop.f32.mrf.mxu0
      %v551 = vadd.f32 %v422, %v550
      %v552 = vpop.f32.mrf.mxu0
      %v553 = vpop.f32.mrf.mxu0
      %v554 = vadd.f32 %v425, %v553
      %v555 = vpop.f32.mrf.mxu0
      %556 = vmatprep.mubr.bf16.mxu0 0
      %557 = vmatmul.mubr.bf16.gmra.mxu0 %v500
      %v558 = vpop.f32.mrf.mxu0
      %v559 = vadd.f32 %v430, %v558
      %v560 = vpop.f32.mrf.mxu0
      %v561 = vpop.f32.mrf.mxu0
      %v562 = vadd.f32 %v433, %v561
      %v563 = vpop.f32.mrf.mxu0
      %564 = vmatprep.mubr.bf16.mxu0 0
      %565 = vmatmul.mubr.bf16.gmra.mxu0 %v502
      %v566 = vpop.f32.mrf.mxu0
      %v567 = vadd.f32 %v438, %v566
      %v568 = vpop.f32.mrf.mxu0
      %v569 = vpop.f32.mrf.mxu0
      %v570 = vadd.f32 %v441, %v569
      %v571 = vpop.f32.mrf.mxu0
      %572 = vmatprep.mubr.bf16.mxu0 0
      %573 = vmatmul.mubr.bf16.gmra.mxu0 %v504
      %v574 = vpop.f32.mrf.mxu0
      %v575 = vadd.f32 %v446, %v574
      %v576 = vpop.f32.mrf.mxu0
      %v577 = vpop.f32.mrf.mxu0
      %v578 = vadd.f32 %v449, %v577
      %v579 = vpop.f32.mrf.mxu0
      %580 = vmatprep.mubr.bf16.mxu0 0
      %581 = vmatmul.mubr.bf16.gmra.mxu0 %v506
      %v582 = vpop.f32.mrf.mxu0
      %v583 = vadd.f32 %v454, %v582
      %v584 = vpop.f32.mrf.mxu0
      %v585 = vpop.f32.mrf.mxu0
      %v586 = vadd.f32 %v457, %v585
      %v587 = vpop.f32.mrf.mxu0
      %588 = vmatprep.mubr.bf16.mxu0 0
      %589 = vmatmul.mubr.bf16.gmra.mxu0 %v508
      %v590 = vpop.f32.mrf.mxu0
      %v591 = vadd.f32 %v462, %v590
      %v592 = vpop.f32.mrf.mxu0
      %v593 = vpop.f32.mrf.mxu0
      %v594 = vadd.f32 %v465, %v593
      %v595 = vpop.f32.mrf.mxu0
      %596 = vmatprep.mubr.bf16.mxu0 0
      %597 = vmatmul.mubr.bf16.gmra.mxu0 %v510
      %v598 = vpop.f32.mrf.mxu0
      %v599 = vadd.f32 %v470, %v598
      %v600 = vpop.f32.mrf.mxu0
      %v601 = vpop.f32.mrf.mxu0
      %v602 = vadd.f32 %v473, %v601
      %v603 = vpop.f32.mrf.mxu0
      %604 = vmatprep.mubr.bf16.mxu0 0
      %605 = vmatmul.mubr.bf16.gmra.mxu0 %v512
      %v606 = vpop.f32.mrf.mxu0
      %v607 = vadd.f32 %v478, %v606
      %v608 = vpop.f32.mrf.mxu0
      %v609 = vpop.f32.mrf.mxu0
      %v610 = vadd.f32 %v481, %v609
      %v611 = vpop.f32.mrf.mxu0
      %612 = vmatprep.mubr.bf16.mxu0 0
      %613 = vmatmul.mubr.bf16.gmra.mxu0 %v514
      %v614 = vpop.f32.mrf.mxu0
      %v615 = vadd.f32 %v486, %v614
      %v616 = vpop.f32.mrf.mxu0
      %v617 = vpop.f32.mrf.mxu0
      %v618 = vadd.f32 %v489, %v617
      %v619 = vpop.f32.mrf.mxu0
      %620 = vdwg.mxu0
      %s621 = scalar_lea.vmem %s1, 16
      %v622 = vld [vmem:[%s621] sm:$0xf]
      %v623 = vld [vmem:[%s621 + $0x4] sm:$0xf]
      %vm624 = vcmask 1046528
      %v625 = vrot.slane %v266, 1
      %v626 = vrot.slane %v267, 1
      %v627 = vsel %vm624, %v625, %v626
      %v628 = vrot.slane %v268, 1
      %v629 = vsel %vm624, %v626, %v628
      %v630 = vrot.slane %v269, 1
      %v631 = vsel %vm624, %v628, %v630
      %v632 = vrot.slane %v270, 1
      %v633 = vsel %vm624, %v630, %v632
      %v634 = vrot.slane %v271, 1
      %v635 = vsel %vm624, %v632, %v634
      %v636 = vrot.slane %v272, 1
      %v637 = vsel %vm624, %v634, %v636
      %v638 = vrot.slane %v273, 1
      %v639 = vsel %vm624, %v636, %v638
      %v640 = vrot.slane %v274, 1
      %v641 = vsel %vm624, %v638, %v640
      %v642 = vrot.slane %v275, 1
      %v643 = vsel %vm624, %v640, %v642
      %v646 = vunpack.c.l.b16 %v622
      %v647 = vunpack.c.l.b16 %v623
      %v648 = vpack.c.b16 %v647, %v646
      %v651 = vsel %vm359, %v627, 0
      %v654 = vsel %vm359, %v629, 0
      %v657 = vsel %vm359, %v631, 0
      %v660 = vsel %vm359, %v633, 0
      %v663 = vsel %vm359, %v635, 0
      %v666 = vsel %vm359, %v637, 0
      %v669 = vsel %vm359, %v639, 0
      %v672 = vsel %vm359, %v641, 0
      %v675 = vsel %vm359, %v643, 0
      %677 = vmatprep.subr.bf16.mxu0 0
      %678 = vmatpush1.bf16.msra.mxu0 0
      %679 = vmatprep.subr.bf16.mxu0 0
      %680 = vmatpush1.bf16.msra.mxu0 0
      %681 = vmatprep.subr.bf16.mxu0 0
      %682 = vmatpush1.bf16.msra.mxu0 0
      %683 = vmatprep.subr.bf16.mxu0 0
      %684 = vmatpush1.bf16.msra.mxu0 0
      %685 = vmatprep.subr.bf16.mxu0 0
      %686 = vmatpush1.bf16.msra.mxu0 0
      %687 = vmatprep.subr.bf16.mxu0 0
      %688 = vmatpush1.bf16.msra.mxu0 0
      %689 = vmatprep.subr.bf16.mxu0 0
      %690 = vmatpush1.bf16.msra.mxu0 0
      %691 = vmatprep.subr.bf16.mxu0 0
      %692 = vmatpush1.bf16.msra.mxu0 %v648
      %693 = vmatprep.subr.bf16.mxu0 0
      %694 = vmatpush2.bf16.msra.mxu0 0
      %695 = vmatprep.subr.bf16.mxu0 0
      %696 = vmatpush2.bf16.msra.mxu0 0
      %697 = vmatprep.subr.bf16.mxu0 0
      %698 = vmatpush2.bf16.msra.mxu0 0
      %699 = vmatprep.subr.bf16.mxu0 0
      %700 = vmatpush2.bf16.msra.mxu0 0
      %701 = vmatprep.subr.bf16.mxu0 0
      %702 = vmatpush2.bf16.msra.mxu0 0
      %703 = vmatprep.subr.bf16.mxu0 0
      %704 = vmatpush2.bf16.msra.mxu0 0
      %705 = vmatprep.subr.bf16.mxu0 0
      %706 = vmatpush2.bf16.msra.mxu0 0
      %707 = vmatprep.subr.bf16.mxu0 0
      %708 = vmatpush2.bf16.msra.mxu0 0
      %709 = vmatprep.mubr.bf16.mxu0 0
      %710 = vmatmul.mubr.bf16.gmra.mxu0 %v651
      %v711 = vpop.f32.mrf.mxu0
      %v712 = vadd.f32 0.0, %v711
      %v713 = vpop.f32.mrf.mxu0
      %v714 = vpop.f32.mrf.mxu0
      %v715 = vadd.f32 0.0, %v714
      %v716 = vpop.f32.mrf.mxu0
      %717 = vmatprep.mubr.bf16.mxu0 0
      %718 = vmatmul.mubr.bf16.gmra.mxu0 %v654
      %v719 = vpop.f32.mrf.mxu0
      %v720 = vadd.f32 0.0, %v719
      %v721 = vpop.f32.mrf.mxu0
      %v722 = vpop.f32.mrf.mxu0
      %v723 = vadd.f32 0.0, %v722
      %v724 = vpop.f32.mrf.mxu0
      %725 = vmatprep.mubr.bf16.mxu0 0
      %726 = vmatmul.mubr.bf16.gmra.mxu0 %v657
      %v727 = vpop.f32.mrf.mxu0
      %v728 = vadd.f32 0.0, %v727
      %v729 = vpop.f32.mrf.mxu0
      %v730 = vpop.f32.mrf.mxu0
      %v731 = vadd.f32 0.0, %v730
      %v732 = vpop.f32.mrf.mxu0
      %733 = vmatprep.mubr.bf16.mxu0 0
      %734 = vmatmul.mubr.bf16.gmra.mxu0 %v660
      %v735 = vpop.f32.mrf.mxu0
      %v736 = vadd.f32 0.0, %v735
      %v737 = vpop.f32.mrf.mxu0
      %v738 = vpop.f32.mrf.mxu0
      %v739 = vadd.f32 0.0, %v738
      %v740 = vpop.f32.mrf.mxu0
      %741 = vmatprep.mubr.bf16.mxu0 0
      %742 = vmatmul.mubr.bf16.gmra.mxu0 %v663
      %v743 = vpop.f32.mrf.mxu0
      %v744 = vadd.f32 0.0, %v743
      %v745 = vpop.f32.mrf.mxu0
      %v746 = vpop.f32.mrf.mxu0
      %v747 = vadd.f32 0.0, %v746
      %v748 = vpop.f32.mrf.mxu0
      %749 = vmatprep.mubr.bf16.mxu0 0
      %750 = vmatmul.mubr.bf16.gmra.mxu0 %v666
      %v751 = vpop.f32.mrf.mxu0
      %v752 = vadd.f32 0.0, %v751
      %v753 = vpop.f32.mrf.mxu0
      %v754 = vpop.f32.mrf.mxu0
      %v755 = vadd.f32 0.0, %v754
      %v756 = vpop.f32.mrf.mxu0
      %757 = vmatprep.mubr.bf16.mxu0 0
      %758 = vmatmul.mubr.bf16.gmra.mxu0 %v669
      %v759 = vpop.f32.mrf.mxu0
      %v760 = vadd.f32 0.0, %v759
      %v761 = vpop.f32.mrf.mxu0
      %v762 = vpop.f32.mrf.mxu0
      %v763 = vadd.f32 0.0, %v762
      %v764 = vpop.f32.mrf.mxu0
      %765 = vmatprep.mubr.bf16.mxu0 0
      %766 = vmatmul.mubr.bf16.gmra.mxu0 %v672
      %v767 = vpop.f32.mrf.mxu0
      %v768 = vadd.f32 0.0, %v767
      %v769 = vpop.f32.mrf.mxu0
      %v770 = vpop.f32.mrf.mxu0
      %v771 = vadd.f32 0.0, %v770
      %v772 = vpop.f32.mrf.mxu0
      %773 = vmatprep.mubr.bf16.mxu0 0
      %774 = vmatmul.mubr.bf16.gmra.mxu0 %v675
      %v775 = vpop.f32.mrf.mxu0
      %v776 = vadd.f32 0.0, %v775
      %v777 = vpop.f32.mrf.mxu0
      %v778 = vpop.f32.mrf.mxu0
      %v779 = vadd.f32 0.0, %v778
      %v780 = vpop.f32.mrf.mxu0
      %781 = vdwg.mxu0
      %v782 = vadd.f32 %v551, %v712
      %v783 = vadd.f32 %v554, %v715
      %v784 = vadd.f32 %v559, %v720
      %v785 = vadd.f32 %v562, %v723
      %v786 = vadd.f32 %v567, %v728
      %v787 = vadd.f32 %v570, %v731
      %v788 = vadd.f32 %v575, %v736
      %v789 = vadd.f32 %v578, %v739
      %v790 = vadd.f32 %v583, %v744
      %v791 = vadd.f32 %v586, %v747
      %v792 = vadd.f32 %v591, %v752
      %v793 = vadd.f32 %v594, %v755
      %v794 = vadd.f32 %v599, %v760
      %v795 = vadd.f32 %v602, %v763
      %v796 = vadd.f32 %v607, %v768
      %v797 = vadd.f32 %v610, %v771
      %v798 = vadd.f32 %v615, %v776
      %v799 = vadd.f32 %v618, %v779
      %s800 = scalar_lea.vmem %s1, 24
      %v801 = vld [vmem:[%s800] sm:$0xf]
      %v802 = vld [vmem:[%s800 + $0x4] sm:$0xf]
      %v805 = vunpack.c.l.b16 %v219
      %v806 = vunpack.c.l.b16 %v220
      %v807 = vpack.c.b16 %v805, %v265
      %v808 = vpack.c.b16 %v806, %v806
      %v809 = vrot.slane %v807, 1
      %v810 = vsel %vm624, %v640, %v809
      %v811 = vrot.slane %v808, 1
      %v812 = vsel %vm624, %v809, %v811
      %v815 = vunpack.c.l.b16 %v801
      %v816 = vunpack.c.l.b16 %v802
      %v817 = vpack.c.b16 %v816, %v815
      %v820 = vsel %vm359, %v810, 0
      %v823 = vsel %vm359, %v812, 0
      %825 = vmatprep.subr.bf16.mxu0 0
      %826 = vmatpush1.bf16.msra.mxu0 0
      %827 = vmatprep.subr.bf16.mxu0 0
      %828 = vmatpush1.bf16.msra.mxu0 0
      %829 = vmatprep.subr.bf16.mxu0 0
      %830 = vmatpush1.bf16.msra.mxu0 0
      %831 = vmatprep.subr.bf16.mxu0 0
      %832 = vmatpush1.bf16.msra.mxu0 0
      %833 = vmatprep.subr.bf16.mxu0 0
      %834 = vmatpush1.bf16.msra.mxu0 0
      %835 = vmatprep.subr.bf16.mxu0 0
      %836 = vmatpush1.bf16.msra.mxu0 0
      %837 = vmatprep.subr.bf16.mxu0 0
      %838 = vmatpush1.bf16.msra.mxu0 0
      %839 = vmatprep.subr.bf16.mxu0 0
      %840 = vmatpush1.bf16.msra.mxu0 %v817
      %841 = vmatprep.subr.bf16.mxu0 0
      %842 = vmatpush2.bf16.msra.mxu0 0
      %843 = vmatprep.subr.bf16.mxu0 0
      %844 = vmatpush2.bf16.msra.mxu0 0
      %845 = vmatprep.subr.bf16.mxu0 0
      %846 = vmatpush2.bf16.msra.mxu0 0
      %847 = vmatprep.subr.bf16.mxu0 0
      %848 = vmatpush2.bf16.msra.mxu0 0
      %849 = vmatprep.subr.bf16.mxu0 0
      %850 = vmatpush2.bf16.msra.mxu0 0
      %851 = vmatprep.subr.bf16.mxu0 0
      %852 = vmatpush2.bf16.msra.mxu0 0
      %853 = vmatprep.subr.bf16.mxu0 0
      %854 = vmatpush2.bf16.msra.mxu0 0
      %855 = vmatprep.subr.bf16.mxu0 0
      %856 = vmatpush2.bf16.msra.mxu0 0
      %857 = vmatprep.mubr.bf16.mxu0 0
      %858 = vmatmul.mubr.bf16.gmra.mxu0 %v654
      %v859 = vpop.f32.mrf.mxu0
      %v860 = vadd.f32 0.0, %v859
      %v861 = vpop.f32.mrf.mxu0
      %v862 = vpop.f32.mrf.mxu0
      %v863 = vadd.f32 0.0, %v862
      %v864 = vpop.f32.mrf.mxu0
      %865 = vmatprep.mubr.bf16.mxu0 0
      %866 = vmatmul.mubr.bf16.gmra.mxu0 %v657
      %v867 = vpop.f32.mrf.mxu0
      %v868 = vadd.f32 0.0, %v867
      %v869 = vpop.f32.mrf.mxu0
      %v870 = vpop.f32.mrf.mxu0
      %v871 = vadd.f32 0.0, %v870
      %v872 = vpop.f32.mrf.mxu0
      %873 = vmatprep.mubr.bf16.mxu0 0
      %874 = vmatmul.mubr.bf16.gmra.mxu0 %v660
      %v875 = vpop.f32.mrf.mxu0
      %v876 = vadd.f32 0.0, %v875
      %v877 = vpop.f32.mrf.mxu0
      %v878 = vpop.f32.mrf.mxu0
      %v879 = vadd.f32 0.0, %v878
      %v880 = vpop.f32.mrf.mxu0
      %881 = vmatprep.mubr.bf16.mxu0 0
      %882 = vmatmul.mubr.bf16.gmra.mxu0 %v663
      %v883 = vpop.f32.mrf.mxu0
      %v884 = vadd.f32 0.0, %v883
      %v885 = vpop.f32.mrf.mxu0
      %v886 = vpop.f32.mrf.mxu0
      %v887 = vadd.f32 0.0, %v886
      %v888 = vpop.f32.mrf.mxu0
      %889 = vmatprep.mubr.bf16.mxu0 0
      %890 = vmatmul.mubr.bf16.gmra.mxu0 %v666
      %v891 = vpop.f32.mrf.mxu0
      %v892 = vadd.f32 0.0, %v891
      %v893 = vpop.f32.mrf.mxu0
      %v894 = vpop.f32.mrf.mxu0
      %v895 = vadd.f32 0.0, %v894
      %v896 = vpop.f32.mrf.mxu0
      %897 = vmatprep.mubr.bf16.mxu0 0
      %898 = vmatmul.mubr.bf16.gmra.mxu0 %v669
      %v899 = vpop.f32.mrf.mxu0
      %v900 = vadd.f32 0.0, %v899
      %v901 = vpop.f32.mrf.mxu0
      %v902 = vpop.f32.mrf.mxu0
      %v903 = vadd.f32 0.0, %v902
      %v904 = vpop.f32.mrf.mxu0
      %905 = vmatprep.mubr.bf16.mxu0 0
      %906 = vmatmul.mubr.bf16.gmra.mxu0 %v672
      %v907 = vpop.f32.mrf.mxu0
      %v908 = vadd.f32 0.0, %v907
      %v909 = vpop.f32.mrf.mxu0
      %v910 = vpop.f32.mrf.mxu0
      %v911 = vadd.f32 0.0, %v910
      %v912 = vpop.f32.mrf.mxu0
      %913 = vmatprep.mubr.bf16.mxu0 0
      %914 = vmatmul.mubr.bf16.gmra.mxu0 %v820
      %v915 = vpop.f32.mrf.mxu0
      %v916 = vadd.f32 0.0, %v915
      %v917 = vpop.f32.mrf.mxu0
      %v918 = vpop.f32.mrf.mxu0
      %v919 = vadd.f32 0.0, %v918
      %v920 = vpop.f32.mrf.mxu0
      %921 = vmatprep.mubr.bf16.mxu0 0
      %922 = vmatmul.mubr.bf16.gmra.mxu0 %v823
      %v923 = vpop.f32.mrf.mxu0
      %v924 = vadd.f32 0.0, %v923
      %v925 = vpop.f32.mrf.mxu0
      %v926 = vpop.f32.mrf.mxu0
      %v927 = vadd.f32 0.0, %v926
      %v928 = vpop.f32.mrf.mxu0
      %929 = vdwg.mxu0
      %v930 = vadd.f32 %v782, %v860
      %v931 = vadd.f32 %v783, %v863
      %v932 = vadd.f32 %v784, %v868
      %v933 = vadd.f32 %v785, %v871
      %v934 = vadd.f32 %v786, %v876
      %v935 = vadd.f32 %v787, %v879
      %v936 = vadd.f32 %v788, %v884
      %v937 = vadd.f32 %v789, %v887
      %v938 = vadd.f32 %v790, %v892
      %v939 = vadd.f32 %v791, %v895
      %v940 = vadd.f32 %v792, %v900
      %v941 = vadd.f32 %v793, %v903
      %v942 = vadd.f32 %v794, %v908
      %v943 = vadd.f32 %v795, %v911
      %v944 = vadd.f32 %v796, %v916
      %v945 = vadd.f32 %v797, %v919
      %v946 = vadd.f32 %v798, %v924
      %v947 = vadd.f32 %v799, %v927
      %s948 = scalar_lea.vmem %s1, 32
      %v949 = vld [vmem:[%s948] sm:$0xf]
      %v950 = vld [vmem:[%s948 + $0x4] sm:$0xf]
      %vm951 = vsmask.f32 6400
      %v952 = vrot.slane %v289, 1
      %v953 = vrot.slane %v285, 2
      %v954 = vor.u32 %v952, %v953
      %v955 = vrot.slane %v297, 1
      %v956 = vrot.slane %v293, 2
      %v957 = vor.u32 %v955, %v956
      %v958 = vsel %vm951, %v954, %v957
      %v959 = vrot.slane %v305, 1
      %v960 = vrot.slane %v301, 2
      %v961 = vor.u32 %v959, %v960
      %v962 = vsel %vm951, %v957, %v961
      %v963 = vrot.slane %v313, 1
      %v964 = vrot.slane %v309, 2
      %v965 = vor.u32 %v963, %v964
      %v966 = vsel %vm951, %v961, %v965
      %v967 = vrot.slane %v321, 1
      %v968 = vrot.slane %v317, 2
      %v969 = vor.u32 %v967, %v968
      %v970 = vsel %vm951, %v965, %v969
      %v971 = vrot.slane %v329, 1
      %v972 = vrot.slane %v325, 2
      %v973 = vor.u32 %v971, %v972
      %v974 = vsel %vm951, %v969, %v973
      %v975 = vrot.slane %v337, 1
      %v976 = vrot.slane %v333, 2
      %v977 = vor.u32 %v975, %v976
      %v978 = vsel %vm951, %v973, %v977
      %v979 = vrot.slane %v345, 1
      %v980 = vrot.slane %v341, 2
      %v981 = vor.u32 %v979, %v980
      %v982 = vsel %vm951, %v977, %v981
      %v984 = vshrl.u32 %v807, 16
      %v986 = vrot.slane %v984, 1
      %v987 = vshll.u32 %v807, 16
      %v989 = vrot.slane %v987, 2
      %v990 = vor.u32 %v986, %v989
      %v991 = vsel %vm951, %v981, %v990
      %v993 = vshrl.u32 %v808, 16
      %v995 = vrot.slane %v993, 1
      %v996 = vshll.u32 %v808, 16
      %v998 = vrot.slane %v996, 2
      %v999 = vor.u32 %v995, %v998
      %v1000 = vsel %vm951, %v990, %v999
      %v1003 = vunpack.c.l.b16 %v949
      %v1004 = vunpack.c.l.b16 %v950
      %v1005 = vpack.c.b16 %v1004, %v1003
      %v1008 = vsel %vm359, %v958, 0
      %v1011 = vsel %vm359, %v962, 0
      %v1014 = vsel %vm359, %v966, 0
      %v1017 = vsel %vm359, %v970, 0
      %v1020 = vsel %vm359, %v974, 0
      %v1023 = vsel %vm359, %v978, 0
      %v1026 = vsel %vm359, %v982, 0
      %v1029 = vsel %vm359, %v991, 0
      %v1032 = vsel %vm359, %v1000, 0
      %1034 = vmatprep.subr.bf16.mxu0 0
      %1035 = vmatpush1.bf16.msra.mxu0 0
      %1036 = vmatprep.subr.bf16.mxu0 0
      %1037 = vmatpush1.bf16.msra.mxu0 0
      %1038 = vmatprep.subr.bf16.mxu0 0
      %1039 = vmatpush1.bf16.msra.mxu0 0
      %1040 = vmatprep.subr.bf16.mxu0 0
      %1041 = vmatpush1.bf16.msra.mxu0 0
      %1042 = vmatprep.subr.bf16.mxu0 0
      %1043 = vmatpush1.bf16.msra.mxu0 0
      %1044 = vmatprep.subr.bf16.mxu0 0
      %1045 = vmatpush1.bf16.msra.mxu0 0
      %1046 = vmatprep.subr.bf16.mxu0 0
      %1047 = vmatpush1.bf16.msra.mxu0 0
      %1048 = vmatprep.subr.bf16.mxu0 0
      %1049 = vmatpush1.bf16.msra.mxu0 %v1005
      %1050 = vmatprep.subr.bf16.mxu0 0
      %1051 = vmatpush2.bf16.msra.mxu0 0
      %1052 = vmatprep.subr.bf16.mxu0 0
      %1053 = vmatpush2.bf16.msra.mxu0 0
      %1054 = vmatprep.subr.bf16.mxu0 0
      %1055 = vmatpush2.bf16.msra.mxu0 0
      %1056 = vmatprep.subr.bf16.mxu0 0
      %1057 = vmatpush2.bf16.msra.mxu0 0
      %1058 = vmatprep.subr.bf16.mxu0 0
      %1059 = vmatpush2.bf16.msra.mxu0 0
      %1060 = vmatprep.subr.bf16.mxu0 0
      %1061 = vmatpush2.bf16.msra.mxu0 0
      %1062 = vmatprep.subr.bf16.mxu0 0
      %1063 = vmatpush2.bf16.msra.mxu0 0
      %1064 = vmatprep.subr.bf16.mxu0 0
      %1065 = vmatpush2.bf16.msra.mxu0 0
      %1066 = vmatprep.mubr.bf16.mxu0 0
      %1067 = vmatmul.mubr.bf16.gmra.mxu0 %v1008
      %v1068 = vpop.f32.mrf.mxu0
      %v1069 = vadd.f32 0.0, %v1068
      %v1070 = vpop.f32.mrf.mxu0
      %v1071 = vpop.f32.mrf.mxu0
      %v1072 = vadd.f32 0.0, %v1071
      %v1073 = vpop.f32.mrf.mxu0
      %1074 = vmatprep.mubr.bf16.mxu0 0
      %1075 = vmatmul.mubr.bf16.gmra.mxu0 %v1011
      %v1076 = vpop.f32.mrf.mxu0
      %v1077 = vadd.f32 0.0, %v1076
      %v1078 = vpop.f32.mrf.mxu0
      %v1079 = vpop.f32.mrf.mxu0
      %v1080 = vadd.f32 0.0, %v1079
      %v1081 = vpop.f32.mrf.mxu0
      %1082 = vmatprep.mubr.bf16.mxu0 0
      %1083 = vmatmul.mubr.bf16.gmra.mxu0 %v1014
      %v1084 = vpop.f32.mrf.mxu0
      %v1085 = vadd.f32 0.0, %v1084
      %v1086 = vpop.f32.mrf.mxu0
      %v1087 = vpop.f32.mrf.mxu0
      %v1088 = vadd.f32 0.0, %v1087
      %v1089 = vpop.f32.mrf.mxu0
      %1090 = vmatprep.mubr.bf16.mxu0 0
      %1091 = vmatmul.mubr.bf16.gmra.mxu0 %v1017
      %v1092 = vpop.f32.mrf.mxu0
      %v1093 = vadd.f32 0.0, %v1092
      %v1094 = vpop.f32.mrf.mxu0
      %v1095 = vpop.f32.mrf.mxu0
      %v1096 = vadd.f32 0.0, %v1095
      %v1097 = vpop.f32.mrf.mxu0
      %1098 = vmatprep.mubr.bf16.mxu0 0
      %1099 = vmatmul.mubr.bf16.gmra.mxu0 %v1020
      %v1100 = vpop.f32.mrf.mxu0
      %v1101 = vadd.f32 0.0, %v1100
      %v1102 = vpop.f32.mrf.mxu0
      %v1103 = vpop.f32.mrf.mxu0
      %v1104 = vadd.f32 0.0, %v1103
      %v1105 = vpop.f32.mrf.mxu0
      %1106 = vmatprep.mubr.bf16.mxu0 0
      %1107 = vmatmul.mubr.bf16.gmra.mxu0 %v1023
      %v1108 = vpop.f32.mrf.mxu0
      %v1109 = vadd.f32 0.0, %v1108
      %v1110 = vpop.f32.mrf.mxu0
      %v1111 = vpop.f32.mrf.mxu0
      %v1112 = vadd.f32 0.0, %v1111
      %v1113 = vpop.f32.mrf.mxu0
      %1114 = vmatprep.mubr.bf16.mxu0 0
      %1115 = vmatmul.mubr.bf16.gmra.mxu0 %v1026
      %v1116 = vpop.f32.mrf.mxu0
      %v1117 = vadd.f32 0.0, %v1116
      %v1118 = vpop.f32.mrf.mxu0
      %v1119 = vpop.f32.mrf.mxu0
      %v1120 = vadd.f32 0.0, %v1119
      %v1121 = vpop.f32.mrf.mxu0
      %1122 = vmatprep.mubr.bf16.mxu0 0
      %1123 = vmatmul.mubr.bf16.gmra.mxu0 %v1029
      %v1124 = vpop.f32.mrf.mxu0
      %v1125 = vadd.f32 0.0, %v1124
      %v1126 = vpop.f32.mrf.mxu0
      %v1127 = vpop.f32.mrf.mxu0
      %v1128 = vadd.f32 0.0, %v1127
      %v1129 = vpop.f32.mrf.mxu0
      %1130 = vmatprep.mubr.bf16.mxu0 0
      %1131 = vmatmul.mubr.bf16.gmra.mxu0 %v1032
      %v1132 = vpop.f32.mrf.mxu0
      %v1133 = vadd.f32 0.0, %v1132
      %v1134 = vpop.f32.mrf.mxu0
      %v1135 = vpop.f32.mrf.mxu0
      %v1136 = vadd.f32 0.0, %v1135
      %v1137 = vpop.f32.mrf.mxu0
      %1138 = vdwg.mxu0
      %v1139 = vadd.f32 %v930, %v1069
      %v1140 = vadd.f32 %v931, %v1072
      %v1141 = vadd.f32 %v932, %v1077
      %v1142 = vadd.f32 %v933, %v1080
      %v1143 = vadd.f32 %v934, %v1085
      %v1144 = vadd.f32 %v935, %v1088
      %v1145 = vadd.f32 %v936, %v1093
      %v1146 = vadd.f32 %v937, %v1096
      %v1147 = vadd.f32 %v938, %v1101
      %v1148 = vadd.f32 %v939, %v1104
      %v1149 = vadd.f32 %v940, %v1109
      %v1150 = vadd.f32 %v941, %v1112
      %v1151 = vadd.f32 %v942, %v1117
      %v1152 = vadd.f32 %v943, %v1120
      %v1153 = vadd.f32 %v944, %v1125
      %v1154 = vadd.f32 %v945, %v1128
      %v1155 = vadd.f32 %v946, %v1133
      %v1156 = vadd.f32 %v947, %v1136
      %s1157 = scalar_lea.vmem %s1, 40
      %v1158 = vld [vmem:[%s1157] sm:$0xf]
      %v1159 = vld [vmem:[%s1157 + $0x4] sm:$0xf]
      %vm1160 = vcmask 1045504
      %v1161 = vrot.slane %v267, 2
      %v1162 = vrot.slane %v268, 2
      %v1163 = vsel %vm1160, %v1161, %v1162
      %v1164 = vrot.slane %v269, 2
      %v1165 = vsel %vm1160, %v1162, %v1164
      %v1166 = vrot.slane %v270, 2
      %v1167 = vsel %vm1160, %v1164, %v1166
      %v1168 = vrot.slane %v271, 2
      %v1169 = vsel %vm1160, %v1166, %v1168
      %v1170 = vrot.slane %v272, 2
      %v1171 = vsel %vm1160, %v1168, %v1170
      %v1172 = vrot.slane %v273, 2
      %v1173 = vsel %vm1160, %v1170, %v1172
      %v1174 = vrot.slane %v274, 2
      %v1175 = vsel %vm1160, %v1172, %v1174
      %v1176 = vrot.slane %v807, 2
      %v1177 = vsel %vm1160, %v1174, %v1176
      %v1178 = vrot.slane %v808, 2
      %v1179 = vsel %vm1160, %v1176, %v1178
      %v1182 = vunpack.c.l.b16 %v1158
      %v1183 = vunpack.c.l.b16 %v1159
      %v1184 = vpack.c.b16 %v1183, %v1182
      %v1187 = vsel %vm359, %v1163, 0
      %v1190 = vsel %vm359, %v1165, 0
      %v1193 = vsel %vm359, %v1167, 0
      %v1196 = vsel %vm359, %v1169, 0
      %v1199 = vsel %vm359, %v1171, 0
      %v1202 = vsel %vm359, %v1173, 0
      %v1205 = vsel %vm359, %v1175, 0
      %v1208 = vsel %vm359, %v1177, 0
      %v1211 = vsel %vm359, %v1179, 0
      %1213 = vmatprep.subr.bf16.mxu0 0
      %1214 = vmatpush1.bf16.msra.mxu0 0
      %1215 = vmatprep.subr.bf16.mxu0 0
      %1216 = vmatpush1.bf16.msra.mxu0 0
      %1217 = vmatprep.subr.bf16.mxu0 0
      %1218 = vmatpush1.bf16.msra.mxu0 0
      %1219 = vmatprep.subr.bf16.mxu0 0
      %1220 = vmatpush1.bf16.msra.mxu0 0
      %1221 = vmatprep.subr.bf16.mxu0 0
      %1222 = vmatpush1.bf16.msra.mxu0 0
      %1223 = vmatprep.subr.bf16.mxu0 0
      %1224 = vmatpush1.bf16.msra.mxu0 0
      %1225 = vmatprep.subr.bf16.mxu0 0
      %1226 = vmatpush1.bf16.msra.mxu0 0
      %1227 = vmatprep.subr.bf16.mxu0 0
      %1228 = vmatpush1.bf16.msra.mxu0 %v1184
      %1229 = vmatprep.subr.bf16.mxu0 0
      %1230 = vmatpush2.bf16.msra.mxu0 0
      %1231 = vmatprep.subr.bf16.mxu0 0
      %1232 = vmatpush2.bf16.msra.mxu0 0
      %1233 = vmatprep.subr.bf16.mxu0 0
      %1234 = vmatpush2.bf16.msra.mxu0 0
      %1235 = vmatprep.subr.bf16.mxu0 0
      %1236 = vmatpush2.bf16.msra.mxu0 0
      %1237 = vmatprep.subr.bf16.mxu0 0
      %1238 = vmatpush2.bf16.msra.mxu0 0
      %1239 = vmatprep.subr.bf16.mxu0 0
      %1240 = vmatpush2.bf16.msra.mxu0 0
      %1241 = vmatprep.subr.bf16.mxu0 0
      %1242 = vmatpush2.bf16.msra.mxu0 0
      %1243 = vmatprep.subr.bf16.mxu0 0
      %1244 = vmatpush2.bf16.msra.mxu0 0
      %1245 = vmatprep.mubr.bf16.mxu0 0
      %1246 = vmatmul.mubr.bf16.gmra.mxu0 %v1187
      %v1247 = vpop.f32.mrf.mxu0
      %v1248 = vadd.f32 0.0, %v1247
      %v1249 = vpop.f32.mrf.mxu0
      %v1250 = vpop.f32.mrf.mxu0
      %v1251 = vadd.f32 0.0, %v1250
      %v1252 = vpop.f32.mrf.mxu0
      %1253 = vmatprep.mubr.bf16.mxu0 0
      %1254 = vmatmul.mubr.bf16.gmra.mxu0 %v1190
      %v1255 = vpop.f32.mrf.mxu0
      %v1256 = vadd.f32 0.0, %v1255
      %v1257 = vpop.f32.mrf.mxu0
      %v1258 = vpop.f32.mrf.mxu0
      %v1259 = vadd.f32 0.0, %v1258
      %v1260 = vpop.f32.mrf.mxu0
      %1261 = vmatprep.mubr.bf16.mxu0 0
      %1262 = vmatmul.mubr.bf16.gmra.mxu0 %v1193
      %v1263 = vpop.f32.mrf.mxu0
      %v1264 = vadd.f32 0.0, %v1263
      %v1265 = vpop.f32.mrf.mxu0
      %v1266 = vpop.f32.mrf.mxu0
      %v1267 = vadd.f32 0.0, %v1266
      %v1268 = vpop.f32.mrf.mxu0
      %1269 = vmatprep.mubr.bf16.mxu0 0
      %1270 = vmatmul.mubr.bf16.gmra.mxu0 %v1196
      %v1271 = vpop.f32.mrf.mxu0
      %v1272 = vadd.f32 0.0, %v1271
      %v1273 = vpop.f32.mrf.mxu0
      %v1274 = vpop.f32.mrf.mxu0
      %v1275 = vadd.f32 0.0, %v1274
      %v1276 = vpop.f32.mrf.mxu0
      %1277 = vmatprep.mubr.bf16.mxu0 0
      %1278 = vmatmul.mubr.bf16.gmra.mxu0 %v1199
      %v1279 = vpop.f32.mrf.mxu0
      %v1280 = vadd.f32 0.0, %v1279
      %v1281 = vpop.f32.mrf.mxu0
      %v1282 = vpop.f32.mrf.mxu0
      %v1283 = vadd.f32 0.0, %v1282
      %v1284 = vpop.f32.mrf.mxu0
      %1285 = vmatprep.mubr.bf16.mxu0 0
      %1286 = vmatmul.mubr.bf16.gmra.mxu0 %v1202
      %v1287 = vpop.f32.mrf.mxu0
      %v1288 = vadd.f32 0.0, %v1287
      %v1289 = vpop.f32.mrf.mxu0
      %v1290 = vpop.f32.mrf.mxu0
      %v1291 = vadd.f32 0.0, %v1290
      %v1292 = vpop.f32.mrf.mxu0
      %1293 = vmatprep.mubr.bf16.mxu0 0
      %1294 = vmatmul.mubr.bf16.gmra.mxu0 %v1205
      %v1295 = vpop.f32.mrf.mxu0
      %v1296 = vadd.f32 0.0, %v1295
      %v1297 = vpop.f32.mrf.mxu0
      %v1298 = vpop.f32.mrf.mxu0
      %v1299 = vadd.f32 0.0, %v1298
      %v1300 = vpop.f32.mrf.mxu0
      %1301 = vmatprep.mubr.bf16.mxu0 0
      %1302 = vmatmul.mubr.bf16.gmra.mxu0 %v1208
      %v1303 = vpop.f32.mrf.mxu0
      %v1304 = vadd.f32 0.0, %v1303
      %v1305 = vpop.f32.mrf.mxu0
      %v1306 = vpop.f32.mrf.mxu0
      %v1307 = vadd.f32 0.0, %v1306
      %v1308 = vpop.f32.mrf.mxu0
      %1309 = vmatprep.mubr.bf16.mxu0 0
      %1310 = vmatmul.mubr.bf16.gmra.mxu0 %v1211
      %v1311 = vpop.f32.mrf.mxu0
      %v1312 = vadd.f32 0.0, %v1311
      %v1313 = vpop.f32.mrf.mxu0
      %v1314 = vpop.f32.mrf.mxu0
      %v1315 = vadd.f32 0.0, %v1314
      %v1316 = vpop.f32.mrf.mxu0
      %1317 = vdwg.mxu0
      %v1318 = vadd.f32 %v1139, %v1248
      %v1319 = vadd.f32 %v1140, %v1251
      %v1320 = vadd.f32 %v1141, %v1256
      %v1321 = vadd.f32 %v1142, %v1259
      %v1322 = vadd.f32 %v1143, %v1264
      %v1323 = vadd.f32 %v1144, %v1267
      %v1324 = vadd.f32 %v1145, %v1272
      %v1325 = vadd.f32 %v1146, %v1275
      %v1326 = vadd.f32 %v1147, %v1280
      %v1327 = vadd.f32 %v1148, %v1283
      %v1328 = vadd.f32 %v1149, %v1288
      %v1329 = vadd.f32 %v1150, %v1291
      %v1330 = vadd.f32 %v1151, %v1296
      %v1331 = vadd.f32 %v1152, %v1299
      %v1332 = vadd.f32 %v1153, %v1304
      %v1333 = vadd.f32 %v1154, %v1307
      %v1334 = vadd.f32 %v1155, %v1312
      %v1335 = vadd.f32 %v1156, %v1315
      %s1336 = scalar_lea.vmem %s1, 48
      %v1337 = vld [vmem:[%s1336] sm:$0xf]
      %v1338 = vld [vmem:[%s1336 + $0x4] sm:$0xf]
      %v1341 = vunpack.c.l.b16 %v221
      %v1342 = vunpack.c.l.b16 %v222
      %v1343 = vpack.c.b16 %v1341, %v806
      %v1344 = vpack.c.b16 %v1342, %v1342
      %v1345 = vrot.slane %v1343, 2
      %v1346 = vsel %vm1160, %v1176, %v1345
      %v1347 = vrot.slane %v1344, 2
      %v1348 = vsel %vm1160, %v1345, %v1347
      %v1351 = vunpack.c.l.b16 %v1337
      %v1352 = vunpack.c.l.b16 %v1338
      %v1353 = vpack.c.b16 %v1352, %v1351
      %v1356 = vsel %vm359, %v1346, 0
      %v1359 = vsel %vm359, %v1348, 0
      %1361 = vmatprep.subr.bf16.mxu0 0
      %1362 = vmatpush1.bf16.msra.mxu0 0
      %1363 = vmatprep.subr.bf16.mxu0 0
      %1364 = vmatpush1.bf16.msra.mxu0 0
      %1365 = vmatprep.subr.bf16.mxu0 0
      %1366 = vmatpush1.bf16.msra.mxu0 0
      %1367 = vmatprep.subr.bf16.mxu0 0
      %1368 = vmatpush1.bf16.msra.mxu0 0
      %1369 = vmatprep.subr.bf16.mxu0 0
      %1370 = vmatpush1.bf16.msra.mxu0 0
      %1371 = vmatprep.subr.bf16.mxu0 0
      %1372 = vmatpush1.bf16.msra.mxu0 0
      %1373 = vmatprep.subr.bf16.mxu0 0
      %1374 = vmatpush1.bf16.msra.mxu0 0
      %1375 = vmatprep.subr.bf16.mxu0 0
      %1376 = vmatpush1.bf16.msra.mxu0 %v1353
      %1377 = vmatprep.subr.bf16.mxu0 0
      %1378 = vmatpush2.bf16.msra.mxu0 0
      %1379 = vmatprep.subr.bf16.mxu0 0
      %1380 = vmatpush2.bf16.msra.mxu0 0
      %1381 = vmatprep.subr.bf16.mxu0 0
      %1382 = vmatpush2.bf16.msra.mxu0 0
      %1383 = vmatprep.subr.bf16.mxu0 0
      %1384 = vmatpush2.bf16.msra.mxu0 0
      %1385 = vmatprep.subr.bf16.mxu0 0
      %1386 = vmatpush2.bf16.msra.mxu0 0
      %1387 = vmatprep.subr.bf16.mxu0 0
      %1388 = vmatpush2.bf16.msra.mxu0 0
      %1389 = vmatprep.subr.bf16.mxu0 0
      %1390 = vmatpush2.bf16.msra.mxu0 0
      %1391 = vmatprep.subr.bf16.mxu0 0
      %1392 = vmatpush2.bf16.msra.mxu0 0
      %1393 = vmatprep.mubr.bf16.mxu0 0
      %1394 = vmatmul.mubr.bf16.gmra.mxu0 %v1190
      %v1395 = vpop.f32.mrf.mxu0
      %v1396 = vadd.f32 0.0, %v1395
      %v1397 = vpop.f32.mrf.mxu0
      %v1398 = vpop.f32.mrf.mxu0
      %v1399 = vadd.f32 0.0, %v1398
      %v1400 = vpop.f32.mrf.mxu0
      %1401 = vmatprep.mubr.bf16.mxu0 0
      %1402 = vmatmul.mubr.bf16.gmra.mxu0 %v1193
      %v1403 = vpop.f32.mrf.mxu0
      %v1404 = vadd.f32 0.0, %v1403
      %v1405 = vpop.f32.mrf.mxu0
      %v1406 = vpop.f32.mrf.mxu0
      %v1407 = vadd.f32 0.0, %v1406
      %v1408 = vpop.f32.mrf.mxu0
      %1409 = vmatprep.mubr.bf16.mxu0 0
      %1410 = vmatmul.mubr.bf16.gmra.mxu0 %v1196
      %v1411 = vpop.f32.mrf.mxu0
      %v1412 = vadd.f32 0.0, %v1411
      %v1413 = vpop.f32.mrf.mxu0
      %v1414 = vpop.f32.mrf.mxu0
      %v1415 = vadd.f32 0.0, %v1414
      %v1416 = vpop.f32.mrf.mxu0
      %1417 = vmatprep.mubr.bf16.mxu0 0
      %1418 = vmatmul.mubr.bf16.gmra.mxu0 %v1199
      %v1419 = vpop.f32.mrf.mxu0
      %v1420 = vadd.f32 0.0, %v1419
      %v1421 = vpop.f32.mrf.mxu0
      %v1422 = vpop.f32.mrf.mxu0
      %v1423 = vadd.f32 0.0, %v1422
      %v1424 = vpop.f32.mrf.mxu0
      %1425 = vmatprep.mubr.bf16.mxu0 0
      %1426 = vmatmul.mubr.bf16.gmra.mxu0 %v1202
      %v1427 = vpop.f32.mrf.mxu0
      %v1428 = vadd.f32 0.0, %v1427
      %v1429 = vpop.f32.mrf.mxu0
      %v1430 = vpop.f32.mrf.mxu0
      %v1431 = vadd.f32 0.0, %v1430
      %v1432 = vpop.f32.mrf.mxu0
      %1433 = vmatprep.mubr.bf16.mxu0 0
      %1434 = vmatmul.mubr.bf16.gmra.mxu0 %v1205
      %v1435 = vpop.f32.mrf.mxu0
      %v1436 = vadd.f32 0.0, %v1435
      %v1437 = vpop.f32.mrf.mxu0
      %v1438 = vpop.f32.mrf.mxu0
      %v1439 = vadd.f32 0.0, %v1438
      %v1440 = vpop.f32.mrf.mxu0
      %1441 = vmatprep.mubr.bf16.mxu0 0
      %1442 = vmatmul.mubr.bf16.gmra.mxu0 %v1208
      %v1443 = vpop.f32.mrf.mxu0
      %v1444 = vadd.f32 0.0, %v1443
      %v1445 = vpop.f32.mrf.mxu0
      %v1446 = vpop.f32.mrf.mxu0
      %v1447 = vadd.f32 0.0, %v1446
      %v1448 = vpop.f32.mrf.mxu0
      %1449 = vmatprep.mubr.bf16.mxu0 0
      %1450 = vmatmul.mubr.bf16.gmra.mxu0 %v1356
      %v1451 = vpop.f32.mrf.mxu0
      %v1452 = vadd.f32 0.0, %v1451
      %v1453 = vpop.f32.mrf.mxu0
      %v1454 = vpop.f32.mrf.mxu0
      %v1455 = vadd.f32 0.0, %v1454
      %v1456 = vpop.f32.mrf.mxu0
      %1457 = vmatprep.mubr.bf16.mxu0 0
      %1458 = vmatmul.mubr.bf16.gmra.mxu0 %v1359
      %v1459 = vpop.f32.mrf.mxu0
      %v1460 = vadd.f32 0.0, %v1459
      %v1461 = vpop.f32.mrf.mxu0
      %v1462 = vpop.f32.mrf.mxu0
      %v1463 = vadd.f32 0.0, %v1462
      %v1464 = vpop.f32.mrf.mxu0
      %1465 = vdwg.mxu0
      %v1466 = vadd.f32 %v1318, %v1396
      %v1467 = vadd.f32 %v1319, %v1399
      %v1468 = vadd.f32 %v1320, %v1404
      %v1469 = vadd.f32 %v1321, %v1407
      %v1470 = vadd.f32 %v1322, %v1412
      %v1471 = vadd.f32 %v1323, %v1415
      %v1472 = vadd.f32 %v1324, %v1420
      %v1473 = vadd.f32 %v1325, %v1423
      %v1474 = vadd.f32 %v1326, %v1428
      %v1475 = vadd.f32 %v1327, %v1431
      %v1476 = vadd.f32 %v1328, %v1436
      %v1477 = vadd.f32 %v1329, %v1439
      %v1478 = vadd.f32 %v1330, %v1444
      %v1479 = vadd.f32 %v1331, %v1447
      %v1480 = vadd.f32 %v1332, %v1452
      %v1481 = vadd.f32 %v1333, %v1455
      %v1482 = vadd.f32 %v1334, %v1460
      %v1483 = vadd.f32 %v1335, %v1463
      %s1484 = scalar_lea.vmem %s1, 56
      %v1485 = vld [vmem:[%s1484] sm:$0xf]
      %v1486 = vld [vmem:[%s1484 + $0x4] sm:$0xf]
      %vm1487 = vsmask.f32 5376
      %v1488 = vrot.slane %v297, 2
      %v1489 = vrot.slane %v293, 3
      %v1490 = vor.u32 %v1488, %v1489
      %v1491 = vrot.slane %v305, 2
      %v1492 = vrot.slane %v301, 3
      %v1493 = vor.u32 %v1491, %v1492
      %v1494 = vsel %vm1487, %v1490, %v1493
      %v1495 = vrot.slane %v313, 2
      %v1496 = vrot.slane %v309, 3
      %v1497 = vor.u32 %v1495, %v1496
      %v1498 = vsel %vm1487, %v1493, %v1497
      %v1499 = vrot.slane %v321, 2
      %v1500 = vrot.slane %v317, 3
      %v1501 = vor.u32 %v1499, %v1500
      %v1502 = vsel %vm1487, %v1497, %v1501
      %v1503 = vrot.slane %v329, 2
      %v1504 = vrot.slane %v325, 3
      %v1505 = vor.u32 %v1503, %v1504
      %v1506 = vsel %vm1487, %v1501, %v1505
      %v1507 = vrot.slane %v337, 2
      %v1508 = vrot.slane %v333, 3
      %v1509 = vor.u32 %v1507, %v1508
      %v1510 = vsel %vm1487, %v1505, %v1509
      %v1511 = vrot.slane %v345, 2
      %v1512 = vrot.slane %v341, 3
      %v1513 = vor.u32 %v1511, %v1512
      %v1514 = vsel %vm1487, %v1509, %v1513
      %v1515 = vrot.slane %v984, 2
      %v1516 = vrot.slane %v987, 3
      %v1517 = vor.u32 %v1515, %v1516
      %v1518 = vsel %vm1487, %v1513, %v1517
      %v1520 = vshrl.u32 %v1343, 16
      %v1522 = vrot.slane %v1520, 2
      %v1523 = vshll.u32 %v1343, 16
      %v1525 = vrot.slane %v1523, 3
      %v1526 = vor.u32 %v1522, %v1525
      %v1527 = vsel %vm1487, %v1517, %v1526
      %v1529 = vshrl.u32 %v1344, 16
      %v1531 = vrot.slane %v1529, 2
      %v1532 = vshll.u32 %v1344, 16
      %v1534 = vrot.slane %v1532, 3
      %v1535 = vor.u32 %v1531, %v1534
      %v1536 = vsel %vm1487, %v1526, %v1535
      %v1539 = vunpack.c.l.b16 %v1485
      %v1540 = vunpack.c.l.b16 %v1486
      %v1541 = vpack.c.b16 %v1540, %v1539
      %v1544 = vsel %vm359, %v1494, 0
      %v1547 = vsel %vm359, %v1498, 0
      %v1550 = vsel %vm359, %v1502, 0
      %v1553 = vsel %vm359, %v1506, 0
      %v1556 = vsel %vm359, %v1510, 0
      %v1559 = vsel %vm359, %v1514, 0
      %v1562 = vsel %vm359, %v1518, 0
      %v1565 = vsel %vm359, %v1527, 0
      %v1568 = vsel %vm359, %v1536, 0
      %1570 = vmatprep.subr.bf16.mxu0 0
      %1571 = vmatpush1.bf16.msra.mxu0 0
      %1572 = vmatprep.subr.bf16.mxu0 0
      %1573 = vmatpush1.bf16.msra.mxu0 0
      %1574 = vmatprep.subr.bf16.mxu0 0
      %1575 = vmatpush1.bf16.msra.mxu0 0
      %1576 = vmatprep.subr.bf16.mxu0 0
      %1577 = vmatpush1.bf16.msra.mxu0 0
      %1578 = vmatprep.subr.bf16.mxu0 0
      %1579 = vmatpush1.bf16.msra.mxu0 0
      %1580 = vmatprep.subr.bf16.mxu0 0
      %1581 = vmatpush1.bf16.msra.mxu0 0
      %1582 = vmatprep.subr.bf16.mxu0 0
      %1583 = vmatpush1.bf16.msra.mxu0 0
      %1584 = vmatprep.subr.bf16.mxu0 0
      %1585 = vmatpush1.bf16.msra.mxu0 %v1541
      %1586 = vmatprep.subr.bf16.mxu0 0
      %1587 = vmatpush2.bf16.msra.mxu0 0
      %1588 = vmatprep.subr.bf16.mxu0 0
      %1589 = vmatpush2.bf16.msra.mxu0 0
      %1590 = vmatprep.subr.bf16.mxu0 0
      %1591 = vmatpush2.bf16.msra.mxu0 0
      %1592 = vmatprep.subr.bf16.mxu0 0
      %1593 = vmatpush2.bf16.msra.mxu0 0
      %1594 = vmatprep.subr.bf16.mxu0 0
      %1595 = vmatpush2.bf16.msra.mxu0 0
      %1596 = vmatprep.subr.bf16.mxu0 0
      %1597 = vmatpush2.bf16.msra.mxu0 0
      %1598 = vmatprep.subr.bf16.mxu0 0
      %1599 = vmatpush2.bf16.msra.mxu0 0
      %1600 = vmatprep.subr.bf16.mxu0 0
      %1601 = vmatpush2.bf16.msra.mxu0 0
      %1602 = vmatprep.mubr.bf16.mxu0 0
      %1603 = vmatmul.mubr.bf16.gmra.mxu0 %v1544
      %v1604 = vpop.f32.mrf.mxu0
      %v1605 = vadd.f32 0.0, %v1604
      %v1606 = vpop.f32.mrf.mxu0
      %v1607 = vpop.f32.mrf.mxu0
      %v1608 = vadd.f32 0.0, %v1607
      %v1609 = vpop.f32.mrf.mxu0
      %1610 = vmatprep.mubr.bf16.mxu0 0
      %1611 = vmatmul.mubr.bf16.gmra.mxu0 %v1547
      %v1612 = vpop.f32.mrf.mxu0
      %v1613 = vadd.f32 0.0, %v1612
      %v1614 = vpop.f32.mrf.mxu0
      %v1615 = vpop.f32.mrf.mxu0
      %v1616 = vadd.f32 0.0, %v1615
      %v1617 = vpop.f32.mrf.mxu0
      %1618 = vmatprep.mubr.bf16.mxu0 0
      %1619 = vmatmul.mubr.bf16.gmra.mxu0 %v1550
      %v1620 = vpop.f32.mrf.mxu0
      %v1621 = vadd.f32 0.0, %v1620
      %v1622 = vpop.f32.mrf.mxu0
      %v1623 = vpop.f32.mrf.mxu0
      %v1624 = vadd.f32 0.0, %v1623
      %v1625 = vpop.f32.mrf.mxu0
      %1626 = vmatprep.mubr.bf16.mxu0 0
      %1627 = vmatmul.mubr.bf16.gmra.mxu0 %v1553
      %v1628 = vpop.f32.mrf.mxu0
      %v1629 = vadd.f32 0.0, %v1628
      %v1630 = vpop.f32.mrf.mxu0
      %v1631 = vpop.f32.mrf.mxu0
      %v1632 = vadd.f32 0.0, %v1631
      %v1633 = vpop.f32.mrf.mxu0
      %1634 = vmatprep.mubr.bf16.mxu0 0
      %1635 = vmatmul.mubr.bf16.gmra.mxu0 %v1556
      %v1636 = vpop.f32.mrf.mxu0
      %v1637 = vadd.f32 0.0, %v1636
      %v1638 = vpop.f32.mrf.mxu0
      %v1639 = vpop.f32.mrf.mxu0
      %v1640 = vadd.f32 0.0, %v1639
      %v1641 = vpop.f32.mrf.mxu0
      %1642 = vmatprep.mubr.bf16.mxu0 0
      %1643 = vmatmul.mubr.bf16.gmra.mxu0 %v1559
      %v1644 = vpop.f32.mrf.mxu0
      %v1645 = vadd.f32 0.0, %v1644
      %v1646 = vpop.f32.mrf.mxu0
      %v1647 = vpop.f32.mrf.mxu0
      %v1648 = vadd.f32 0.0, %v1647
      %v1649 = vpop.f32.mrf.mxu0
      %1650 = vmatprep.mubr.bf16.mxu0 0
      %1651 = vmatmul.mubr.bf16.gmra.mxu0 %v1562
      %v1652 = vpop.f32.mrf.mxu0
      %v1653 = vadd.f32 0.0, %v1652
      %v1654 = vpop.f32.mrf.mxu0
      %v1655 = vpop.f32.mrf.mxu0
      %v1656 = vadd.f32 0.0, %v1655
      %v1657 = vpop.f32.mrf.mxu0
      %1658 = vmatprep.mubr.bf16.mxu0 0
      %1659 = vmatmul.mubr.bf16.gmra.mxu0 %v1565
      %v1660 = vpop.f32.mrf.mxu0
      %v1661 = vadd.f32 0.0, %v1660
      %v1662 = vpop.f32.mrf.mxu0
      %v1663 = vpop.f32.mrf.mxu0
      %v1664 = vadd.f32 0.0, %v1663
      %v1665 = vpop.f32.mrf.mxu0
      %1666 = vmatprep.mubr.bf16.mxu0 0
      %1667 = vmatmul.mubr.bf16.gmra.mxu0 %v1568
      %v1668 = vpop.f32.mrf.mxu0
      %v1669 = vadd.f32 0.0, %v1668
      %v1670 = vpop.f32.mrf.mxu0
      %v1671 = vpop.f32.mrf.mxu0
      %v1672 = vadd.f32 0.0, %v1671
      %v1673 = vpop.f32.mrf.mxu0
      %1674 = vdwg.mxu0
      %v1675 = vadd.f32 %v1466, %v1605
      %v1676 = vadd.f32 %v1467, %v1608
      %v1677 = vadd.f32 %v1468, %v1613
      %v1678 = vadd.f32 %v1469, %v1616
      %v1679 = vadd.f32 %v1470, %v1621
      %v1680 = vadd.f32 %v1471, %v1624
      %v1681 = vadd.f32 %v1472, %v1629
      %v1682 = vadd.f32 %v1473, %v1632
      %v1683 = vadd.f32 %v1474, %v1637
      %v1684 = vadd.f32 %v1475, %v1640
      %v1685 = vadd.f32 %v1476, %v1645
      %v1686 = vadd.f32 %v1477, %v1648
      %v1687 = vadd.f32 %v1478, %v1653
      %v1688 = vadd.f32 %v1479, %v1656
      %v1689 = vadd.f32 %v1480, %v1661
      %v1690 = vadd.f32 %v1481, %v1664
      %v1691 = vadd.f32 %v1482, %v1669
      %v1692 = vadd.f32 %v1483, %v1672
      %s1693 = scalar_lea.vmem %s1, 64
      %v1694 = vld [vmem:[%s1693] sm:$0xf]
      %v1695 = vld [vmem:[%s1693 + $0x4] sm:$0xf]
      %vm1696 = vcmask 1044480
      %v1697 = vrot.slane %v268, 3
      %v1698 = vrot.slane %v269, 3
      %v1699 = vsel %vm1696, %v1697, %v1698
      %v1700 = vrot.slane %v270, 3
      %v1701 = vsel %vm1696, %v1698, %v1700
      %v1702 = vrot.slane %v271, 3
      %v1703 = vsel %vm1696, %v1700, %v1702
      %v1704 = vrot.slane %v272, 3
      %v1705 = vsel %vm1696, %v1702, %v1704
      %v1706 = vrot.slane %v273, 3
      %v1707 = vsel %vm1696, %v1704, %v1706
      %v1708 = vrot.slane %v274, 3
      %v1709 = vsel %vm1696, %v1706, %v1708
      %v1710 = vrot.slane %v807, 3
      %v1711 = vsel %vm1696, %v1708, %v1710
      %v1712 = vrot.slane %v1343, 3
      %v1713 = vsel %vm1696, %v1710, %v1712
      %v1714 = vrot.slane %v1344, 3
      %v1715 = vsel %vm1696, %v1712, %v1714
      %v1718 = vunpack.c.l.b16 %v1694
      %v1719 = vunpack.c.l.b16 %v1695
      %v1720 = vpack.c.b16 %v1719, %v1718
      %v1723 = vsel %vm359, %v1699, 0
      %v1726 = vsel %vm359, %v1701, 0
      %v1729 = vsel %vm359, %v1703, 0
      %v1732 = vsel %vm359, %v1705, 0
      %v1735 = vsel %vm359, %v1707, 0
      %v1738 = vsel %vm359, %v1709, 0
      %v1741 = vsel %vm359, %v1711, 0
      %v1744 = vsel %vm359, %v1713, 0
      %v1747 = vsel %vm359, %v1715, 0
      %1749 = vmatprep.subr.bf16.mxu0 0
      %1750 = vmatpush1.bf16.msra.mxu0 0
      %1751 = vmatprep.subr.bf16.mxu0 0
      %1752 = vmatpush1.bf16.msra.mxu0 0
      %1753 = vmatprep.subr.bf16.mxu0 0
      %1754 = vmatpush1.bf16.msra.mxu0 0
      %1755 = vmatprep.subr.bf16.mxu0 0
      %1756 = vmatpush1.bf16.msra.mxu0 0
      %1757 = vmatprep.subr.bf16.mxu0 0
      %1758 = vmatpush1.bf16.msra.mxu0 0
      %1759 = vmatprep.subr.bf16.mxu0 0
      %1760 = vmatpush1.bf16.msra.mxu0 0
      %1761 = vmatprep.subr.bf16.mxu0 0
      %1762 = vmatpush1.bf16.msra.mxu0 0
      %1763 = vmatprep.subr.bf16.mxu0 0
      %1764 = vmatpush1.bf16.msra.mxu0 %v1720
      %1765 = vmatprep.subr.bf16.mxu0 0
      %1766 = vmatpush2.bf16.msra.mxu0 0
      %1767 = vmatprep.subr.bf16.mxu0 0
      %1768 = vmatpush2.bf16.msra.mxu0 0
      %1769 = vmatprep.subr.bf16.mxu0 0
      %1770 = vmatpush2.bf16.msra.mxu0 0
      %1771 = vmatprep.subr.bf16.mxu0 0
      %1772 = vmatpush2.bf16.msra.mxu0 0
      %1773 = vmatprep.subr.bf16.mxu0 0
      %1774 = vmatpush2.bf16.msra.mxu0 0
      %1775 = vmatprep.subr.bf16.mxu0 0
      %1776 = vmatpush2.bf16.msra.mxu0 0
      %1777 = vmatprep.subr.bf16.mxu0 0
      %1778 = vmatpush2.bf16.msra.mxu0 0
      %1779 = vmatprep.subr.bf16.mxu0 0
      %1780 = vmatpush2.bf16.msra.mxu0 0
      %1781 = vmatprep.mubr.bf16.mxu0 0
      %1782 = vmatmul.mubr.bf16.gmra.mxu0 %v1723
      %v1783 = vpop.f32.mrf.mxu0
      %v1784 = vadd.f32 0.0, %v1783
      %v1785 = vpop.f32.mrf.mxu0
      %v1786 = vpop.f32.mrf.mxu0
      %v1787 = vadd.f32 0.0, %v1786
      %v1788 = vpop.f32.mrf.mxu0
      %1789 = vmatprep.mubr.bf16.mxu0 0
      %1790 = vmatmul.mubr.bf16.gmra.mxu0 %v1726
      %v1791 = vpop.f32.mrf.mxu0
      %v1792 = vadd.f32 0.0, %v1791
      %v1793 = vpop.f32.mrf.mxu0
      %v1794 = vpop.f32.mrf.mxu0
      %v1795 = vadd.f32 0.0, %v1794
      %v1796 = vpop.f32.mrf.mxu0
      %1797 = vmatprep.mubr.bf16.mxu0 0
      %1798 = vmatmul.mubr.bf16.gmra.mxu0 %v1729
      %v1799 = vpop.f32.mrf.mxu0
      %v1800 = vadd.f32 0.0, %v1799
      %v1801 = vpop.f32.mrf.mxu0
      %v1802 = vpop.f32.mrf.mxu0
      %v1803 = vadd.f32 0.0, %v1802
      %v1804 = vpop.f32.mrf.mxu0
      %1805 = vmatprep.mubr.bf16.mxu0 0
      %1806 = vmatmul.mubr.bf16.gmra.mxu0 %v1732
      %v1807 = vpop.f32.mrf.mxu0
      %v1808 = vadd.f32 0.0, %v1807
      %v1809 = vpop.f32.mrf.mxu0
      %v1810 = vpop.f32.mrf.mxu0
      %v1811 = vadd.f32 0.0, %v1810
      %v1812 = vpop.f32.mrf.mxu0
      %1813 = vmatprep.mubr.bf16.mxu0 0
      %1814 = vmatmul.mubr.bf16.gmra.mxu0 %v1735
      %v1815 = vpop.f32.mrf.mxu0
      %v1816 = vadd.f32 0.0, %v1815
      %v1817 = vpop.f32.mrf.mxu0
      %v1818 = vpop.f32.mrf.mxu0
      %v1819 = vadd.f32 0.0, %v1818
      %v1820 = vpop.f32.mrf.mxu0
      %1821 = vmatprep.mubr.bf16.mxu0 0
      %1822 = vmatmul.mubr.bf16.gmra.mxu0 %v1738
      %v1823 = vpop.f32.mrf.mxu0
      %v1824 = vadd.f32 0.0, %v1823
      %v1825 = vpop.f32.mrf.mxu0
      %v1826 = vpop.f32.mrf.mxu0
      %v1827 = vadd.f32 0.0, %v1826
      %v1828 = vpop.f32.mrf.mxu0
      %1829 = vmatprep.mubr.bf16.mxu0 0
      %1830 = vmatmul.mubr.bf16.gmra.mxu0 %v1741
      %v1831 = vpop.f32.mrf.mxu0
      %v1832 = vadd.f32 0.0, %v1831
      %v1833 = vpop.f32.mrf.mxu0
      %v1834 = vpop.f32.mrf.mxu0
      %v1835 = vadd.f32 0.0, %v1834
      %v1836 = vpop.f32.mrf.mxu0
      %1837 = vmatprep.mubr.bf16.mxu0 0
      %1838 = vmatmul.mubr.bf16.gmra.mxu0 %v1744
      %v1839 = vpop.f32.mrf.mxu0
      %v1840 = vadd.f32 0.0, %v1839
      %v1841 = vpop.f32.mrf.mxu0
      %v1842 = vpop.f32.mrf.mxu0
      %v1843 = vadd.f32 0.0, %v1842
      %v1844 = vpop.f32.mrf.mxu0
      %1845 = vmatprep.mubr.bf16.mxu0 0
      %1846 = vmatmul.mubr.bf16.gmra.mxu0 %v1747
      %v1847 = vpop.f32.mrf.mxu0
      %v1848 = vadd.f32 0.0, %v1847
      %v1849 = vpop.f32.mrf.mxu0
      %v1850 = vpop.f32.mrf.mxu0
      %v1851 = vadd.f32 0.0, %v1850
      %v1852 = vpop.f32.mrf.mxu0
      %1853 = vdwg.mxu0
      %v1854 = vadd.f32 %v1675, %v1784
      %v1855 = vadd.f32 %v1676, %v1787
      %v1856 = vadd.f32 %v1677, %v1792
      %v1857 = vadd.f32 %v1678, %v1795
      %v1858 = vadd.f32 %v1679, %v1800
      %v1859 = vadd.f32 %v1680, %v1803
      %v1860 = vadd.f32 %v1681, %v1808
      %v1861 = vadd.f32 %v1682, %v1811
      %v1862 = vadd.f32 %v1683, %v1816
      %v1863 = vadd.f32 %v1684, %v1819
      %v1864 = vadd.f32 %v1685, %v1824
      %v1865 = vadd.f32 %v1686, %v1827
      %v1866 = vadd.f32 %v1687, %v1832
      %v1867 = vadd.f32 %v1688, %v1835
      %v1868 = vadd.f32 %v1689, %v1840
      %v1869 = vadd.f32 %v1690, %v1843
      %v1870 = vadd.f32 %v1691, %v1848
      %v1871 = vadd.f32 %v1692, %v1851
      %v1872 = vld [vmem:[%s2] sm:$0x1]
      %v1874 = vlaneseq
      %v1875 = vshrl.u32 %v1874, 7
      %v1876 = vsub.s32 0, %v1875
      %v1877 = vrot.slane %v1872, %v1876
      %v1879 = vadd.f32 %v1854, %v1877
      %v1880 = vadd.f32 %v1855, %v1877
      %v1881 = vadd.f32 %v1856, %v1877
      %v1882 = vadd.f32 %v1857, %v1877
      %v1883 = vadd.f32 %v1858, %v1877
      %v1884 = vadd.f32 %v1859, %v1877
      %v1885 = vadd.f32 %v1860, %v1877
      %v1886 = vadd.f32 %v1861, %v1877
      %v1887 = vadd.f32 %v1862, %v1877
      %v1888 = vadd.f32 %v1863, %v1877
      %v1889 = vadd.f32 %v1864, %v1877
      %v1890 = vadd.f32 %v1865, %v1877
      %v1891 = vadd.f32 %v1866, %v1877
      %v1892 = vadd.f32 %v1867, %v1877
      %v1893 = vadd.f32 %v1868, %v1877
      %v1894 = vadd.f32 %v1869, %v1877
      %v1895 = vadd.f32 %v1870, %v1877
      %v1896 = vadd.f32 %v1871, %v1877
      %v1897 = vmax.f32 %v1879, 0.0
      %v1898 = vmax.f32 %v1880, 0.0
      %v1899 = vmax.f32 %v1881, 0.0
      %v1900 = vmax.f32 %v1882, 0.0
      %v1901 = vmax.f32 %v1883, 0.0
      %v1902 = vmax.f32 %v1884, 0.0
      %v1903 = vmax.f32 %v1885, 0.0
      %v1904 = vmax.f32 %v1886, 0.0
      %v1905 = vmax.f32 %v1887, 0.0
      %v1906 = vmax.f32 %v1888, 0.0
      %v1907 = vmax.f32 %v1889, 0.0
      %v1908 = vmax.f32 %v1890, 0.0
      %v1909 = vmax.f32 %v1891, 0.0
      %v1910 = vmax.f32 %v1892, 0.0
      %v1911 = vmax.f32 %v1893, 0.0
      %v1912 = vmax.f32 %v1894, 0.0
      %v1913 = vmax.f32 %v1895, 0.0
      %v1914 = vmax.f32 %v1896, 0.0
      %1915 = vst [vmem:[%s192] sm:$0xff] %v1897
      %1916 = vst [vmem:[%s192 + $0x8] sm:$0xff] %v1898
      %1917 = vst [vmem:[%s192 + $0x10] sm:$0xff] %v1899
      %1918 = vst [vmem:[%s192 + $0x18] sm:$0xff] %v1900
      %1919 = vst [vmem:[%s192 + $0x20] sm:$0xff] %v1901
      %1920 = vst [vmem:[%s192 + $0x28] sm:$0xff] %v1902
      %1921 = vst [vmem:[%s192 + $0x30] sm:$0xff] %v1903
      %1922 = vst [vmem:[%s192 + $0x38] sm:$0xff] %v1904
      %1923 = vst [vmem:[%s192 + $0x40] sm:$0xff] %v1905
      %1924 = vst [vmem:[%s192 + $0x48] sm:$0xff] %v1906
      %1925 = vst [vmem:[%s192 + $0x50] sm:$0xff] %v1907
      %1926 = vst [vmem:[%s192 + $0x58] sm:$0xff] %v1908
      %1927 = vst [vmem:[%s192 + $0x60] sm:$0xff] %v1909
      %1928 = vst [vmem:[%s192 + $0x68] sm:$0xff] %v1910
      %1929 = vst [vmem:[%s192 + $0x70] sm:$0xff] %v1911
      %1930 = vst [vmem:[%s192 + $0x78] sm:$0xff] %v1912
      %1931 = vst [vmem:[%s192 + $0x80] sm:$0xff] %v1913
      %1932 = vst [vmem:[%s192 + $0x88] sm:$0xff] %v1914
      %s1933 = smul.u32 18, %s19
      %p1934 = scmp.lt.s32.totalorder %s18, 1
      %s1935 = scalar_select %p1934, %s18, 1
      %p1936 = scmp.lt.s32.totalorder %s1933, 35
      %s1937 = scalar_select %p1936, %s1933, 35
      %s1938 = smul.addr %s1935, 36
      %s1939 = sadd.s32 %s1937, %s1938
      %s1940 = smul.addr %s1939, 8
      %s1941 = scalar_lea.vmem %s3, %s1940
      // Predicated region
      $region33: #{_unnamed_function_.2} parent=31 // pred_check
        %p1942 = pneg %p114
      $region34: #{_unnamed_function_.2} parent=31 // pred_check_branch
        %1944 = sbr.rel (%p1942) target = $region36
      $region35: #{_unnamed_function_.2} parent=31 // pred_region
        %s1945 = smul.u32 18, %s19
      $region36: #{_unnamed_function_.2} parent=31 // pred_fallthru
        _
    $region32: #{_unnamed_function_.2} parent=5 // pred_fallthru
      _
    %p1946 = scmp.le.s32.totalorder 2, %s9
    // Predicated region
    $region37: #{_unnamed_function_.2} parent=5 // pred_check
      %p1947 = pneg %p1946
    $region38: #{_unnamed_function_.2} parent=5 // pred_check_branch
      %1949 = sbr.rel (%p1947) target = $region40
    $region39: #{_unnamed_function_.2} parent=5 // pred_region
      %s1950 = ssub.s32 %s9, 2
      // Predicated region
      $region41: #{_unnamed_function_.2} parent=39 // pred_check
        %p1951 = pneg %p120
      $region42: #{_unnamed_function_.2} parent=39 // pred_check_branch
        %1953 = sbr.rel (%p1951) target = $region44
      $region43: #{_unnamed_function_.2} parent=39 // pred_region
        %s1954 = smul.u32 18, %s21
        %p1955 = scmp.lt.s32.totalorder %s20, 1
        %s1956 = scalar_select %p1955, %s20, 1
        %p1957 = scmp.lt.s32.totalorder %s1954, 35
        %s1958 = scalar_select %p1957, %s1954, 35
        %s1959 = smul.addr %s1956, 36
        %s1960 = sadd.s32 %s1958, %s1959
        %s1961 = smul.addr %s1960, 8
        %s1962 = scalar_lea.vmem %s3, %s1961
      $region44: #{_unnamed_function_.2} parent=39 // pred_fallthru
        _
    $region40: #{_unnamed_function_.2} parent=5 // pred_fallthru
      _
  $region6: #{_unnamed_function_.2} parent=0 // loop_footer
    %s13 = sadd.s32 1, %s9
  $region7: #{_unnamed_function_.2} parent=0 // loop_footer_branch
    %8 = sbr.rel target = $region3
  $region8: #{_unnamed_function_.2} parent=0 // loop_exit
    _

// kernel: _unnamed_function_.3
$region0: #{_unnamed_function_.3}
  #allocation0 [shape = 'u32[]', space=smem, size = 0x4, offset = 0x4, fixed_abs, tag = 'smem constant byte address 0x4 - core index']
  #allocation1 [shape = 'u32[144,128]{1,0:T(1,128)}', space=vmem, size = 0x12000, scoped, tag = 'internal scratch']
  %s0 = inlined_call_operand.vmem [shape: bf16[2,342,16], index: 0, kind: input, shape index: {}]
  %s1 = inlined_call_operand.vmem [shape: bf16[9,16,128], index: 1, kind: input, shape index: {}]
  %s2 = inlined_call_operand.vmem [shape: f32[1,128], index: 2, kind: input, shape index: {}]
  %s3 = inlined_call_operand.vmem [shape: f32[2,288,128], index: 3, kind: input, shape index: {}]
  %s4 = inlined_call_operand.vmem [shape: f32[2,288,128], index: 4, kind: output, shape index: {}]
  %s5 = sld [smem:[#allocation0]]
  $region49: #{_unnamed_function_.3} parent=0
    _
  %s7 = ssub.s32 1, %s5
  %s8 = scalar_select 0, %s7, %s5
  loop: start=0, step=1, limit=6
  $region2: #{_unnamed_function_.3} parent=0 // loop_pre_header
    _
  $region3: #{_unnamed_function_.3} parent=0 // loop_header
    %s10 = sphi 0, %s14
    %p11 = scmp.ge.s32.totalorder %s10, 6
    %s17 = sphi 0, %s29
    %s18 = sphi 0, %s25
    %s19 = sphi 0, %s17
    %s20 = sphi 0, %s18
    %s21 = sphi 0, %s19
    %s22 = sphi 0, %s20
    %s32 = sphi 0, %s34
    %s35 = sphi 0, %s32
    %s36 = sphi 0, %s35
    %s52 = sphi 0, %s36
    %s56 = sphi 0, %s56
    %s58 = sphi 0, %s56
    %s59 = sphi 0, %s58
    %s73 = sphi 0, %s59
    %s77 = sphi 0, %s77
    %s79 = sphi 0, %s77
    %s80 = sphi 0, %s79
    %s94 = sphi 0, %s80
    %s102 = sphi 0, %s104
    %s105 = sphi 0, %s102
    %s106 = sphi 0, %s105
    %s122 = sphi 0, %s106
    %s130 = sphi 0, %s132
    %s133 = sphi 0, %s130
    %s134 = sphi 0, %s133
    %s150 = sphi 0, %s134
  $region4: #{_unnamed_function_.3} parent=0 // loop_header_branch
    %13 = sbr.rel (%p11) target = $region8
  $region5: #{_unnamed_function_.3} parent=0 // loop_body
    %s15 = ssub.s32 %s10, 1
    %s16 = ssub.s32 %s10, 2
    %s23 = sadd.s32 1, %s18
    %p24 = scmp.ge.s32.totalorder %s23, 2
    %s25 = scalar_select %p24, 0, %s23
    %s26 = sadd.s32 1, %s17
    %s27 = scalar_select %p24, %s26, %s17
    %p28 = scmp.ge.s32.totalorder %s27, 2
    %s29 = scalar_select %p28, 0, %s27
    %s30 = ssub.s32 %s17, %s29
    %p31 = scmp.eq.s32.totalorder %s30, 0
    %s33 = sadd.s32 %s32, 1
    %s34 = scalar_select %p31, %s32, %s33
    %p37 = pneg %p31
    %p38 = scmp.eq.s32.totalorder %s10, 3
    %p39 = por %p37, %p38
    %p40 = scmp.ne.s32.totalorder %s32, %s35
    %p41 = scmp.eq.s32.totalorder %s10, 0
    %p42 = por %p40, %p41
    %p43 = scmp.ne.s32.totalorder %s32, %s35
    %p44 = scmp.eq.s32.totalorder %s15, 3
    %p45 = por %p43, %p44
    %p46 = scmp.ne.s32.totalorder %s35, %s36
    %p47 = scmp.eq.s32.totalorder %s15, 0
    %p48 = por %p46, %p47
    %p49 = scmp.ne.s32.totalorder %s35, %s36
    %p50 = scmp.eq.s32.totalorder %s16, 3
    %p51 = por %p49, %p50
    %p53 = scmp.ne.s32.totalorder %s36, %s52
    %p54 = scmp.eq.s32.totalorder %s16, 0
    %p55 = por %p53, %p54
    %s57 = sadd.s32 %s56, 1
    %p60 = scmp.eq.s32.totalorder %s10, 3
    %p61 = scmp.ne.s32.totalorder %s56, %s58
    %p62 = scmp.eq.s32.totalorder %s10, 0
    %p63 = por %p61, %p62
    %p64 = scmp.ne.s32.totalorder %s56, %s58
    %p65 = scmp.eq.s32.totalorder %s15, 3
    %p66 = por %p64, %p65
    %p67 = scmp.ne.s32.totalorder %s58, %s59
    %p68 = scmp.eq.s32.totalorder %s15, 0
    %p69 = por %p67, %p68
    %p70 = scmp.ne.s32.totalorder %s58, %s59
    %p71 = scmp.eq.s32.totalorder %s16, 3
    %p72 = por %p70, %p71
    %p74 = scmp.ne.s32.totalorder %s59, %s73
    %p75 = scmp.eq.s32.totalorder %s16, 0
    %p76 = por %p74, %p75
    %s78 = sadd.s32 %s77, 1
    %p81 = scmp.eq.s32.totalorder %s10, 3
    %p82 = scmp.ne.s32.totalorder %s77, %s79
    %p83 = scmp.eq.s32.totalorder %s10, 0
    %p84 = por %p82, %p83
    %p85 = scmp.ne.s32.totalorder %s77, %s79
    %p86 = scmp.eq.s32.totalorder %s15, 3
    %p87 = por %p85, %p86
    %p88 = scmp.ne.s32.totalorder %s79, %s80
    %p89 = scmp.eq.s32.totalorder %s15, 0
    %p90 = por %p88, %p89
    %p91 = scmp.ne.s32.totalorder %s79, %s80
    %p92 = scmp.eq.s32.totalorder %s16, 3
    %p93 = por %p91, %p92
    %p95 = scmp.ne.s32.totalorder %s80, %s94
    %p96 = scmp.eq.s32.totalorder %s16, 0
    %p97 = por %p95, %p96
    %s98 = ssub.s32 %s17, %s29
    %s99 = ssub.s32 %s18, %s25
    %s100 = sor.u32 %s98, %s99
    %p101 = scmp.eq.s32.totalorder %s100, 0
    %s103 = sadd.s32 %s102, 1
    %s104 = scalar_select %p101, %s102, %s103
    %p107 = pneg %p101
    %p108 = scmp.eq.s32.totalorder %s10, 3
    %p109 = por %p107, %p108
    %p110 = scmp.ne.s32.totalorder %s102, %s105
    %p111 = scmp.eq.s32.totalorder %s10, 0
    %p112 = por %p110, %p111
    %p113 = scmp.ne.s32.totalorder %s102, %s105
    %p114 = scmp.eq.s32.totalorder %s15, 3
    %p115 = por %p113, %p114
    %p116 = scmp.ne.s32.totalorder %s105, %s106
    %p117 = scmp.eq.s32.totalorder %s15, 0
    %p118 = por %p116, %p117
    %p119 = scmp.ne.s32.totalorder %s105, %s106
    %p120 = scmp.eq.s32.totalorder %s16, 3
    %p121 = por %p119, %p120
    %p123 = scmp.ne.s32.totalorder %s106, %s122
    %p124 = scmp.eq.s32.totalorder %s16, 0
    %p125 = por %p123, %p124
    %s126 = ssub.s32 %s17, %s29
    %s127 = ssub.s32 %s18, %s25
    %s128 = sor.u32 %s126, %s127
    %p129 = scmp.eq.s32.totalorder %s128, 0
    %s131 = sadd.s32 %s130, 1
    %s132 = scalar_select %p129, %s130, %s131
    %p135 = pneg %p129
    %p136 = scmp.eq.s32.totalorder %s10, 3
    %p137 = por %p135, %p136
    %p138 = scmp.ne.s32.totalorder %s130, %s133
    %p139 = scmp.eq.s32.totalorder %s10, 0
    %p140 = por %p138, %p139
    %p141 = scmp.ne.s32.totalorder %s130, %s133
    %p142 = scmp.eq.s32.totalorder %s15, 3
    %p143 = por %p141, %p142
    %p144 = scmp.ne.s32.totalorder %s133, %s134
    %p145 = scmp.eq.s32.totalorder %s15, 0
    %p146 = por %p144, %p145
    %p147 = scmp.ne.s32.totalorder %s133, %s134
    %p148 = scmp.eq.s32.totalorder %s16, 3
    %p149 = por %p147, %p148
    %p151 = scmp.ne.s32.totalorder %s134, %s150
    %p152 = scmp.eq.s32.totalorder %s16, 0
    %p153 = por %p151, %p152
    %p154 = scmp.le.s32.totalorder 1, %s10
    %p155 = scmp.lt.s32.totalorder %s10, 5
    %p156 = pnand %p154, %p155
    %p157 = pneg %p156
    // Predicated region
    $region9: #{_unnamed_function_.3} parent=5 // pred_check
      _
    $region10: #{_unnamed_function_.3} parent=5 // pred_check_branch
      %159 = sbr.rel (%p156) target = $region12
    $region11: #{_unnamed_function_.3} parent=5 // pred_region
      %s160 = ssub.s32 %s10, 1
      // Predicated region
      $region13: #{_unnamed_function_.3} parent=11 // pred_check
        %p161 = pneg %p69
      $region14: #{_unnamed_function_.3} parent=11 // pred_check_branch
        %163 = sbr.rel (%p161) target = $region16
      $region15: #{_unnamed_function_.3} parent=11 // pred_region
        _
      $region16: #{_unnamed_function_.3} parent=11 // pred_fallthru
        _
      // Predicated region
      $region17: #{_unnamed_function_.3} parent=11 // pred_check
        %p164 = pneg %p90
      $region18: #{_unnamed_function_.3} parent=11 // pred_check_branch
        %166 = sbr.rel (%p164) target = $region20
      $region19: #{_unnamed_function_.3} parent=11 // pred_region
        _
      $region20: #{_unnamed_function_.3} parent=11 // pred_fallthru
        _
    $region12: #{_unnamed_function_.3} parent=5 // pred_fallthru
      _
    %p167 = scmp.lt.s32.totalorder %s10, 4
    // Predicated region
    $region21: #{_unnamed_function_.3} parent=5 // pred_check
      %p168 = pneg %p167
    $region22: #{_unnamed_function_.3} parent=5 // pred_check_branch
      %170 = sbr.rel (%p168) target = $region24
    $region23: #{_unnamed_function_.3} parent=5 // pred_region
      // Predicated region
      $region25: #{_unnamed_function_.3} parent=23 // pred_check
        %p171 = pneg %p42
      $region26: #{_unnamed_function_.3} parent=23 // pred_check_branch
        %173 = sbr.rel (%p171) target = $region28
      $region27: #{_unnamed_function_.3} parent=23 // pred_region
        %p174 = scmp.lt.s32.totalorder %s17, 1
        %s175 = scalar_select %p174, %s17, 1
        %s176 = smul.addr %s175, 43
        %s177 = smul.addr %s176, 4
        %s178 = scalar_lea.vmem %s0, %s177
      $region28: #{_unnamed_function_.3} parent=23 // pred_fallthru
        _
      // Predicated region
      $region29: #{_unnamed_function_.3} parent=23 // pred_check
        %p179 = pneg %p112
      $region30: #{_unnamed_function_.3} parent=23 // pred_check_branch
        %181 = sbr.rel (%p179) target = $region32
      $region31: #{_unnamed_function_.3} parent=23 // pred_region
        %s182 = smul.u32 18, %s18
        %p183 = scmp.lt.s32.totalorder %s17, 1
        %s184 = scalar_select %p183, %s17, 1
        %p185 = scmp.lt.s32.totalorder %s182, 35
        %s186 = scalar_select %p185, %s182, 35
        %s187 = smul.addr %s184, 36
        %s188 = sadd.s32 %s186, %s187
        %s189 = smul.addr %s188, 8
        %s190 = scalar_lea.vmem %s3, %s189
        %s191 = smul.u32 18, %s18
      $region32: #{_unnamed_function_.3} parent=23 // pred_fallthru
        _
    $region24: #{_unnamed_function_.3} parent=5 // pred_fallthru
      _
    %p192 = scmp.le.s32.totalorder 1, %s10
    %p193 = scmp.lt.s32.totalorder %s10, 5
    %p194 = pnand %p192, %p193
    %p195 = pneg %p194
    // Predicated region
    $region33: #{_unnamed_function_.3} parent=5 // pred_check
      _
    $region34: #{_unnamed_function_.3} parent=5 // pred_check_branch
      %197 = sbr.rel (%p194) target = $region36
    $region35: #{_unnamed_function_.3} parent=5 // pred_region
      %s198 = ssub.s32 %s10, 1
      %p199 = scmp.lt.s32.totalorder %s19, 1
      %s200 = scalar_select %p199, %s19, 1
      %s201 = smul.addr %s200, 43
      %s202 = smul.addr %s201, 4
      %s203 = scalar_lea.vmem %s0, %s202
      %p204 = pneg %p48
      %p205 = pneg %p45
      %p206 = pneg %p69
      %p207 = pneg %p66
      %p208 = pneg %p90
      %p209 = pneg %p87
      %s210 = smul.u32 18, %s20
      %p211 = scmp.lt.s32.totalorder %s19, 1
      %s212 = scalar_select %p211, %s19, 1
      %p213 = scmp.lt.s32.totalorder %s210, 35
      %s214 = scalar_select %p213, %s210, 35
      %s215 = smul.addr %s212, 36
      %s216 = sadd.s32 %s214, %s215
      %s217 = smul.addr %s216, 8
      %s218 = scalar_lea.vmem %s3, %s217
      %p219 = pneg %p118
      %p220 = pneg %p115
      %p221 = pneg %p146
      %p222 = pneg %p143
      %s223 = smul.u32 18, %s20
      %p224 = scmp.lt.s32.totalorder %s19, 1
      %s225 = scalar_select %p224, %s19, 1
      %p226 = scmp.lt.s32.totalorder %s223, 35
      %s227 = scalar_select %p226, %s223, 35
      %s228 = smul.addr %s225, 36
      %s229 = sadd.s32 %s227, %s228
      %s230 = smul.addr %s229, 8
      %s231 = scalar_lea.vmem %s4, %s230
      %p232 = scmp.lt.s32.totalorder %s19, 1
      %s233 = scalar_select %p232, %s19, 1
      %s234 = smul.addr %s233, 43
      %s235 = smul.addr %s234, 4
      %s236 = scalar_lea.vmem %s0, %s235
      %s237 = smul.u32 18, %s20
      %p238 = scmp.lt.s32.totalorder %s19, 1
      %s239 = scalar_select %p238, %s19, 1
      %p240 = scmp.lt.s32.totalorder %s237, 35
      %s241 = scalar_select %p240, %s237, 35
      %s242 = smul.addr %s239, 36
      %s243 = sadd.s32 %s241, %s242
      %s244 = smul.addr %s243, 8
      %s245 = scalar_lea.vmem %s3, %s244
      %s246 = smul.u32 18, %s20
      %s247 = smul.u32 18, %s20
      %p248 = scmp.lt.s32.totalorder %s19, 1
      %s249 = scalar_select %p248, %s19, 1
      %p250 = scmp.lt.s32.totalorder %s247, 35
      %s251 = scalar_select %p250, %s247, 35
      %s252 = smul.addr %s249, 36
      %s253 = sadd.s32 %s251, %s252
      %s254 = smul.addr %s253, 8
      %s255 = scalar_lea.vmem %s4, %s254
      %s256 = smul.u32 18, %s20
      %s258 = smul.u32 %s20, 144
      %s259 = sshra.s32 %s258, 3
      %s260 = sand.u32 %s258, 7
      %s261 = smul.addr %s259, 4
      %s262 = scalar_lea.vmem %s236, %s261
      %v263 = vld [vmem:[%s262] sm:$0xf]
      %v264 = vld [vmem:[%s262 + $0x4] sm:$0xf]
      %v265 = vld [vmem:[%s262 + $0x8] sm:$0xf]
      %v266 = vld [vmem:[%s262 + $0xc] sm:$0xf]
      %v267 = vld [vmem:[%s262 + $0x10] sm:$0xf]
      %v268 = vld [vmem:[%s262 + $0x14] sm:$0xf]
      %v269 = vld [vmem:[%s262 + $0x18] sm:$0xf]
      %v270 = vld [vmem:[%s262 + $0x1c] sm:$0xf]
      %v271 = vld [vmem:[%s262 + $0x20] sm:$0xf]
      %v272 = vld [vmem:[%s262 + $0x24] sm:$0xf]
      %v273 = vld [vmem:[%s262 + $0x28] sm:$0xf]
      %v274 = vld [vmem:[%s262 + $0x2c] sm:$0xf]
      %v275 = vld [vmem:[%s262 + $0x30] sm:$0xf]
      %v276 = vld [vmem:[%s262 + $0x34] sm:$0xf]
      %v277 = vld [vmem:[%s262 + $0x38] sm:$0xf]
      %v278 = vld [vmem:[%s262 + $0x3c] sm:$0xf]
      %v279 = vld [vmem:[%s262 + $0x40] sm:$0xf]
      %v280 = vld [vmem:[%s262 + $0x44] sm:$0xf]
      %v281 = vld [vmem:[%s262 + $0x48] sm:$0xf]
      %v282 = vld [vmem:[%s262 + $0x4c] sm:$0xf]
      %v283 = vld [vmem:[%s262 + $0x50] sm:$0xf]
      %v284 = vld [vmem:[%s262 + $0x54] sm:$0xf]
      %v285 = vld [vmem:[%s262 + $0x58] sm:$0xf]
      %v286 = vld [vmem:[%s1] sm:$0xf]
      %v287 = vld [vmem:[%s1 + $0x4] sm:$0xf]
      %s288 = scalar_lea.vmem %s1, 8
      %v289 = vld [vmem:[%s288] sm:$0xf]
      %v290 = vld [vmem:[%s288 + $0x4] sm:$0xf]
      %v310 = vunpack.c.l.b16 %v263
      %v311 = vunpack.c.l.b16 %v264
      %v312 = vunpack.c.l.b16 %v265
      %v313 = vunpack.c.l.b16 %v266
      %v314 = vunpack.c.l.b16 %v267
      %v315 = vunpack.c.l.b16 %v268
      %v316 = vunpack.c.l.b16 %v269
      %v317 = vunpack.c.l.b16 %v270
      %v318 = vunpack.c.l.b16 %v271
      %v319 = vunpack.c.l.b16 %v272
      %v320 = vunpack.c.l.b16 %v273
      %v321 = vunpack.c.l.b16 %v274
      %v322 = vunpack.c.l.b16 %v275
      %v323 = vunpack.c.l.b16 %v276
      %v324 = vunpack.c.l.b16 %v277
      %v325 = vunpack.c.l.b16 %v278
      %v326 = vunpack.c.l.b16 %v279
      %v327 = vunpack.c.l.b16 %v280
      %v328 = vunpack.c.l.b16 %v281
      %v329 = vpack.c.b16 %v311, %v310
      %v330 = vpack.c.b16 %v313, %v312
      %v331 = vpack.c.b16 %v315, %v314
      %v332 = vpack.c.b16 %v317, %v316
      %v333 = vpack.c.b16 %v319, %v318
      %v334 = vpack.c.b16 %v321, %v320
      %v335 = vpack.c.b16 %v323, %v322
      %v336 = vpack.c.b16 %v325, %v324
      %v337 = vpack.c.b16 %v327, %v326
      %v338 = vpack.c.b16 %v328, %v328
      %vm339 = vsmask.f32 7424
      %v341 = vshrl.u32 %v329, 16
      %v343 = vshll.u32 %v329, 16
      %v345 = vrot.slane %v343, 1
      %v346 = vor.u32 %v341, %v345
      %v348 = vshll.u32 %v330, 16
      %v350 = vrot.slane %v348, 1
      %v351 = vsel %vm339, %v346, %v350
      %v352 = vshrl.u32 %v330, 16
      %v354 = vor.u32 %v352, %v350
      %v356 = vshll.u32 %v331, 16
      %v358 = vrot.slane %v356, 1
      %v359 = vsel %vm339, %v354, %v358
      %v360 = vshrl.u32 %v331, 16
      %v362 = vor.u32 %v360, %v358
      %v364 = vshll.u32 %v332, 16
      %v366 = vrot.slane %v364, 1
      %v367 = vsel %vm339, %v362, %v366
      %v368 = vshrl.u32 %v332, 16
      %v370 = vor.u32 %v368, %v366
      %v372 = vshll.u32 %v333, 16
      %v374 = vrot.slane %v372, 1
      %v375 = vsel %vm339, %v370, %v374
      %v376 = vshrl.u32 %v333, 16
      %v378 = vor.u32 %v376, %v374
      %v380 = vshll.u32 %v334, 16
      %v382 = vrot.slane %v380, 1
      %v383 = vsel %vm339, %v378, %v382
      %v384 = vshrl.u32 %v334, 16
      %v386 = vor.u32 %v384, %v382
      %v388 = vshll.u32 %v335, 16
      %v390 = vrot.slane %v388, 1
      %v391 = vsel %vm339, %v386, %v390
      %v392 = vshrl.u32 %v335, 16
      %v394 = vor.u32 %v392, %v390
      %v396 = vshll.u32 %v336, 16
      %v398 = vrot.slane %v396, 1
      %v399 = vsel %vm339, %v394, %v398
      %v400 = vshrl.u32 %v336, 16
      %v402 = vor.u32 %v400, %v398
      %v404 = vshll.u32 %v337, 16
      %v406 = vrot.slane %v404, 1
      %v407 = vsel %vm339, %v402, %v406
      %v408 = vshrl.u32 %v337, 16
      %v410 = vor.u32 %v408, %v406
      %v412 = vshll.u32 %v338, 16
      %v414 = vrot.slane %v412, 1
      %v415 = vsel %vm339, %v410, %v414
      %v418 = vunpack.c.l.b16 %v289
      %v419 = vunpack.c.l.b16 %v290
      %v420 = vpack.c.b16 %v419, %v418
      %vm422 = vcmask 130048
      %v424 = vsel %vm422, %v351, 0
      %v427 = vsel %vm422, %v359, 0
      %v430 = vsel %vm422, %v367, 0
      %v433 = vsel %vm422, %v375, 0
      %v436 = vsel %vm422, %v383, 0
      %v439 = vsel %vm422, %v391, 0
      %v442 = vsel %vm422, %v399, 0
      %v445 = vsel %vm422, %v407, 0
      %v448 = vsel %vm422, %v415, 0
      %450 = vmatprep.subr.bf16.mxu0 0
      %451 = vmatpush1.bf16.msra.mxu0 0
      %452 = vmatprep.subr.bf16.mxu0 0
      %453 = vmatpush1.bf16.msra.mxu0 0
      %454 = vmatprep.subr.bf16.mxu0 0
      %455 = vmatpush1.bf16.msra.mxu0 0
      %456 = vmatprep.subr.bf16.mxu0 0
      %457 = vmatpush1.bf16.msra.mxu0 0
      %458 = vmatprep.subr.bf16.mxu0 0
      %459 = vmatpush1.bf16.msra.mxu0 0
      %460 = vmatprep.subr.bf16.mxu0 0
      %461 = vmatpush1.bf16.msra.mxu0 0
      %462 = vmatprep.subr.bf16.mxu0 0
      %463 = vmatpush1.bf16.msra.mxu0 0
      %464 = vmatprep.subr.bf16.mxu0 0
      %465 = vmatpush1.bf16.msra.mxu0 %v420
      %466 = vmatprep.subr.bf16.mxu0 0
      %467 = vmatpush2.bf16.msra.mxu0 0
      %468 = vmatprep.subr.bf16.mxu0 0
      %469 = vmatpush2.bf16.msra.mxu0 0
      %470 = vmatprep.subr.bf16.mxu0 0
      %471 = vmatpush2.bf16.msra.mxu0 0
      %472 = vmatprep.subr.bf16.mxu0 0
      %473 = vmatpush2.bf16.msra.mxu0 0
      %474 = vmatprep.subr.bf16.mxu0 0
      %475 = vmatpush2.bf16.msra.mxu0 0
      %476 = vmatprep.subr.bf16.mxu0 0
      %477 = vmatpush2.bf16.msra.mxu0 0
      %478 = vmatprep.subr.bf16.mxu0 0
      %479 = vmatpush2.bf16.msra.mxu0 0
      %480 = vmatprep.subr.bf16.mxu0 0
      %481 = vmatpush2.bf16.msra.mxu0 0
      %482 = vmatprep.mubr.bf16.mxu0 0
      %483 = vmatmul.mubr.bf16.gmra.mxu0 %v424
      %v484 = vpop.f32.mrf.mxu0
      %v485 = vadd.f32 0.0, %v484
      %v486 = vpop.f32.mrf.mxu0
      %v487 = vpop.f32.mrf.mxu0
      %v488 = vadd.f32 0.0, %v487
      %v489 = vpop.f32.mrf.mxu0
      %490 = vmatprep.mubr.bf16.mxu0 0
      %491 = vmatmul.mubr.bf16.gmra.mxu0 %v427
      %v492 = vpop.f32.mrf.mxu0
      %v493 = vadd.f32 0.0, %v492
      %v494 = vpop.f32.mrf.mxu0
      %v495 = vpop.f32.mrf.mxu0
      %v496 = vadd.f32 0.0, %v495
      %v497 = vpop.f32.mrf.mxu0
      %498 = vmatprep.mubr.bf16.mxu0 0
      %499 = vmatmul.mubr.bf16.gmra.mxu0 %v430
      %v500 = vpop.f32.mrf.mxu0
      %v501 = vadd.f32 0.0, %v500
      %v502 = vpop.f32.mrf.mxu0
      %v503 = vpop.f32.mrf.mxu0
      %v504 = vadd.f32 0.0, %v503
      %v505 = vpop.f32.mrf.mxu0
      %506 = vmatprep.mubr.bf16.mxu0 0
      %507 = vmatmul.mubr.bf16.gmra.mxu0 %v433
      %v508 = vpop.f32.mrf.mxu0
      %v509 = vadd.f32 0.0, %v508
      %v510 = vpop.f32.mrf.mxu0
      %v511 = vpop.f32.mrf.mxu0
      %v512 = vadd.f32 0.0, %v511
      %v513 = vpop.f32.mrf.mxu0
      %514 = vmatprep.mubr.bf16.mxu0 0
      %515 = vmatmul.mubr.bf16.gmra.mxu0 %v436
      %v516 = vpop.f32.mrf.mxu0
      %v517 = vadd.f32 0.0, %v516
      %v518 = vpop.f32.mrf.mxu0
      %v519 = vpop.f32.mrf.mxu0
      %v520 = vadd.f32 0.0, %v519
      %v521 = vpop.f32.mrf.mxu0
      %522 = vmatprep.mubr.bf16.mxu0 0
      %523 = vmatmul.mubr.bf16.gmra.mxu0 %v439
      %v524 = vpop.f32.mrf.mxu0
      %v525 = vadd.f32 0.0, %v524
      %v526 = vpop.f32.mrf.mxu0
      %v527 = vpop.f32.mrf.mxu0
      %v528 = vadd.f32 0.0, %v527
      %v529 = vpop.f32.mrf.mxu0
      %530 = vmatprep.mubr.bf16.mxu0 0
      %531 = vmatmul.mubr.bf16.gmra.mxu0 %v442
      %v532 = vpop.f32.mrf.mxu0
      %v533 = vadd.f32 0.0, %v532
      %v534 = vpop.f32.mrf.mxu0
      %v535 = vpop.f32.mrf.mxu0
      %v536 = vadd.f32 0.0, %v535
      %v537 = vpop.f32.mrf.mxu0
      %538 = vmatprep.mubr.bf16.mxu0 0
      %539 = vmatmul.mubr.bf16.gmra.mxu0 %v445
      %v540 = vpop.f32.mrf.mxu0
      %v541 = vadd.f32 0.0, %v540
      %v542 = vpop.f32.mrf.mxu0
      %v543 = vpop.f32.mrf.mxu0
      %v544 = vadd.f32 0.0, %v543
      %v545 = vpop.f32.mrf.mxu0
      %546 = vmatprep.mubr.bf16.mxu0 0
      %547 = vmatmul.mubr.bf16.gmra.mxu0 %v448
      %v548 = vpop.f32.mrf.mxu0
      %v549 = vadd.f32 0.0, %v548
      %v550 = vpop.f32.mrf.mxu0
      %v551 = vpop.f32.mrf.mxu0
      %v552 = vadd.f32 0.0, %v551
      %v553 = vpop.f32.mrf.mxu0
      %554 = vdwg.mxu0
      %v557 = vunpack.c.l.b16 %v286
      %v558 = vunpack.c.l.b16 %v287
      %v559 = vpack.c.b16 %v558, %v557
      %v561 = vsel %vm422, %v329, 0
      %v563 = vsel %vm422, %v330, 0
      %v565 = vsel %vm422, %v331, 0
      %v567 = vsel %vm422, %v332, 0
      %v569 = vsel %vm422, %v333, 0
      %v571 = vsel %vm422, %v334, 0
      %v573 = vsel %vm422, %v335, 0
      %v575 = vsel %vm422, %v336, 0
      %v577 = vsel %vm422, %v337, 0
      %579 = vmatprep.subr.bf16.mxu0 0
      %580 = vmatpush1.bf16.msra.mxu0 0
      %581 = vmatprep.subr.bf16.mxu0 0
      %582 = vmatpush1.bf16.msra.mxu0 0
      %583 = vmatprep.subr.bf16.mxu0 0
      %584 = vmatpush1.bf16.msra.mxu0 0
      %585 = vmatprep.subr.bf16.mxu0 0
      %586 = vmatpush1.bf16.msra.mxu0 0
      %587 = vmatprep.subr.bf16.mxu0 0
      %588 = vmatpush1.bf16.msra.mxu0 0
      %589 = vmatprep.subr.bf16.mxu0 0
      %590 = vmatpush1.bf16.msra.mxu0 0
      %591 = vmatprep.subr.bf16.mxu0 0
      %592 = vmatpush1.bf16.msra.mxu0 0
      %593 = vmatprep.subr.bf16.mxu0 0
      %594 = vmatpush1.bf16.msra.mxu0 %v559
      %595 = vmatprep.subr.bf16.mxu0 0
      %596 = vmatpush2.bf16.msra.mxu0 0
      %597 = vmatprep.subr.bf16.mxu0 0
      %598 = vmatpush2.bf16.msra.mxu0 0
      %599 = vmatprep.subr.bf16.mxu0 0
      %600 = vmatpush2.bf16.msra.mxu0 0
      %601 = vmatprep.subr.bf16.mxu0 0
      %602 = vmatpush2.bf16.msra.mxu0 0
      %603 = vmatprep.subr.bf16.mxu0 0
      %604 = vmatpush2.bf16.msra.mxu0 0
      %605 = vmatprep.subr.bf16.mxu0 0
      %606 = vmatpush2.bf16.msra.mxu0 0
      %607 = vmatprep.subr.bf16.mxu0 0
      %608 = vmatpush2.bf16.msra.mxu0 0
      %609 = vmatprep.subr.bf16.mxu0 0
      %610 = vmatpush2.bf16.msra.mxu0 0
      %611 = vmatprep.mubr.bf16.mxu0 0
      %612 = vmatmul.mubr.bf16.gmra.mxu0 %v561
      %v613 = vpop.f32.mrf.mxu0
      %v614 = vadd.f32 %v485, %v613
      %v615 = vpop.f32.mrf.mxu0
      %v616 = vpop.f32.mrf.mxu0
      %v617 = vadd.f32 %v488, %v616
      %v618 = vpop.f32.mrf.mxu0
      %619 = vmatprep.mubr.bf16.mxu0 0
      %620 = vmatmul.mubr.bf16.gmra.mxu0 %v563
      %v621 = vpop.f32.mrf.mxu0
      %v622 = vadd.f32 %v493, %v621
      %v623 = vpop.f32.mrf.mxu0
      %v624 = vpop.f32.mrf.mxu0
      %v625 = vadd.f32 %v496, %v624
      %v626 = vpop.f32.mrf.mxu0
      %627 = vmatprep.mubr.bf16.mxu0 0
      %628 = vmatmul.mubr.bf16.gmra.mxu0 %v565
      %v629 = vpop.f32.mrf.mxu0
      %v630 = vadd.f32 %v501, %v629
      %v631 = vpop.f32.mrf.mxu0
      %v632 = vpop.f32.mrf.mxu0
      %v633 = vadd.f32 %v504, %v632
      %v634 = vpop.f32.mrf.mxu0
      %635 = vmatprep.mubr.bf16.mxu0 0
      %636 = vmatmul.mubr.bf16.gmra.mxu0 %v567
      %v637 = vpop.f32.mrf.mxu0
      %v638 = vadd.f32 %v509, %v637
      %v639 = vpop.f32.mrf.mxu0
      %v640 = vpop.f32.mrf.mxu0
      %v641 = vadd.f32 %v512, %v640
      %v642 = vpop.f32.mrf.mxu0
      %643 = vmatprep.mubr.bf16.mxu0 0
      %644 = vmatmul.mubr.bf16.gmra.mxu0 %v569
      %v645 = vpop.f32.mrf.mxu0
      %v646 = vadd.f32 %v517, %v645
      %v647 = vpop.f32.mrf.mxu0
      %v648 = vpop.f32.mrf.mxu0
      %v649 = vadd.f32 %v520, %v648
      %v650 = vpop.f32.mrf.mxu0
      %651 = vmatprep.mubr.bf16.mxu0 0
      %652 = vmatmul.mubr.bf16.gmra.mxu0 %v571
      %v653 = vpop.f32.mrf.mxu0
      %v654 = vadd.f32 %v525, %v653
      %v655 = vpop.f32.mrf.mxu0
      %v656 = vpop.f32.mrf.mxu0
      %v657 = vadd.f32 %v528, %v656
      %v658 = vpop.f32.mrf.mxu0
      %659 = vmatprep.mubr.bf16.mxu0 0
      %660 = vmatmul.mubr.bf16.gmra.mxu0 %v573
      %v661 = vpop.f32.mrf.mxu0
      %v662 = vadd.f32 %v533, %v661
      %v663 = vpop.f32.mrf.mxu0
      %v664 = vpop.f32.mrf.mxu0
      %v665 = vadd.f32 %v536, %v664
      %v666 = vpop.f32.mrf.mxu0
      %667 = vmatprep.mubr.bf16.mxu0 0
      %668 = vmatmul.mubr.bf16.gmra.mxu0 %v575
      %v669 = vpop.f32.mrf.mxu0
      %v670 = vadd.f32 %v541, %v669
      %v671 = vpop.f32.mrf.mxu0
      %v672 = vpop.f32.mrf.mxu0
      %v673 = vadd.f32 %v544, %v672
      %v674 = vpop.f32.mrf.mxu0
      %675 = vmatprep.mubr.bf16.mxu0 0
      %676 = vmatmul.mubr.bf16.gmra.mxu0 %v577
      %v677 = vpop.f32.mrf.mxu0
      %v678 = vadd.f32 %v549, %v677
      %v679 = vpop.f32.mrf.mxu0
      %v680 = vpop.f32.mrf.mxu0
      %v681 = vadd.f32 %v552, %v680
      %v682 = vpop.f32.mrf.mxu0
      %683 = vdwg.mxu0
      %s684 = scalar_lea.vmem %s1, 16
      %v685 = vld [vmem:[%s684] sm:$0xf]
      %v686 = vld [vmem:[%s684 + $0x4] sm:$0xf]
      %vm687 = vcmask 1046528
      %v688 = vrot.slane %v329, 1
      %v689 = vrot.slane %v330, 1
      %v690 = vsel %vm687, %v688, %v689
      %v691 = vrot.slane %v331, 1
      %v692 = vsel %vm687, %v689, %v691
      %v693 = vrot.slane %v332, 1
      %v694 = vsel %vm687, %v691, %v693
      %v695 = vrot.slane %v333, 1
      %v696 = vsel %vm687, %v693, %v695
      %v697 = vrot.slane %v334, 1
      %v698 = vsel %vm687, %v695, %v697
      %v699 = vrot.slane %v335, 1
      %v700 = vsel %vm687, %v697, %v699
      %v701 = vrot.slane %v336, 1
      %v702 = vsel %vm687, %v699, %v701
      %v703 = vrot.slane %v337, 1
      %v704 = vsel %vm687, %v701, %v703
      %v705 = vrot.slane %v338, 1
      %v706 = vsel %vm687, %v703, %v705
      %v709 = vunpack.c.l.b16 %v685
      %v710 = vunpack.c.l.b16 %v686
      %v711 = vpack.c.b16 %v710, %v709
      %v714 = vsel %vm422, %v690, 0
      %v717 = vsel %vm422, %v692, 0
      %v720 = vsel %vm422, %v694, 0
      %v723 = vsel %vm422, %v696, 0
      %v726 = vsel %vm422, %v698, 0
      %v729 = vsel %vm422, %v700, 0
      %v732 = vsel %vm422, %v702, 0
      %v735 = vsel %vm422, %v704, 0
      %v738 = vsel %vm422, %v706, 0
      %740 = vmatprep.subr.bf16.mxu0 0
      %741 = vmatpush1.bf16.msra.mxu0 0
      %742 = vmatprep.subr.bf16.mxu0 0
      %743 = vmatpush1.bf16.msra.mxu0 0
      %744 = vmatprep.subr.bf16.mxu0 0
      %745 = vmatpush1.bf16.msra.mxu0 0
      %746 = vmatprep.subr.bf16.mxu0 0
      %747 = vmatpush1.bf16.msra.mxu0 0
      %748 = vmatprep.subr.bf16.mxu0 0
      %749 = vmatpush1.bf16.msra.mxu0 0
      %750 = vmatprep.subr.bf16.mxu0 0
      %751 = vmatpush1.bf16.msra.mxu0 0
      %752 = vmatprep.subr.bf16.mxu0 0
      %753 = vmatpush1.bf16.msra.mxu0 0
      %754 = vmatprep.subr.bf16.mxu0 0
      %755 = vmatpush1.bf16.msra.mxu0 %v711
      %756 = vmatprep.subr.bf16.mxu0 0
      %757 = vmatpush2.bf16.msra.mxu0 0
      %758 = vmatprep.subr.bf16.mxu0 0
      %759 = vmatpush2.bf16.msra.mxu0 0
      %760 = vmatprep.subr.bf16.mxu0 0
      %761 = vmatpush2.bf16.msra.mxu0 0
      %762 = vmatprep.subr.bf16.mxu0 0
      %763 = vmatpush2.bf16.msra.mxu0 0
      %764 = vmatprep.subr.bf16.mxu0 0
      %765 = vmatpush2.bf16.msra.mxu0 0
      %766 = vmatprep.subr.bf16.mxu0 0
      %767 = vmatpush2.bf16.msra.mxu0 0
      %768 = vmatprep.subr.bf16.mxu0 0
      %769 = vmatpush2.bf16.msra.mxu0 0
      %770 = vmatprep.subr.bf16.mxu0 0
      %771 = vmatpush2.bf16.msra.mxu0 0
      %772 = vmatprep.mubr.bf16.mxu0 0
      %773 = vmatmul.mubr.bf16.gmra.mxu0 %v714
      %v774 = vpop.f32.mrf.mxu0
      %v775 = vadd.f32 0.0, %v774
      %v776 = vpop.f32.mrf.mxu0
      %v777 = vpop.f32.mrf.mxu0
      %v778 = vadd.f32 0.0, %v777
      %v779 = vpop.f32.mrf.mxu0
      %780 = vmatprep.mubr.bf16.mxu0 0
      %781 = vmatmul.mubr.bf16.gmra.mxu0 %v717
      %v782 = vpop.f32.mrf.mxu0
      %v783 = vadd.f32 0.0, %v782
      %v784 = vpop.f32.mrf.mxu0
      %v785 = vpop.f32.mrf.mxu0
      %v786 = vadd.f32 0.0, %v785
      %v787 = vpop.f32.mrf.mxu0
      %788 = vmatprep.mubr.bf16.mxu0 0
      %789 = vmatmul.mubr.bf16.gmra.mxu0 %v720
      %v790 = vpop.f32.mrf.mxu0
      %v791 = vadd.f32 0.0, %v790
      %v792 = vpop.f32.mrf.mxu0
      %v793 = vpop.f32.mrf.mxu0
      %v794 = vadd.f32 0.0, %v793
      %v795 = vpop.f32.mrf.mxu0
      %796 = vmatprep.mubr.bf16.mxu0 0
      %797 = vmatmul.mubr.bf16.gmra.mxu0 %v723
      %v798 = vpop.f32.mrf.mxu0
      %v799 = vadd.f32 0.0, %v798
      %v800 = vpop.f32.mrf.mxu0
      %v801 = vpop.f32.mrf.mxu0
      %v802 = vadd.f32 0.0, %v801
      %v803 = vpop.f32.mrf.mxu0
      %804 = vmatprep.mubr.bf16.mxu0 0
      %805 = vmatmul.mubr.bf16.gmra.mxu0 %v726
      %v806 = vpop.f32.mrf.mxu0
      %v807 = vadd.f32 0.0, %v806
      %v808 = vpop.f32.mrf.mxu0
      %v809 = vpop.f32.mrf.mxu0
      %v810 = vadd.f32 0.0, %v809
      %v811 = vpop.f32.mrf.mxu0
      %812 = vmatprep.mubr.bf16.mxu0 0
      %813 = vmatmul.mubr.bf16.gmra.mxu0 %v729
      %v814 = vpop.f32.mrf.mxu0
      %v815 = vadd.f32 0.0, %v814
      %v816 = vpop.f32.mrf.mxu0
      %v817 = vpop.f32.mrf.mxu0
      %v818 = vadd.f32 0.0, %v817
      %v819 = vpop.f32.mrf.mxu0
      %820 = vmatprep.mubr.bf16.mxu0 0
      %821 = vmatmul.mubr.bf16.gmra.mxu0 %v732
      %v822 = vpop.f32.mrf.mxu0
      %v823 = vadd.f32 0.0, %v822
      %v824 = vpop.f32.mrf.mxu0
      %v825 = vpop.f32.mrf.mxu0
      %v826 = vadd.f32 0.0, %v825
      %v827 = vpop.f32.mrf.mxu0
      %828 = vmatprep.mubr.bf16.mxu0 0
      %829 = vmatmul.mubr.bf16.gmra.mxu0 %v735
      %v830 = vpop.f32.mrf.mxu0
      %v831 = vadd.f32 0.0, %v830
      %v832 = vpop.f32.mrf.mxu0
      %v833 = vpop.f32.mrf.mxu0
      %v834 = vadd.f32 0.0, %v833
      %v835 = vpop.f32.mrf.mxu0
      %836 = vmatprep.mubr.bf16.mxu0 0
      %837 = vmatmul.mubr.bf16.gmra.mxu0 %v738
      %v838 = vpop.f32.mrf.mxu0
      %v839 = vadd.f32 0.0, %v838
      %v840 = vpop.f32.mrf.mxu0
      %v841 = vpop.f32.mrf.mxu0
      %v842 = vadd.f32 0.0, %v841
      %v843 = vpop.f32.mrf.mxu0
      %844 = vdwg.mxu0
      %v845 = vadd.f32 %v614, %v775
      %v846 = vadd.f32 %v617, %v778
      %v847 = vadd.f32 %v622, %v783
      %v848 = vadd.f32 %v625, %v786
      %v849 = vadd.f32 %v630, %v791
      %v850 = vadd.f32 %v633, %v794
      %v851 = vadd.f32 %v638, %v799
      %v852 = vadd.f32 %v641, %v802
      %v853 = vadd.f32 %v646, %v807
      %v854 = vadd.f32 %v649, %v810
      %v855 = vadd.f32 %v654, %v815
      %v856 = vadd.f32 %v657, %v818
      %v857 = vadd.f32 %v662, %v823
      %v858 = vadd.f32 %v665, %v826
      %v859 = vadd.f32 %v670, %v831
      %v860 = vadd.f32 %v673, %v834
      %v861 = vadd.f32 %v678, %v839
      %v862 = vadd.f32 %v681, %v842
      %s863 = scalar_lea.vmem %s1, 24
      %v864 = vld [vmem:[%s863] sm:$0xf]
      %v865 = vld [vmem:[%s863 + $0x4] sm:$0xf]
      %v868 = vunpack.c.l.b16 %v282
      %v869 = vunpack.c.l.b16 %v283
      %v870 = vpack.c.b16 %v868, %v328
      %v871 = vpack.c.b16 %v869, %v869
      %v872 = vrot.slane %v870, 1
      %v873 = vsel %vm687, %v703, %v872
      %v874 = vrot.slane %v871, 1
      %v875 = vsel %vm687, %v872, %v874
      %v878 = vunpack.c.l.b16 %v864
      %v879 = vunpack.c.l.b16 %v865
      %v880 = vpack.c.b16 %v879, %v878
      %v883 = vsel %vm422, %v873, 0
      %v886 = vsel %vm422, %v875, 0
      %888 = vmatprep.subr.bf16.mxu0 0
      %889 = vmatpush1.bf16.msra.mxu0 0
      %890 = vmatprep.subr.bf16.mxu0 0
      %891 = vmatpush1.bf16.msra.mxu0 0
      %892 = vmatprep.subr.bf16.mxu0 0
      %893 = vmatpush1.bf16.msra.mxu0 0
      %894 = vmatprep.subr.bf16.mxu0 0
      %895 = vmatpush1.bf16.msra.mxu0 0
      %896 = vmatprep.subr.bf16.mxu0 0
      %897 = vmatpush1.bf16.msra.mxu0 0
      %898 = vmatprep.subr.bf16.mxu0 0
      %899 = vmatpush1.bf16.msra.mxu0 0
      %900 = vmatprep.subr.bf16.mxu0 0
      %901 = vmatpush1.bf16.msra.mxu0 0
      %902 = vmatprep.subr.bf16.mxu0 0
      %903 = vmatpush1.bf16.msra.mxu0 %v880
      %904 = vmatprep.subr.bf16.mxu0 0
      %905 = vmatpush2.bf16.msra.mxu0 0
      %906 = vmatprep.subr.bf16.mxu0 0
      %907 = vmatpush2.bf16.msra.mxu0 0
      %908 = vmatprep.subr.bf16.mxu0 0
      %909 = vmatpush2.bf16.msra.mxu0 0
      %910 = vmatprep.subr.bf16.mxu0 0
      %911 = vmatpush2.bf16.msra.mxu0 0
      %912 = vmatprep.subr.bf16.mxu0 0
      %913 = vmatpush2.bf16.msra.mxu0 0
      %914 = vmatprep.subr.bf16.mxu0 0
      %915 = vmatpush2.bf16.msra.mxu0 0
      %916 = vmatprep.subr.bf16.mxu0 0
      %917 = vmatpush2.bf16.msra.mxu0 0
      %918 = vmatprep.subr.bf16.mxu0 0
      %919 = vmatpush2.bf16.msra.mxu0 0
      %920 = vmatprep.mubr.bf16.mxu0 0
      %921 = vmatmul.mubr.bf16.gmra.mxu0 %v717
      %v922 = vpop.f32.mrf.mxu0
      %v923 = vadd.f32 0.0, %v922
      %v924 = vpop.f32.mrf.mxu0
      %v925 = vpop.f32.mrf.mxu0
      %v926 = vadd.f32 0.0, %v925
      %v927 = vpop.f32.mrf.mxu0
      %928 = vmatprep.mubr.bf16.mxu0 0
      %929 = vmatmul.mubr.bf16.gmra.mxu0 %v720
      %v930 = vpop.f32.mrf.mxu0
      %v931 = vadd.f32 0.0, %v930
      %v932 = vpop.f32.mrf.mxu0
      %v933 = vpop.f32.mrf.mxu0
      %v934 = vadd.f32 0.0, %v933
      %v935 = vpop.f32.mrf.mxu0
      %936 = vmatprep.mubr.bf16.mxu0 0
      %937 = vmatmul.mubr.bf16.gmra.mxu0 %v723
      %v938 = vpop.f32.mrf.mxu0
      %v939 = vadd.f32 0.0, %v938
      %v940 = vpop.f32.mrf.mxu0
      %v941 = vpop.f32.mrf.mxu0
      %v942 = vadd.f32 0.0, %v941
      %v943 = vpop.f32.mrf.mxu0
      %944 = vmatprep.mubr.bf16.mxu0 0
      %945 = vmatmul.mubr.bf16.gmra.mxu0 %v726
      %v946 = vpop.f32.mrf.mxu0
      %v947 = vadd.f32 0.0, %v946
      %v948 = vpop.f32.mrf.mxu0
      %v949 = vpop.f32.mrf.mxu0
      %v950 = vadd.f32 0.0, %v949
      %v951 = vpop.f32.mrf.mxu0
      %952 = vmatprep.mubr.bf16.mxu0 0
      %953 = vmatmul.mubr.bf16.gmra.mxu0 %v729
      %v954 = vpop.f32.mrf.mxu0
      %v955 = vadd.f32 0.0, %v954
      %v956 = vpop.f32.mrf.mxu0
      %v957 = vpop.f32.mrf.mxu0
      %v958 = vadd.f32 0.0, %v957
      %v959 = vpop.f32.mrf.mxu0
      %960 = vmatprep.mubr.bf16.mxu0 0
      %961 = vmatmul.mubr.bf16.gmra.mxu0 %v732
      %v962 = vpop.f32.mrf.mxu0
      %v963 = vadd.f32 0.0, %v962
      %v964 = vpop.f32.mrf.mxu0
      %v965 = vpop.f32.mrf.mxu0
      %v966 = vadd.f32 0.0, %v965
      %v967 = vpop.f32.mrf.mxu0
      %968 = vmatprep.mubr.bf16.mxu0 0
      %969 = vmatmul.mubr.bf16.gmra.mxu0 %v735
      %v970 = vpop.f32.mrf.mxu0
      %v971 = vadd.f32 0.0, %v970
      %v972 = vpop.f32.mrf.mxu0
      %v973 = vpop.f32.mrf.mxu0
      %v974 = vadd.f32 0.0, %v973
      %v975 = vpop.f32.mrf.mxu0
      %976 = vmatprep.mubr.bf16.mxu0 0
      %977 = vmatmul.mubr.bf16.gmra.mxu0 %v883
      %v978 = vpop.f32.mrf.mxu0
      %v979 = vadd.f32 0.0, %v978
      %v980 = vpop.f32.mrf.mxu0
      %v981 = vpop.f32.mrf.mxu0
      %v982 = vadd.f32 0.0, %v981
      %v983 = vpop.f32.mrf.mxu0
      %984 = vmatprep.mubr.bf16.mxu0 0
      %985 = vmatmul.mubr.bf16.gmra.mxu0 %v886
      %v986 = vpop.f32.mrf.mxu0
      %v987 = vadd.f32 0.0, %v986
      %v988 = vpop.f32.mrf.mxu0
      %v989 = vpop.f32.mrf.mxu0
      %v990 = vadd.f32 0.0, %v989
      %v991 = vpop.f32.mrf.mxu0
      %992 = vdwg.mxu0
      %v993 = vadd.f32 %v845, %v923
      %v994 = vadd.f32 %v846, %v926
      %v995 = vadd.f32 %v847, %v931
      %v996 = vadd.f32 %v848, %v934
      %v997 = vadd.f32 %v849, %v939
      %v998 = vadd.f32 %v850, %v942
      %v999 = vadd.f32 %v851, %v947
      %v1000 = vadd.f32 %v852, %v950
      %v1001 = vadd.f32 %v853, %v955
      %v1002 = vadd.f32 %v854, %v958
      %v1003 = vadd.f32 %v855, %v963
      %v1004 = vadd.f32 %v856, %v966
      %v1005 = vadd.f32 %v857, %v971
      %v1006 = vadd.f32 %v858, %v974
      %v1007 = vadd.f32 %v859, %v979
      %v1008 = vadd.f32 %v860, %v982
      %v1009 = vadd.f32 %v861, %v987
      %v1010 = vadd.f32 %v862, %v990
      %s1011 = scalar_lea.vmem %s1, 32
      %v1012 = vld [vmem:[%s1011] sm:$0xf]
      %v1013 = vld [vmem:[%s1011 + $0x4] sm:$0xf]
      %vm1014 = vsmask.f32 6400
      %v1015 = vrot.slane %v352, 1
      %v1016 = vrot.slane %v348, 2
      %v1017 = vor.u32 %v1015, %v1016
      %v1018 = vrot.slane %v360, 1
      %v1019 = vrot.slane %v356, 2
      %v1020 = vor.u32 %v1018, %v1019
      %v1021 = vsel %vm1014, %v1017, %v1020
      %v1022 = vrot.slane %v368, 1
      %v1023 = vrot.slane %v364, 2
      %v1024 = vor.u32 %v1022, %v1023
      %v1025 = vsel %vm1014, %v1020, %v1024
      %v1026 = vrot.slane %v376, 1
      %v1027 = vrot.slane %v372, 2
      %v1028 = vor.u32 %v1026, %v1027
      %v1029 = vsel %vm1014, %v1024, %v1028
      %v1030 = vrot.slane %v384, 1
      %v1031 = vrot.slane %v380, 2
      %v1032 = vor.u32 %v1030, %v1031
      %v1033 = vsel %vm1014, %v1028, %v1032
      %v1034 = vrot.slane %v392, 1
      %v1035 = vrot.slane %v388, 2
      %v1036 = vor.u32 %v1034, %v1035
      %v1037 = vsel %vm1014, %v1032, %v1036
      %v1038 = vrot.slane %v400, 1
      %v1039 = vrot.slane %v396, 2
      %v1040 = vor.u32 %v1038, %v1039
      %v1041 = vsel %vm1014, %v1036, %v1040
      %v1042 = vrot.slane %v408, 1
      %v1043 = vrot.slane %v404, 2
      %v1044 = vor.u32 %v1042, %v1043
      %v1045 = vsel %vm1014, %v1040, %v1044
      %v1047 = vshrl.u32 %v870, 16
      %v1049 = vrot.slane %v1047, 1
      %v1050 = vshll.u32 %v870, 16
      %v1052 = vrot.slane %v1050, 2
      %v1053 = vor.u32 %v1049, %v1052
      %v1054 = vsel %vm1014, %v1044, %v1053
      %v1056 = vshrl.u32 %v871, 16
      %v1058 = vrot.slane %v1056, 1
      %v1059 = vshll.u32 %v871, 16
      %v1061 = vrot.slane %v1059, 2
      %v1062 = vor.u32 %v1058, %v1061
      %v1063 = vsel %vm1014, %v1053, %v1062
      %v1066 = vunpack.c.l.b16 %v1012
      %v1067 = vunpack.c.l.b16 %v1013
      %v1068 = vpack.c.b16 %v1067, %v1066
      %v1071 = vsel %vm422, %v1021, 0
      %v1074 = vsel %vm422, %v1025, 0
      %v1077 = vsel %vm422, %v1029, 0
      %v1080 = vsel %vm422, %v1033, 0
      %v1083 = vsel %vm422, %v1037, 0
      %v1086 = vsel %vm422, %v1041, 0
      %v1089 = vsel %vm422, %v1045, 0
      %v1092 = vsel %vm422, %v1054, 0
      %v1095 = vsel %vm422, %v1063, 0
      %1097 = vmatprep.subr.bf16.mxu0 0
      %1098 = vmatpush1.bf16.msra.mxu0 0
      %1099 = vmatprep.subr.bf16.mxu0 0
      %1100 = vmatpush1.bf16.msra.mxu0 0
      %1101 = vmatprep.subr.bf16.mxu0 0
      %1102 = vmatpush1.bf16.msra.mxu0 0
      %1103 = vmatprep.subr.bf16.mxu0 0
      %1104 = vmatpush1.bf16.msra.mxu0 0
      %1105 = vmatprep.subr.bf16.mxu0 0
      %1106 = vmatpush1.bf16.msra.mxu0 0
      %1107 = vmatprep.subr.bf16.mxu0 0
      %1108 = vmatpush1.bf16.msra.mxu0 0
      %1109 = vmatprep.subr.bf16.mxu0 0
      %1110 = vmatpush1.bf16.msra.mxu0 0
      %1111 = vmatprep.subr.bf16.mxu0 0
      %1112 = vmatpush1.bf16.msra.mxu0 %v1068
      %1113 = vmatprep.subr.bf16.mxu0 0
      %1114 = vmatpush2.bf16.msra.mxu0 0
      %1115 = vmatprep.subr.bf16.mxu0 0
      %1116 = vmatpush2.bf16.msra.mxu0 0
      %1117 = vmatprep.subr.bf16.mxu0 0
      %1118 = vmatpush2.bf16.msra.mxu0 0
      %1119 = vmatprep.subr.bf16.mxu0 0
      %1120 = vmatpush2.bf16.msra.mxu0 0
      %1121 = vmatprep.subr.bf16.mxu0 0
      %1122 = vmatpush2.bf16.msra.mxu0 0
      %1123 = vmatprep.subr.bf16.mxu0 0
      %1124 = vmatpush2.bf16.msra.mxu0 0
      %1125 = vmatprep.subr.bf16.mxu0 0
      %1126 = vmatpush2.bf16.msra.mxu0 0
      %1127 = vmatprep.subr.bf16.mxu0 0
      %1128 = vmatpush2.bf16.msra.mxu0 0
      %1129 = vmatprep.mubr.bf16.mxu0 0
      %1130 = vmatmul.mubr.bf16.gmra.mxu0 %v1071
      %v1131 = vpop.f32.mrf.mxu0
      %v1132 = vadd.f32 0.0, %v1131
      %v1133 = vpop.f32.mrf.mxu0
      %v1134 = vpop.f32.mrf.mxu0
      %v1135 = vadd.f32 0.0, %v1134
      %v1136 = vpop.f32.mrf.mxu0
      %1137 = vmatprep.mubr.bf16.mxu0 0
      %1138 = vmatmul.mubr.bf16.gmra.mxu0 %v1074
      %v1139 = vpop.f32.mrf.mxu0
      %v1140 = vadd.f32 0.0, %v1139
      %v1141 = vpop.f32.mrf.mxu0
      %v1142 = vpop.f32.mrf.mxu0
      %v1143 = vadd.f32 0.0, %v1142
      %v1144 = vpop.f32.mrf.mxu0
      %1145 = vmatprep.mubr.bf16.mxu0 0
      %1146 = vmatmul.mubr.bf16.gmra.mxu0 %v1077
      %v1147 = vpop.f32.mrf.mxu0
      %v1148 = vadd.f32 0.0, %v1147
      %v1149 = vpop.f32.mrf.mxu0
      %v1150 = vpop.f32.mrf.mxu0
      %v1151 = vadd.f32 0.0, %v1150
      %v1152 = vpop.f32.mrf.mxu0
      %1153 = vmatprep.mubr.bf16.mxu0 0
      %1154 = vmatmul.mubr.bf16.gmra.mxu0 %v1080
      %v1155 = vpop.f32.mrf.mxu0
      %v1156 = vadd.f32 0.0, %v1155
      %v1157 = vpop.f32.mrf.mxu0
      %v1158 = vpop.f32.mrf.mxu0
      %v1159 = vadd.f32 0.0, %v1158
      %v1160 = vpop.f32.mrf.mxu0
      %1161 = vmatprep.mubr.bf16.mxu0 0
      %1162 = vmatmul.mubr.bf16.gmra.mxu0 %v1083
      %v1163 = vpop.f32.mrf.mxu0
      %v1164 = vadd.f32 0.0, %v1163
      %v1165 = vpop.f32.mrf.mxu0
      %v1166 = vpop.f32.mrf.mxu0
      %v1167 = vadd.f32 0.0, %v1166
      %v1168 = vpop.f32.mrf.mxu0
      %1169 = vmatprep.mubr.bf16.mxu0 0
      %1170 = vmatmul.mubr.bf16.gmra.mxu0 %v1086
      %v1171 = vpop.f32.mrf.mxu0
      %v1172 = vadd.f32 0.0, %v1171
      %v1173 = vpop.f32.mrf.mxu0
      %v1174 = vpop.f32.mrf.mxu0
      %v1175 = vadd.f32 0.0, %v1174
      %v1176 = vpop.f32.mrf.mxu0
      %1177 = vmatprep.mubr.bf16.mxu0 0
      %1178 = vmatmul.mubr.bf16.gmra.mxu0 %v1089
      %v1179 = vpop.f32.mrf.mxu0
      %v1180 = vadd.f32 0.0, %v1179
      %v1181 = vpop.f32.mrf.mxu0
      %v1182 = vpop.f32.mrf.mxu0
      %v1183 = vadd.f32 0.0, %v1182
      %v1184 = vpop.f32.mrf.mxu0
      %1185 = vmatprep.mubr.bf16.mxu0 0
      %1186 = vmatmul.mubr.bf16.gmra.mxu0 %v1092
      %v1187 = vpop.f32.mrf.mxu0
      %v1188 = vadd.f32 0.0, %v1187
      %v1189 = vpop.f32.mrf.mxu0
      %v1190 = vpop.f32.mrf.mxu0
      %v1191 = vadd.f32 0.0, %v1190
      %v1192 = vpop.f32.mrf.mxu0
      %1193 = vmatprep.mubr.bf16.mxu0 0
      %1194 = vmatmul.mubr.bf16.gmra.mxu0 %v1095
      %v1195 = vpop.f32.mrf.mxu0
      %v1196 = vadd.f32 0.0, %v1195
      %v1197 = vpop.f32.mrf.mxu0
      %v1198 = vpop.f32.mrf.mxu0
      %v1199 = vadd.f32 0.0, %v1198
      %v1200 = vpop.f32.mrf.mxu0
      %1201 = vdwg.mxu0
      %v1202 = vadd.f32 %v993, %v1132
      %v1203 = vadd.f32 %v994, %v1135
      %v1204 = vadd.f32 %v995, %v1140
      %v1205 = vadd.f32 %v996, %v1143
      %v1206 = vadd.f32 %v997, %v1148
      %v1207 = vadd.f32 %v998, %v1151
      %v1208 = vadd.f32 %v999, %v1156
      %v1209 = vadd.f32 %v1000, %v1159
      %v1210 = vadd.f32 %v1001, %v1164
      %v1211 = vadd.f32 %v1002, %v1167
      %v1212 = vadd.f32 %v1003, %v1172
      %v1213 = vadd.f32 %v1004, %v1175
      %v1214 = vadd.f32 %v1005, %v1180
      %v1215 = vadd.f32 %v1006, %v1183
      %v1216 = vadd.f32 %v1007, %v1188
      %v1217 = vadd.f32 %v1008, %v1191
      %v1218 = vadd.f32 %v1009, %v1196
      %v1219 = vadd.f32 %v1010, %v1199
      %s1220 = scalar_lea.vmem %s1, 40
      %v1221 = vld [vmem:[%s1220] sm:$0xf]
      %v1222 = vld [vmem:[%s1220 + $0x4] sm:$0xf]
      %vm1223 = vcmask 1045504
      %v1224 = vrot.slane %v330, 2
      %v1225 = vrot.slane %v331, 2
      %v1226 = vsel %vm1223, %v1224, %v1225
      %v1227 = vrot.slane %v332, 2
      %v1228 = vsel %vm1223, %v1225, %v1227
      %v1229 = vrot.slane %v333, 2
      %v1230 = vsel %vm1223, %v1227, %v1229
      %v1231 = vrot.slane %v334, 2
      %v1232 = vsel %vm1223, %v1229, %v1231
      %v1233 = vrot.slane %v335, 2
      %v1234 = vsel %vm1223, %v1231, %v1233
      %v1235 = vrot.slane %v336, 2
      %v1236 = vsel %vm1223, %v1233, %v1235
      %v1237 = vrot.slane %v337, 2
      %v1238 = vsel %vm1223, %v1235, %v1237
      %v1239 = vrot.slane %v870, 2
      %v1240 = vsel %vm1223, %v1237, %v1239
      %v1241 = vrot.slane %v871, 2
      %v1242 = vsel %vm1223, %v1239, %v1241
      %v1245 = vunpack.c.l.b16 %v1221
      %v1246 = vunpack.c.l.b16 %v1222
      %v1247 = vpack.c.b16 %v1246, %v1245
      %v1250 = vsel %vm422, %v1226, 0
      %v1253 = vsel %vm422, %v1228, 0
      %v1256 = vsel %vm422, %v1230, 0
      %v1259 = vsel %vm422, %v1232, 0
      %v1262 = vsel %vm422, %v1234, 0
      %v1265 = vsel %vm422, %v1236, 0
      %v1268 = vsel %vm422, %v1238, 0
      %v1271 = vsel %vm422, %v1240, 0
      %v1274 = vsel %vm422, %v1242, 0
      %1276 = vmatprep.subr.bf16.mxu0 0
      %1277 = vmatpush1.bf16.msra.mxu0 0
      %1278 = vmatprep.subr.bf16.mxu0 0
      %1279 = vmatpush1.bf16.msra.mxu0 0
      %1280 = vmatprep.subr.bf16.mxu0 0
      %1281 = vmatpush1.bf16.msra.mxu0 0
      %1282 = vmatprep.subr.bf16.mxu0 0
      %1283 = vmatpush1.bf16.msra.mxu0 0
      %1284 = vmatprep.subr.bf16.mxu0 0
      %1285 = vmatpush1.bf16.msra.mxu0 0
      %1286 = vmatprep.subr.bf16.mxu0 0
      %1287 = vmatpush1.bf16.msra.mxu0 0
      %1288 = vmatprep.subr.bf16.mxu0 0
      %1289 = vmatpush1.bf16.msra.mxu0 0
      %1290 = vmatprep.subr.bf16.mxu0 0
      %1291 = vmatpush1.bf16.msra.mxu0 %v1247
      %1292 = vmatprep.subr.bf16.mxu0 0
      %1293 = vmatpush2.bf16.msra.mxu0 0
      %1294 = vmatprep.subr.bf16.mxu0 0
      %1295 = vmatpush2.bf16.msra.mxu0 0
      %1296 = vmatprep.subr.bf16.mxu0 0
      %1297 = vmatpush2.bf16.msra.mxu0 0
      %1298 = vmatprep.subr.bf16.mxu0 0
      %1299 = vmatpush2.bf16.msra.mxu0 0
      %1300 = vmatprep.subr.bf16.mxu0 0
      %1301 = vmatpush2.bf16.msra.mxu0 0
      %1302 = vmatprep.subr.bf16.mxu0 0
      %1303 = vmatpush2.bf16.msra.mxu0 0
      %1304 = vmatprep.subr.bf16.mxu0 0
      %1305 = vmatpush2.bf16.msra.mxu0 0
      %1306 = vmatprep.subr.bf16.mxu0 0
      %1307 = vmatpush2.bf16.msra.mxu0 0
      %1308 = vmatprep.mubr.bf16.mxu0 0
      %1309 = vmatmul.mubr.bf16.gmra.mxu0 %v1250
      %v1310 = vpop.f32.mrf.mxu0
      %v1311 = vadd.f32 0.0, %v1310
      %v1312 = vpop.f32.mrf.mxu0
      %v1313 = vpop.f32.mrf.mxu0
      %v1314 = vadd.f32 0.0, %v1313
      %v1315 = vpop.f32.mrf.mxu0
      %1316 = vmatprep.mubr.bf16.mxu0 0
      %1317 = vmatmul.mubr.bf16.gmra.mxu0 %v1253
      %v1318 = vpop.f32.mrf.mxu0
      %v1319 = vadd.f32 0.0, %v1318
      %v1320 = vpop.f32.mrf.mxu0
      %v1321 = vpop.f32.mrf.mxu0
      %v1322 = vadd.f32 0.0, %v1321
      %v1323 = vpop.f32.mrf.mxu0
      %1324 = vmatprep.mubr.bf16.mxu0 0
      %1325 = vmatmul.mubr.bf16.gmra.mxu0 %v1256
      %v1326 = vpop.f32.mrf.mxu0
      %v1327 = vadd.f32 0.0, %v1326
      %v1328 = vpop.f32.mrf.mxu0
      %v1329 = vpop.f32.mrf.mxu0
      %v1330 = vadd.f32 0.0, %v1329
      %v1331 = vpop.f32.mrf.mxu0
      %1332 = vmatprep.mubr.bf16.mxu0 0
      %1333 = vmatmul.mubr.bf16.gmra.mxu0 %v1259
      %v1334 = vpop.f32.mrf.mxu0
      %v1335 = vadd.f32 0.0, %v1334
      %v1336 = vpop.f32.mrf.mxu0
      %v1337 = vpop.f32.mrf.mxu0
      %v1338 = vadd.f32 0.0, %v1337
      %v1339 = vpop.f32.mrf.mxu0
      %1340 = vmatprep.mubr.bf16.mxu0 0
      %1341 = vmatmul.mubr.bf16.gmra.mxu0 %v1262
      %v1342 = vpop.f32.mrf.mxu0
      %v1343 = vadd.f32 0.0, %v1342
      %v1344 = vpop.f32.mrf.mxu0
      %v1345 = vpop.f32.mrf.mxu0
      %v1346 = vadd.f32 0.0, %v1345
      %v1347 = vpop.f32.mrf.mxu0
      %1348 = vmatprep.mubr.bf16.mxu0 0
      %1349 = vmatmul.mubr.bf16.gmra.mxu0 %v1265
      %v1350 = vpop.f32.mrf.mxu0
      %v1351 = vadd.f32 0.0, %v1350
      %v1352 = vpop.f32.mrf.mxu0
      %v1353 = vpop.f32.mrf.mxu0
      %v1354 = vadd.f32 0.0, %v1353
      %v1355 = vpop.f32.mrf.mxu0
      %1356 = vmatprep.mubr.bf16.mxu0 0
      %1357 = vmatmul.mubr.bf16.gmra.mxu0 %v1268
      %v1358 = vpop.f32.mrf.mxu0
      %v1359 = vadd.f32 0.0, %v1358
      %v1360 = vpop.f32.mrf.mxu0
      %v1361 = vpop.f32.mrf.mxu0
      %v1362 = vadd.f32 0.0, %v1361
      %v1363 = vpop.f32.mrf.mxu0
      %1364 = vmatprep.mubr.bf16.mxu0 0
      %1365 = vmatmul.mubr.bf16.gmra.mxu0 %v1271
      %v1366 = vpop.f32.mrf.mxu0
      %v1367 = vadd.f32 0.0, %v1366
      %v1368 = vpop.f32.mrf.mxu0
      %v1369 = vpop.f32.mrf.mxu0
      %v1370 = vadd.f32 0.0, %v1369
      %v1371 = vpop.f32.mrf.mxu0
      %1372 = vmatprep.mubr.bf16.mxu0 0
      %1373 = vmatmul.mubr.bf16.gmra.mxu0 %v1274
      %v1374 = vpop.f32.mrf.mxu0
      %v1375 = vadd.f32 0.0, %v1374
      %v1376 = vpop.f32.mrf.mxu0
      %v1377 = vpop.f32.mrf.mxu0
      %v1378 = vadd.f32 0.0, %v1377
      %v1379 = vpop.f32.mrf.mxu0
      %1380 = vdwg.mxu0
      %v1381 = vadd.f32 %v1202, %v1311
      %v1382 = vadd.f32 %v1203, %v1314
      %v1383 = vadd.f32 %v1204, %v1319
      %v1384 = vadd.f32 %v1205, %v1322
      %v1385 = vadd.f32 %v1206, %v1327
      %v1386 = vadd.f32 %v1207, %v1330
      %v1387 = vadd.f32 %v1208, %v1335
      %v1388 = vadd.f32 %v1209, %v1338
      %v1389 = vadd.f32 %v1210, %v1343
      %v1390 = vadd.f32 %v1211, %v1346
      %v1391 = vadd.f32 %v1212, %v1351
      %v1392 = vadd.f32 %v1213, %v1354
      %v1393 = vadd.f32 %v1214, %v1359
      %v1394 = vadd.f32 %v1215, %v1362
      %v1395 = vadd.f32 %v1216, %v1367
      %v1396 = vadd.f32 %v1217, %v1370
      %v1397 = vadd.f32 %v1218, %v1375
      %v1398 = vadd.f32 %v1219, %v1378
      %s1399 = scalar_lea.vmem %s1, 48
      %v1400 = vld [vmem:[%s1399] sm:$0xf]
      %v1401 = vld [vmem:[%s1399 + $0x4] sm:$0xf]
      %v1404 = vunpack.c.l.b16 %v284
      %v1405 = vunpack.c.l.b16 %v285
      %v1406 = vpack.c.b16 %v1404, %v869
      %v1407 = vpack.c.b16 %v1405, %v1405
      %v1408 = vrot.slane %v1406, 2
      %v1409 = vsel %vm1223, %v1239, %v1408
      %v1410 = vrot.slane %v1407, 2
      %v1411 = vsel %vm1223, %v1408, %v1410
      %v1414 = vunpack.c.l.b16 %v1400
      %v1415 = vunpack.c.l.b16 %v1401
      %v1416 = vpack.c.b16 %v1415, %v1414
      %v1419 = vsel %vm422, %v1409, 0
      %v1422 = vsel %vm422, %v1411, 0
      %1424 = vmatprep.subr.bf16.mxu0 0
      %1425 = vmatpush1.bf16.msra.mxu0 0
      %1426 = vmatprep.subr.bf16.mxu0 0
      %1427 = vmatpush1.bf16.msra.mxu0 0
      %1428 = vmatprep.subr.bf16.mxu0 0
      %1429 = vmatpush1.bf16.msra.mxu0 0
      %1430 = vmatprep.subr.bf16.mxu0 0
      %1431 = vmatpush1.bf16.msra.mxu0 0
      %1432 = vmatprep.subr.bf16.mxu0 0
      %1433 = vmatpush1.bf16.msra.mxu0 0
      %1434 = vmatprep.subr.bf16.mxu0 0
      %1435 = vmatpush1.bf16.msra.mxu0 0
      %1436 = vmatprep.subr.bf16.mxu0 0
      %1437 = vmatpush1.bf16.msra.mxu0 0
      %1438 = vmatprep.subr.bf16.mxu0 0
      %1439 = vmatpush1.bf16.msra.mxu0 %v1416
      %1440 = vmatprep.subr.bf16.mxu0 0
      %1441 = vmatpush2.bf16.msra.mxu0 0
      %1442 = vmatprep.subr.bf16.mxu0 0
      %1443 = vmatpush2.bf16.msra.mxu0 0
      %1444 = vmatprep.subr.bf16.mxu0 0
      %1445 = vmatpush2.bf16.msra.mxu0 0
      %1446 = vmatprep.subr.bf16.mxu0 0
      %1447 = vmatpush2.bf16.msra.mxu0 0
      %1448 = vmatprep.subr.bf16.mxu0 0
      %1449 = vmatpush2.bf16.msra.mxu0 0
      %1450 = vmatprep.subr.bf16.mxu0 0
      %1451 = vmatpush2.bf16.msra.mxu0 0
      %1452 = vmatprep.subr.bf16.mxu0 0
      %1453 = vmatpush2.bf16.msra.mxu0 0
      %1454 = vmatprep.subr.bf16.mxu0 0
      %1455 = vmatpush2.bf16.msra.mxu0 0
      %1456 = vmatprep.mubr.bf16.mxu0 0
      %1457 = vmatmul.mubr.bf16.gmra.mxu0 %v1253
      %v1458 = vpop.f32.mrf.mxu0
      %v1459 = vadd.f32 0.0, %v1458
      %v1460 = vpop.f32.mrf.mxu0
      %v1461 = vpop.f32.mrf.mxu0
      %v1462 = vadd.f32 0.0, %v1461
      %v1463 = vpop.f32.mrf.mxu0
      %1464 = vmatprep.mubr.bf16.mxu0 0
      %1465 = vmatmul.mubr.bf16.gmra.mxu0 %v1256
      %v1466 = vpop.f32.mrf.mxu0
      %v1467 = vadd.f32 0.0, %v1466
      %v1468 = vpop.f32.mrf.mxu0
      %v1469 = vpop.f32.mrf.mxu0
      %v1470 = vadd.f32 0.0, %v1469
      %v1471 = vpop.f32.mrf.mxu0
      %1472 = vmatprep.mubr.bf16.mxu0 0
      %1473 = vmatmul.mubr.bf16.gmra.mxu0 %v1259
      %v1474 = vpop.f32.mrf.mxu0
      %v1475 = vadd.f32 0.0, %v1474
      %v1476 = vpop.f32.mrf.mxu0
      %v1477 = vpop.f32.mrf.mxu0
      %v1478 = vadd.f32 0.0, %v1477
      %v1479 = vpop.f32.mrf.mxu0
      %1480 = vmatprep.mubr.bf16.mxu0 0
      %1481 = vmatmul.mubr.bf16.gmra.mxu0 %v1262
      %v1482 = vpop.f32.mrf.mxu0
      %v1483 = vadd.f32 0.0, %v1482
      %v1484 = vpop.f32.mrf.mxu0
      %v1485 = vpop.f32.mrf.mxu0
      %v1486 = vadd.f32 0.0, %v1485
      %v1487 = vpop.f32.mrf.mxu0
      %1488 = vmatprep.mubr.bf16.mxu0 0
      %1489 = vmatmul.mubr.bf16.gmra.mxu0 %v1265
      %v1490 = vpop.f32.mrf.mxu0
      %v1491 = vadd.f32 0.0, %v1490
      %v1492 = vpop.f32.mrf.mxu0
      %v1493 = vpop.f32.mrf.mxu0
      %v1494 = vadd.f32 0.0, %v1493
      %v1495 = vpop.f32.mrf.mxu0
      %1496 = vmatprep.mubr.bf16.mxu0 0
      %1497 = vmatmul.mubr.bf16.gmra.mxu0 %v1268
      %v1498 = vpop.f32.mrf.mxu0
      %v1499 = vadd.f32 0.0, %v1498
      %v1500 = vpop.f32.mrf.mxu0
      %v1501 = vpop.f32.mrf.mxu0
      %v1502 = vadd.f32 0.0, %v1501
      %v1503 = vpop.f32.mrf.mxu0
      %1504 = vmatprep.mubr.bf16.mxu0 0
      %1505 = vmatmul.mubr.bf16.gmra.mxu0 %v1271
      %v1506 = vpop.f32.mrf.mxu0
      %v1507 = vadd.f32 0.0, %v1506
      %v1508 = vpop.f32.mrf.mxu0
      %v1509 = vpop.f32.mrf.mxu0
      %v1510 = vadd.f32 0.0, %v1509
      %v1511 = vpop.f32.mrf.mxu0
      %1512 = vmatprep.mubr.bf16.mxu0 0
      %1513 = vmatmul.mubr.bf16.gmra.mxu0 %v1419
      %v1514 = vpop.f32.mrf.mxu0
      %v1515 = vadd.f32 0.0, %v1514
      %v1516 = vpop.f32.mrf.mxu0
      %v1517 = vpop.f32.mrf.mxu0
      %v1518 = vadd.f32 0.0, %v1517
      %v1519 = vpop.f32.mrf.mxu0
      %1520 = vmatprep.mubr.bf16.mxu0 0
      %1521 = vmatmul.mubr.bf16.gmra.mxu0 %v1422
      %v1522 = vpop.f32.mrf.mxu0
      %v1523 = vadd.f32 0.0, %v1522
      %v1524 = vpop.f32.mrf.mxu0
      %v1525 = vpop.f32.mrf.mxu0
      %v1526 = vadd.f32 0.0, %v1525
      %v1527 = vpop.f32.mrf.mxu0
      %1528 = vdwg.mxu0
      %v1529 = vadd.f32 %v1381, %v1459
      %v1530 = vadd.f32 %v1382, %v1462
      %v1531 = vadd.f32 %v1383, %v1467
      %v1532 = vadd.f32 %v1384, %v1470
      %v1533 = vadd.f32 %v1385, %v1475
      %v1534 = vadd.f32 %v1386, %v1478
      %v1535 = vadd.f32 %v1387, %v1483
      %v1536 = vadd.f32 %v1388, %v1486
      %v1537 = vadd.f32 %v1389, %v1491
      %v1538 = vadd.f32 %v1390, %v1494
      %v1539 = vadd.f32 %v1391, %v1499
      %v1540 = vadd.f32 %v1392, %v1502
      %v1541 = vadd.f32 %v1393, %v1507
      %v1542 = vadd.f32 %v1394, %v1510
      %v1543 = vadd.f32 %v1395, %v1515
      %v1544 = vadd.f32 %v1396, %v1518
      %v1545 = vadd.f32 %v1397, %v1523
      %v1546 = vadd.f32 %v1398, %v1526
      %s1547 = scalar_lea.vmem %s1, 56
      %v1548 = vld [vmem:[%s1547] sm:$0xf]
      %v1549 = vld [vmem:[%s1547 + $0x4] sm:$0xf]
      %vm1550 = vsmask.f32 5376
      %v1551 = vrot.slane %v360, 2
      %v1552 = vrot.slane %v356, 3
      %v1553 = vor.u32 %v1551, %v1552
      %v1554 = vrot.slane %v368, 2
      %v1555 = vrot.slane %v364, 3
      %v1556 = vor.u32 %v1554, %v1555
      %v1557 = vsel %vm1550, %v1553, %v1556
      %v1558 = vrot.slane %v376, 2
      %v1559 = vrot.slane %v372, 3
      %v1560 = vor.u32 %v1558, %v1559
      %v1561 = vsel %vm1550, %v1556, %v1560
      %v1562 = vrot.slane %v384, 2
      %v1563 = vrot.slane %v380, 3
      %v1564 = vor.u32 %v1562, %v1563
      %v1565 = vsel %vm1550, %v1560, %v1564
      %v1566 = vrot.slane %v392, 2
      %v1567 = vrot.slane %v388, 3
      %v1568 = vor.u32 %v1566, %v1567
      %v1569 = vsel %vm1550, %v1564, %v1568
      %v1570 = vrot.slane %v400, 2
      %v1571 = vrot.slane %v396, 3
      %v1572 = vor.u32 %v1570, %v1571
      %v1573 = vsel %vm1550, %v1568, %v1572
      %v1574 = vrot.slane %v408, 2
      %v1575 = vrot.slane %v404, 3
      %v1576 = vor.u32 %v1574, %v1575
      %v1577 = vsel %vm1550, %v1572, %v1576
      %v1578 = vrot.slane %v1047, 2
      %v1579 = vrot.slane %v1050, 3
      %v1580 = vor.u32 %v1578, %v1579
      %v1581 = vsel %vm1550, %v1576, %v1580
      %v1583 = vshrl.u32 %v1406, 16
      %v1585 = vrot.slane %v1583, 2
      %v1586 = vshll.u32 %v1406, 16
      %v1588 = vrot.slane %v1586, 3
      %v1589 = vor.u32 %v1585, %v1588
      %v1590 = vsel %vm1550, %v1580, %v1589
      %v1592 = vshrl.u32 %v1407, 16
      %v1594 = vrot.slane %v1592, 2
      %v1595 = vshll.u32 %v1407, 16
      %v1597 = vrot.slane %v1595, 3
      %v1598 = vor.u32 %v1594, %v1597
      %v1599 = vsel %vm1550, %v1589, %v1598
      %v1602 = vunpack.c.l.b16 %v1548
      %v1603 = vunpack.c.l.b16 %v1549
      %v1604 = vpack.c.b16 %v1603, %v1602
      %v1607 = vsel %vm422, %v1557, 0
      %v1610 = vsel %vm422, %v1561, 0
      %v1613 = vsel %vm422, %v1565, 0
      %v1616 = vsel %vm422, %v1569, 0
      %v1619 = vsel %vm422, %v1573, 0
      %v1622 = vsel %vm422, %v1577, 0
      %v1625 = vsel %vm422, %v1581, 0
      %v1628 = vsel %vm422, %v1590, 0
      %v1631 = vsel %vm422, %v1599, 0
      %1633 = vmatprep.subr.bf16.mxu0 0
      %1634 = vmatpush1.bf16.msra.mxu0 0
      %1635 = vmatprep.subr.bf16.mxu0 0
      %1636 = vmatpush1.bf16.msra.mxu0 0
      %1637 = vmatprep.subr.bf16.mxu0 0
      %1638 = vmatpush1.bf16.msra.mxu0 0
      %1639 = vmatprep.subr.bf16.mxu0 0
      %1640 = vmatpush1.bf16.msra.mxu0 0
      %1641 = vmatprep.subr.bf16.mxu0 0
      %1642 = vmatpush1.bf16.msra.mxu0 0
      %1643 = vmatprep.subr.bf16.mxu0 0
      %1644 = vmatpush1.bf16.msra.mxu0 0
      %1645 = vmatprep.subr.bf16.mxu0 0
      %1646 = vmatpush1.bf16.msra.mxu0 0
      %1647 = vmatprep.subr.bf16.mxu0 0
      %1648 = vmatpush1.bf16.msra.mxu0 %v1604
      %1649 = vmatprep.subr.bf16.mxu0 0
      %1650 = vmatpush2.bf16.msra.mxu0 0
      %1651 = vmatprep.subr.bf16.mxu0 0
      %1652 = vmatpush2.bf16.msra.mxu0 0
      %1653 = vmatprep.subr.bf16.mxu0 0
      %1654 = vmatpush2.bf16.msra.mxu0 0
      %1655 = vmatprep.subr.bf16.mxu0 0
      %1656 = vmatpush2.bf16.msra.mxu0 0
      %1657 = vmatprep.subr.bf16.mxu0 0
      %1658 = vmatpush2.bf16.msra.mxu0 0
      %1659 = vmatprep.subr.bf16.mxu0 0
      %1660 = vmatpush2.bf16.msra.mxu0 0
      %1661 = vmatprep.subr.bf16.mxu0 0
      %1662 = vmatpush2.bf16.msra.mxu0 0
      %1663 = vmatprep.subr.bf16.mxu0 0
      %1664 = vmatpush2.bf16.msra.mxu0 0
      %1665 = vmatprep.mubr.bf16.mxu0 0
      %1666 = vmatmul.mubr.bf16.gmra.mxu0 %v1607
      %v1667 = vpop.f32.mrf.mxu0
      %v1668 = vadd.f32 0.0, %v1667
      %v1669 = vpop.f32.mrf.mxu0
      %v1670 = vpop.f32.mrf.mxu0
      %v1671 = vadd.f32 0.0, %v1670
      %v1672 = vpop.f32.mrf.mxu0
      %1673 = vmatprep.mubr.bf16.mxu0 0
      %1674 = vmatmul.mubr.bf16.gmra.mxu0 %v1610
      %v1675 = vpop.f32.mrf.mxu0
      %v1676 = vadd.f32 0.0, %v1675
      %v1677 = vpop.f32.mrf.mxu0
      %v1678 = vpop.f32.mrf.mxu0
      %v1679 = vadd.f32 0.0, %v1678
      %v1680 = vpop.f32.mrf.mxu0
      %1681 = vmatprep.mubr.bf16.mxu0 0
      %1682 = vmatmul.mubr.bf16.gmra.mxu0 %v1613
      %v1683 = vpop.f32.mrf.mxu0
      %v1684 = vadd.f32 0.0, %v1683
      %v1685 = vpop.f32.mrf.mxu0
      %v1686 = vpop.f32.mrf.mxu0
      %v1687 = vadd.f32 0.0, %v1686
      %v1688 = vpop.f32.mrf.mxu0
      %1689 = vmatprep.mubr.bf16.mxu0 0
      %1690 = vmatmul.mubr.bf16.gmra.mxu0 %v1616
      %v1691 = vpop.f32.mrf.mxu0
      %v1692 = vadd.f32 0.0, %v1691
      %v1693 = vpop.f32.mrf.mxu0
      %v1694 = vpop.f32.mrf.mxu0
      %v1695 = vadd.f32 0.0, %v1694
      %v1696 = vpop.f32.mrf.mxu0
      %1697 = vmatprep.mubr.bf16.mxu0 0
      %1698 = vmatmul.mubr.bf16.gmra.mxu0 %v1619
      %v1699 = vpop.f32.mrf.mxu0
      %v1700 = vadd.f32 0.0, %v1699
      %v1701 = vpop.f32.mrf.mxu0
      %v1702 = vpop.f32.mrf.mxu0
      %v1703 = vadd.f32 0.0, %v1702
      %v1704 = vpop.f32.mrf.mxu0
      %1705 = vmatprep.mubr.bf16.mxu0 0
      %1706 = vmatmul.mubr.bf16.gmra.mxu0 %v1622
      %v1707 = vpop.f32.mrf.mxu0
      %v1708 = vadd.f32 0.0, %v1707
      %v1709 = vpop.f32.mrf.mxu0
      %v1710 = vpop.f32.mrf.mxu0
      %v1711 = vadd.f32 0.0, %v1710
      %v1712 = vpop.f32.mrf.mxu0
      %1713 = vmatprep.mubr.bf16.mxu0 0
      %1714 = vmatmul.mubr.bf16.gmra.mxu0 %v1625
      %v1715 = vpop.f32.mrf.mxu0
      %v1716 = vadd.f32 0.0, %v1715
      %v1717 = vpop.f32.mrf.mxu0
      %v1718 = vpop.f32.mrf.mxu0
      %v1719 = vadd.f32 0.0, %v1718
      %v1720 = vpop.f32.mrf.mxu0
      %1721 = vmatprep.mubr.bf16.mxu0 0
      %1722 = vmatmul.mubr.bf16.gmra.mxu0 %v1628
      %v1723 = vpop.f32.mrf.mxu0
      %v1724 = vadd.f32 0.0, %v1723
      %v1725 = vpop.f32.mrf.mxu0
      %v1726 = vpop.f32.mrf.mxu0
      %v1727 = vadd.f32 0.0, %v1726
      %v1728 = vpop.f32.mrf.mxu0
      %1729 = vmatprep.mubr.bf16.mxu0 0
      %1730 = vmatmul.mubr.bf16.gmra.mxu0 %v1631
      %v1731 = vpop.f32.mrf.mxu0
      %v1732 = vadd.f32 0.0, %v1731
      %v1733 = vpop.f32.mrf.mxu0
      %v1734 = vpop.f32.mrf.mxu0
      %v1735 = vadd.f32 0.0, %v1734
      %v1736 = vpop.f32.mrf.mxu0
      %1737 = vdwg.mxu0
      %v1738 = vadd.f32 %v1529, %v1668
      %v1739 = vadd.f32 %v1530, %v1671
      %v1740 = vadd.f32 %v1531, %v1676
      %v1741 = vadd.f32 %v1532, %v1679
      %v1742 = vadd.f32 %v1533, %v1684
      %v1743 = vadd.f32 %v1534, %v1687
      %v1744 = vadd.f32 %v1535, %v1692
      %v1745 = vadd.f32 %v1536, %v1695
      %v1746 = vadd.f32 %v1537, %v1700
      %v1747 = vadd.f32 %v1538, %v1703
      %v1748 = vadd.f32 %v1539, %v1708
      %v1749 = vadd.f32 %v1540, %v1711
      %v1750 = vadd.f32 %v1541, %v1716
      %v1751 = vadd.f32 %v1542, %v1719
      %v1752 = vadd.f32 %v1543, %v1724
      %v1753 = vadd.f32 %v1544, %v1727
      %v1754 = vadd.f32 %v1545, %v1732
      %v1755 = vadd.f32 %v1546, %v1735
      %s1756 = scalar_lea.vmem %s1, 64
      %v1757 = vld [vmem:[%s1756] sm:$0xf]
      %v1758 = vld [vmem:[%s1756 + $0x4] sm:$0xf]
      %vm1759 = vcmask 1044480
      %v1760 = vrot.slane %v331, 3
      %v1761 = vrot.slane %v332, 3
      %v1762 = vsel %vm1759, %v1760, %v1761
      %v1763 = vrot.slane %v333, 3
      %v1764 = vsel %vm1759, %v1761, %v1763
      %v1765 = vrot.slane %v334, 3
      %v1766 = vsel %vm1759, %v1763, %v1765
      %v1767 = vrot.slane %v335, 3
      %v1768 = vsel %vm1759, %v1765, %v1767
      %v1769 = vrot.slane %v336, 3
      %v1770 = vsel %vm1759, %v1767, %v1769
      %v1771 = vrot.slane %v337, 3
      %v1772 = vsel %vm1759, %v1769, %v1771
      %v1773 = vrot.slane %v870, 3
      %v1774 = vsel %vm1759, %v1771, %v1773
      %v1775 = vrot.slane %v1406, 3
      %v1776 = vsel %vm1759, %v1773, %v1775
      %v1777 = vrot.slane %v1407, 3
      %v1778 = vsel %vm1759, %v1775, %v1777
      %v1781 = vunpack.c.l.b16 %v1757
      %v1782 = vunpack.c.l.b16 %v1758
      %v1783 = vpack.c.b16 %v1782, %v1781
      %v1786 = vsel %vm422, %v1762, 0
      %v1789 = vsel %vm422, %v1764, 0
      %v1792 = vsel %vm422, %v1766, 0
      %v1795 = vsel %vm422, %v1768, 0
      %v1798 = vsel %vm422, %v1770, 0
      %v1801 = vsel %vm422, %v1772, 0
      %v1804 = vsel %vm422, %v1774, 0
      %v1807 = vsel %vm422, %v1776, 0
      %v1810 = vsel %vm422, %v1778, 0
      %1812 = vmatprep.subr.bf16.mxu0 0
      %1813 = vmatpush1.bf16.msra.mxu0 0
      %1814 = vmatprep.subr.bf16.mxu0 0
      %1815 = vmatpush1.bf16.msra.mxu0 0
      %1816 = vmatprep.subr.bf16.mxu0 0
      %1817 = vmatpush1.bf16.msra.mxu0 0
      %1818 = vmatprep.subr.bf16.mxu0 0
      %1819 = vmatpush1.bf16.msra.mxu0 0
      %1820 = vmatprep.subr.bf16.mxu0 0
      %1821 = vmatpush1.bf16.msra.mxu0 0
      %1822 = vmatprep.subr.bf16.mxu0 0
      %1823 = vmatpush1.bf16.msra.mxu0 0
      %1824 = vmatprep.subr.bf16.mxu0 0
      %1825 = vmatpush1.bf16.msra.mxu0 0
      %1826 = vmatprep.subr.bf16.mxu0 0
      %1827 = vmatpush1.bf16.msra.mxu0 %v1783
      %1828 = vmatprep.subr.bf16.mxu0 0
      %1829 = vmatpush2.bf16.msra.mxu0 0
      %1830 = vmatprep.subr.bf16.mxu0 0
      %1831 = vmatpush2.bf16.msra.mxu0 0
      %1832 = vmatprep.subr.bf16.mxu0 0
      %1833 = vmatpush2.bf16.msra.mxu0 0
      %1834 = vmatprep.subr.bf16.mxu0 0
      %1835 = vmatpush2.bf16.msra.mxu0 0
      %1836 = vmatprep.subr.bf16.mxu0 0
      %1837 = vmatpush2.bf16.msra.mxu0 0
      %1838 = vmatprep.subr.bf16.mxu0 0
      %1839 = vmatpush2.bf16.msra.mxu0 0
      %1840 = vmatprep.subr.bf16.mxu0 0
      %1841 = vmatpush2.bf16.msra.mxu0 0
      %1842 = vmatprep.subr.bf16.mxu0 0
      %1843 = vmatpush2.bf16.msra.mxu0 0
      %1844 = vmatprep.mubr.bf16.mxu0 0
      %1845 = vmatmul.mubr.bf16.gmra.mxu0 %v1786
      %v1846 = vpop.f32.mrf.mxu0
      %v1847 = vadd.f32 0.0, %v1846
      %v1848 = vpop.f32.mrf.mxu0
      %v1849 = vpop.f32.mrf.mxu0
      %v1850 = vadd.f32 0.0, %v1849
      %v1851 = vpop.f32.mrf.mxu0
      %1852 = vmatprep.mubr.bf16.mxu0 0
      %1853 = vmatmul.mubr.bf16.gmra.mxu0 %v1789
      %v1854 = vpop.f32.mrf.mxu0
      %v1855 = vadd.f32 0.0, %v1854
      %v1856 = vpop.f32.mrf.mxu0
      %v1857 = vpop.f32.mrf.mxu0
      %v1858 = vadd.f32 0.0, %v1857
      %v1859 = vpop.f32.mrf.mxu0
      %1860 = vmatprep.mubr.bf16.mxu0 0
      %1861 = vmatmul.mubr.bf16.gmra.mxu0 %v1792
      %v1862 = vpop.f32.mrf.mxu0
      %v1863 = vadd.f32 0.0, %v1862
      %v1864 = vpop.f32.mrf.mxu0
      %v1865 = vpop.f32.mrf.mxu0
      %v1866 = vadd.f32 0.0, %v1865
      %v1867 = vpop.f32.mrf.mxu0
      %1868 = vmatprep.mubr.bf16.mxu0 0
      %1869 = vmatmul.mubr.bf16.gmra.mxu0 %v1795
      %v1870 = vpop.f32.mrf.mxu0
      %v1871 = vadd.f32 0.0, %v1870
      %v1872 = vpop.f32.mrf.mxu0
      %v1873 = vpop.f32.mrf.mxu0
      %v1874 = vadd.f32 0.0, %v1873
      %v1875 = vpop.f32.mrf.mxu0
      %1876 = vmatprep.mubr.bf16.mxu0 0
      %1877 = vmatmul.mubr.bf16.gmra.mxu0 %v1798
      %v1878 = vpop.f32.mrf.mxu0
      %v1879 = vadd.f32 0.0, %v1878
      %v1880 = vpop.f32.mrf.mxu0
      %v1881 = vpop.f32.mrf.mxu0
      %v1882 = vadd.f32 0.0, %v1881
      %v1883 = vpop.f32.mrf.mxu0
      %1884 = vmatprep.mubr.bf16.mxu0 0
      %1885 = vmatmul.mubr.bf16.gmra.mxu0 %v1801
      %v1886 = vpop.f32.mrf.mxu0
      %v1887 = vadd.f32 0.0, %v1886
      %v1888 = vpop.f32.mrf.mxu0
      %v1889 = vpop.f32.mrf.mxu0
      %v1890 = vadd.f32 0.0, %v1889
      %v1891 = vpop.f32.mrf.mxu0
      %1892 = vmatprep.mubr.bf16.mxu0 0
      %1893 = vmatmul.mubr.bf16.gmra.mxu0 %v1804
      %v1894 = vpop.f32.mrf.mxu0
      %v1895 = vadd.f32 0.0, %v1894
      %v1896 = vpop.f32.mrf.mxu0
      %v1897 = vpop.f32.mrf.mxu0
      %v1898 = vadd.f32 0.0, %v1897
      %v1899 = vpop.f32.mrf.mxu0
      %1900 = vmatprep.mubr.bf16.mxu0 0
      %1901 = vmatmul.mubr.bf16.gmra.mxu0 %v1807
      %v1902 = vpop.f32.mrf.mxu0
      %v1903 = vadd.f32 0.0, %v1902
      %v1904 = vpop.f32.mrf.mxu0
      %v1905 = vpop.f32.mrf.mxu0
      %v1906 = vadd.f32 0.0, %v1905
      %v1907 = vpop.f32.mrf.mxu0
      %1908 = vmatprep.mubr.bf16.mxu0 0
      %1909 = vmatmul.mubr.bf16.gmra.mxu0 %v1810
      %v1910 = vpop.f32.mrf.mxu0
      %v1911 = vadd.f32 0.0, %v1910
      %v1912 = vpop.f32.mrf.mxu0
      %v1913 = vpop.f32.mrf.mxu0
      %v1914 = vadd.f32 0.0, %v1913
      %v1915 = vpop.f32.mrf.mxu0
      %1916 = vdwg.mxu0
      %v1917 = vadd.f32 %v1738, %v1847
      %v1918 = vadd.f32 %v1739, %v1850
      %v1919 = vadd.f32 %v1740, %v1855
      %v1920 = vadd.f32 %v1741, %v1858
      %v1921 = vadd.f32 %v1742, %v1863
      %v1922 = vadd.f32 %v1743, %v1866
      %v1923 = vadd.f32 %v1744, %v1871
      %v1924 = vadd.f32 %v1745, %v1874
      %v1925 = vadd.f32 %v1746, %v1879
      %v1926 = vadd.f32 %v1747, %v1882
      %v1927 = vadd.f32 %v1748, %v1887
      %v1928 = vadd.f32 %v1749, %v1890
      %v1929 = vadd.f32 %v1750, %v1895
      %v1930 = vadd.f32 %v1751, %v1898
      %v1931 = vadd.f32 %v1752, %v1903
      %v1932 = vadd.f32 %v1753, %v1906
      %v1933 = vadd.f32 %v1754, %v1911
      %v1934 = vadd.f32 %v1755, %v1914
      %v1935 = vld [vmem:[%s2] sm:$0x1]
      %v1937 = vlaneseq
      %v1938 = vshrl.u32 %v1937, 7
      %v1939 = vsub.s32 0, %v1938
      %v1940 = vrot.slane %v1935, %v1939
      %v1942 = vadd.f32 %v1917, %v1940
      %v1943 = vadd.f32 %v1918, %v1940
      %v1944 = vadd.f32 %v1919, %v1940
      %v1945 = vadd.f32 %v1920, %v1940
      %v1946 = vadd.f32 %v1921, %v1940
      %v1947 = vadd.f32 %v1922, %v1940
      %v1948 = vadd.f32 %v1923, %v1940
      %v1949 = vadd.f32 %v1924, %v1940
      %v1950 = vadd.f32 %v1925, %v1940
      %v1951 = vadd.f32 %v1926, %v1940
      %v1952 = vadd.f32 %v1927, %v1940
      %v1953 = vadd.f32 %v1928, %v1940
      %v1954 = vadd.f32 %v1929, %v1940
      %v1955 = vadd.f32 %v1930, %v1940
      %v1956 = vadd.f32 %v1931, %v1940
      %v1957 = vadd.f32 %v1932, %v1940
      %v1958 = vadd.f32 %v1933, %v1940
      %v1959 = vadd.f32 %v1934, %v1940
      %v1960 = vld [vmem:[%s245] sm:$0xff]
      %v1961 = vld [vmem:[%s245 + $0x8] sm:$0xff]
      %v1962 = vld [vmem:[%s245 + $0x10] sm:$0xff]
      %v1963 = vld [vmem:[%s245 + $0x18] sm:$0xff]
      %v1964 = vld [vmem:[%s245 + $0x20] sm:$0xff]
      %v1965 = vld [vmem:[%s245 + $0x28] sm:$0xff]
      %v1966 = vld [vmem:[%s245 + $0x30] sm:$0xff]
      %v1967 = vld [vmem:[%s245 + $0x38] sm:$0xff]
      %v1968 = vld [vmem:[%s245 + $0x40] sm:$0xff]
      %v1969 = vld [vmem:[%s245 + $0x48] sm:$0xff]
      %v1970 = vld [vmem:[%s245 + $0x50] sm:$0xff]
      %v1971 = vld [vmem:[%s245 + $0x58] sm:$0xff]
      %v1972 = vld [vmem:[%s245 + $0x60] sm:$0xff]
      %v1973 = vld [vmem:[%s245 + $0x68] sm:$0xff]
      %v1974 = vld [vmem:[%s245 + $0x70] sm:$0xff]
      %v1975 = vld [vmem:[%s245 + $0x78] sm:$0xff]
      %v1976 = vld [vmem:[%s245 + $0x80] sm:$0xff]
      %v1977 = vld [vmem:[%s245 + $0x88] sm:$0xff]
      %v1978 = vadd.f32 %v1942, %v1960
      %v1979 = vadd.f32 %v1943, %v1961
      %v1980 = vadd.f32 %v1944, %v1962
      %v1981 = vadd.f32 %v1945, %v1963
      %v1982 = vadd.f32 %v1946, %v1964
      %v1983 = vadd.f32 %v1947, %v1965
      %v1984 = vadd.f32 %v1948, %v1966
      %v1985 = vadd.f32 %v1949, %v1967
      %v1986 = vadd.f32 %v1950, %v1968
      %v1987 = vadd.f32 %v1951, %v1969
      %v1988 = vadd.f32 %v1952, %v1970
      %v1989 = vadd.f32 %v1953, %v1971
      %v1990 = vadd.f32 %v1954, %v1972
      %v1991 = vadd.f32 %v1955, %v1973
      %v1992 = vadd.f32 %v1956, %v1974
      %v1993 = vadd.f32 %v1957, %v1975
      %v1994 = vadd.f32 %v1958, %v1976
      %v1995 = vadd.f32 %v1959, %v1977
      %v1996 = vmax.f32 %v1978, 0.0
      %v1997 = vmax.f32 %v1979, 0.0
      %v1998 = vmax.f32 %v1980, 0.0
      %v1999 = vmax.f32 %v1981, 0.0
      %v2000 = vmax.f32 %v1982, 0.0
      %v2001 = vmax.f32 %v1983, 0.0
      %v2002 = vmax.f32 %v1984, 0.0
      %v2003 = vmax.f32 %v1985, 0.0
      %v2004 = vmax.f32 %v1986, 0.0
      %v2005 = vmax.f32 %v1987, 0.0
      %v2006 = vmax.f32 %v1988, 0.0
      %v2007 = vmax.f32 %v1989, 0.0
      %v2008 = vmax.f32 %v1990, 0.0
      %v2009 = vmax.f32 %v1991, 0.0
      %v2010 = vmax.f32 %v1992, 0.0
      %v2011 = vmax.f32 %v1993, 0.0
      %v2012 = vmax.f32 %v1994, 0.0
      %v2013 = vmax.f32 %v1995, 0.0
      %2014 = vst [vmem:[%s255] sm:$0xff] %v1996
      %2015 = vst [vmem:[%s255 + $0x8] sm:$0xff] %v1997
      %2016 = vst [vmem:[%s255 + $0x10] sm:$0xff] %v1998
      %2017 = vst [vmem:[%s255 + $0x18] sm:$0xff] %v1999
      %2018 = vst [vmem:[%s255 + $0x20] sm:$0xff] %v2000
      %2019 = vst [vmem:[%s255 + $0x28] sm:$0xff] %v2001
      %2020 = vst [vmem:[%s255 + $0x30] sm:$0xff] %v2002
      %2021 = vst [vmem:[%s255 + $0x38] sm:$0xff] %v2003
      %2022 = vst [vmem:[%s255 + $0x40] sm:$0xff] %v2004
      %2023 = vst [vmem:[%s255 + $0x48] sm:$0xff] %v2005
      %2024 = vst [vmem:[%s255 + $0x50] sm:$0xff] %v2006
      %2025 = vst [vmem:[%s255 + $0x58] sm:$0xff] %v2007
      %2026 = vst [vmem:[%s255 + $0x60] sm:$0xff] %v2008
      %2027 = vst [vmem:[%s255 + $0x68] sm:$0xff] %v2009
      %2028 = vst [vmem:[%s255 + $0x70] sm:$0xff] %v2010
      %2029 = vst [vmem:[%s255 + $0x78] sm:$0xff] %v2011
      %2030 = vst [vmem:[%s255 + $0x80] sm:$0xff] %v2012
      %2031 = vst [vmem:[%s255 + $0x88] sm:$0xff] %v2013
      %s2032 = smul.u32 18, %s20
      %p2033 = scmp.lt.s32.totalorder %s19, 1
      %s2034 = scalar_select %p2033, %s19, 1
      %p2035 = scmp.lt.s32.totalorder %s2032, 35
      %s2036 = scalar_select %p2035, %s2032, 35
      %s2037 = smul.addr %s2034, 36
      %s2038 = sadd.s32 %s2036, %s2037
      %s2039 = smul.addr %s2038, 8
      %s2040 = scalar_lea.vmem %s4, %s2039
      // Predicated region
      $region37: #{_unnamed_function_.3} parent=35 // pred_check
        %p2041 = pneg %p143
      $region38: #{_unnamed_function_.3} parent=35 // pred_check_branch
        %2043 = sbr.rel (%p2041) target = $region40
      $region39: #{_unnamed_function_.3} parent=35 // pred_region
        %s2044 = smul.u32 18, %s20
      $region40: #{_unnamed_function_.3} parent=35 // pred_fallthru
        _
    $region36: #{_unnamed_function_.3} parent=5 // pred_fallthru
      _
    %p2045 = scmp.le.s32.totalorder 2, %s10
    // Predicated region
    $region41: #{_unnamed_function_.3} parent=5 // pred_check
      %p2046 = pneg %p2045
    $region42: #{_unnamed_function_.3} parent=5 // pred_check_branch
      %2048 = sbr.rel (%p2046) target = $region44
    $region43: #{_unnamed_function_.3} parent=5 // pred_region
      %s2049 = ssub.s32 %s10, 2
      // Predicated region
      $region45: #{_unnamed_function_.3} parent=43 // pred_check
        %p2050 = pneg %p149
      $region46: #{_unnamed_function_.3} parent=43 // pred_check_branch
        %2052 = sbr.rel (%p2050) target = $region48
      $region47: #{_unnamed_function_.3} parent=43 // pred_region
        %s2053 = smul.u32 18, %s22
        %p2054 = scmp.lt.s32.totalorder %s21, 1
        %s2055 = scalar_select %p2054, %s21, 1
        %p2056 = scmp.lt.s32.totalorder %s2053, 35
        %s2057 = scalar_select %p2056, %s2053, 35
        %s2058 = smul.addr %s2055, 36
        %s2059 = sadd.s32 %s2057, %s2058
        %s2060 = smul.addr %s2059, 8
        %s2061 = scalar_lea.vmem %s4, %s2060
      $region48: #{_unnamed_function_.3} parent=43 // pred_fallthru
        _
    $region44: #{_unnamed_function_.3} parent=5 // pred_fallthru
      _
  $region6: #{_unnamed_function_.3} parent=0 // loop_footer
    %s14 = sadd.s32 1, %s10
  $region7: #{_unnamed_function_.3} parent=0 // loop_footer_branch
    %9 = sbr.rel target = $region3
  $region8: #{_unnamed_function_.3} parent=0 // loop_exit
    _

</llo_original>
